<compile_context>
chip_gen: v7x
topology: tpu7x:2x2x1
jax: 0.10.0
libtpu: 0.0.40
codegen_flags: <defaults>
</compile_context>

<pallas_src>
import jax
import jax.numpy as jnp
from jax import lax
from jax.experimental import pallas as pl
from jax.experimental.pallas import tpu as pltpu

NEG_INF = -1e30


# ----------------------------------------------------------------------------
# Shared LSTM cell (recurrent matmul on the MXU in bf16, gate math in f32)
# ----------------------------------------------------------------------------
def _lstm_cell(g_pre, h, c, whh):
    # g_pre: (B, 4H) f32 precomputed x@W_ih + b ; whh: (H, 4H) bf16
    H = whh.shape[0]
    gates = g_pre + jnp.dot(h.astype(jnp.bfloat16), whh,
                            preferred_element_type=jnp.float32)
    i_g = jax.nn.sigmoid(gates[:, 0 * H:1 * H])
    f_g = jax.nn.sigmoid(gates[:, 1 * H:2 * H])
    g_g = jnp.tanh(gates[:, 2 * H:3 * H])
    o_g = jax.nn.sigmoid(gates[:, 3 * H:4 * H])
    c_new = f_g * c + i_g * g_g
    h_new = o_g * jnp.tanh(c_new)
    return h_new, c_new


# ----------------------------------------------------------------------------
# Kernel 1: fused bidirectional LSTM recurrence (single invocation; the input
# projection has been hoisted out, so the kernel only carries the recurrence).
# ----------------------------------------------------------------------------
def bilstm_rec_kernel(gxf_ref, gxb_ref, whhf_ref, whhb_ref, outf_ref, outb_ref):
    T = gxf_ref.shape[0]
    B = gxf_ref.shape[1]
    H = whhf_ref.shape[0]
    whh_f = whhf_ref[...]
    whh_b = whhb_ref[...]

    def step(t, carry):
        hf, cf, hb, cb = carry
        tb = T - 1 - t
        hf, cf = _lstm_cell(gxf_ref[t], hf, cf, whh_f)
        hb, cb = _lstm_cell(gxb_ref[tb], hb, cb, whh_b)
        outf_ref[t] = hf
        outb_ref[tb] = hb
        return hf, cf, hb, cb

    z = jnp.zeros((B, H), jnp.float32)
    lax.fori_loop(0, T, step, (z, z, z, z), unroll=True)


def bilstm_recurrence(gx_f, gx_b, whh_f, whh_b):
    T, B, G = gx_f.shape
    H = G // 4
    return pl.pallas_call(
        bilstm_rec_kernel,
        out_shape=(jax.ShapeDtypeStruct((T, B, H), jnp.float32),
                   jax.ShapeDtypeStruct((T, B, H), jnp.float32)),
        grid=(1,),
        in_specs=[pl.BlockSpec((T, B, G), lambda i: (0, 0, 0)),
                  pl.BlockSpec((T, B, G), lambda i: (0, 0, 0)),
                  pl.BlockSpec((H, G), lambda i: (0, 0)),
                  pl.BlockSpec((H, G), lambda i: (0, 0))],
        out_specs=(pl.BlockSpec((T, B, H), lambda i: (0, 0, 0)),
                   pl.BlockSpec((T, B, H), lambda i: (0, 0, 0))),
        compiler_params=pltpu.CompilerParams(
            dimension_semantics=("arbitrary",)),
    )(gx_f, gx_b, whh_f, whh_b)


# ----------------------------------------------------------------------------
# Kernel 2: biDafAttn similarity + both attention tiles + co-attention
#           projection (folded + merged single K=6H matmul) + ReLU, per batch.
# ----------------------------------------------------------------------------
def bidaf_kernel(s1_ref, s2_ref, l1_ref, l2_ref, wp_ref, bp_ref, p1_ref, p2_ref):
    i = pl.program_id(0)
    s1 = s1_ref[0]                    # (T1, 2H) f32
    s2 = s2_ref[0]                    # (T2, 2H) f32
    T1, T2 = s1.shape[0], s2.shape[0]
    l1 = l1_ref[i]
    l2 = l2_ref[i]
    s1b = s1.astype(jnp.bfloat16)
    s2b = s2.astype(jnp.bfloat16)

    def masked_softmax(x, v):
        xm = jnp.where(v, x, NEG_INF)
        m = jnp.max(xm, axis=-1, keepdims=True)
        e = jnp.exp(xm - m) * v.astype(jnp.float32)
        d = jnp.maximum(jnp.sum(e, axis=-1, keepdims=True), 1e-30)
        return e * pl.reciprocal(d, approx=True)   # fully-masked rows -> 0

    # Similarity (bf16 MXU, f32 accumulate).  S21 == S12^T is recomputed with a
    # second tiny matmul (see header note) rather than an XLU transpose.
    S12 = lax.dot_general(s1b, s2b, (((1,), (1,)), ((), ())),
                          preferred_element_type=jnp.float32)   # (T1, T2)
    S21 = lax.dot_general(s2b, s1b, (((1,), (1,)), ((), ())),
                          preferred_element_type=jnp.float32)   # (T2, T1)

    r12 = lax.broadcasted_iota(jnp.int32, (T1, T2), 0)
    c12 = lax.broadcasted_iota(jnp.int32, (T1, T2), 1)
    v12 = (r12 < l1) & (c12 < l2)
    r21 = lax.broadcasted_iota(jnp.int32, (T2, T1), 0)
    c21 = lax.broadcasted_iota(jnp.int32, (T2, T1), 1)
    v21 = (r21 < l2) & (c21 < l1)

    P1 = masked_softmax(S12, v12)                          # softmax over s2 axis
    P2 = masked_softmax(S21, v21)                          # softmax over s1 axis
    att1 = jnp.dot(P1.astype(jnp.bfloat16), s2b,
                   preferred_element_type=jnp.float32)     # (T1, 2H)
    att2 = jnp.dot(P2.astype(jnp.bfloat16), s1b,
                   preferred_element_type=jnp.float32)     # (T2, 2H)

    def project(x, a):
        # ReLU(Linear([x, a, x - a, x * a])) with the (x - a) term folded into
        # the x / a weight blocks -> single merged (T, 6H) @ (6H, H) matmul.
        xa = jnp.concatenate([x, a, x * a], axis=-1).astype(jnp.bfloat16)
        y = jnp.dot(xa, wp_ref[...], preferred_element_type=jnp.float32)
        return jax.nn.relu(y + bp_ref[...])

    p1_ref[0] = project(s1, att1)
    p2_ref[0] = project(s2, att2)


def bidaf_coattention(s_all, l1, l2, proj_w, proj_b):
    # s_all: (2B, T, 2H) f32 -- rows [0:B] = s1, rows [B:2B] = s2
    Ball, T, H2 = s_all.shape
    B = Ball // 2
    H = proj_w.shape[0]
    wT = proj_w.T                                           # (8H, H)
    w1, w2, w3, w4 = (wT[k * H2:(k + 1) * H2] for k in range(4))
    w_merged = jnp.concatenate([w1 + w3, w2 - w3, w4],
                               axis=0).astype(jnp.bfloat16)  # (6H, H)
    b = proj_b.reshape(1, H).astype(jnp.float32)

    smem = pl.BlockSpec(memory_space=pltpu.MemorySpace.SMEM)
    p1, p2 = pl.pallas_call(
        bidaf_kernel,
        out_shape=(jax.ShapeDtypeStruct((B, T, H), jnp.float32),
                   jax.ShapeDtypeStruct((B, T, H), jnp.float32)),
        grid=(B,),
        in_specs=[pl.BlockSpec((1, T, H2), lambda i: (i, 0, 0)),
                  pl.BlockSpec((1, T, H2), lambda i: (B + i, 0, 0)),
                  smem, smem,
                  pl.BlockSpec((3 * H2, H), lambda i: (0, 0)),
                  pl.BlockSpec((1, H), lambda i: (0, 0))],
        out_specs=(pl.BlockSpec((1, T, H), lambda i: (i, 0, 0)),
                   pl.BlockSpec((1, T, H), lambda i: (i, 0, 0))),
        compiler_params=pltpu.CompilerParams(
            dimension_semantics=("parallel",)),
    )(s_all, s_all, l1, l2, w_merged, b)
    return jnp.concatenate([p1, p2], axis=0)                # (2B, T, H)


# ----------------------------------------------------------------------------
# Kernel 3: second BiLSTM recurrence fused with weighted masked max-pooling,
#           feature concat [m1, m2, |m1-m2|, m1*m2], MLP (ReLU) and the
#           softmax layer (logits).  No (B, T, 2H) writeback to HBM.
# ----------------------------------------------------------------------------
def lstm2_pool_classify_kernel(gxf_ref, gxb_ref, whhf_ref, whhb_ref,
                               len_ref, pw_ref, wm_ref, bm_ref,
                               wsm_ref, bsm_ref, out_ref):
    T = gxf_ref.shape[0]
    Ball = gxf_ref.shape[1]
    B = Ball // 2
    H = whhf_ref.shape[0]
    whh_f = whhf_ref[...]
    whh_b = whhb_ref[...]
    lens = len_ref[...]                                     # (2B, 1) int32

    def step(t, carry):
        hf, cf, hb, cb, mf, mb = carry
        tb = T - 1 - t
        hf, cf = _lstm_cell(gxf_ref[t], hf, cf, whh_f)
        hb, cb = _lstm_cell(gxb_ref[tb], hb, cb, whh_b)
        # running masked max over valid time steps (fused max_along_time)
        mf = jnp.maximum(mf, jnp.where(lens > t, hf, NEG_INF))
        mb = jnp.maximum(mb, jnp.where(lens > tb, hb, NEG_INF))
        return hf, cf, hb, cb, mf, mb

    z = jnp.zeros((Ball, H), jnp.float32)
    neg = jnp.full((Ball, H), NEG_INF, jnp.float32)
    _, _, _, _, mf, mb = lax.fori_loop(0, T, step, (z, z, z, z, neg, neg),
                                       unroll=True)

    m = jnp.concatenate([mf, mb], axis=-1)                  # (2B, 2H) [fwd;bwd]
    w = pw_ref[...]                                         # (B, 1) span weight
    m1 = m[:B] * w
    m2 = m[B:] * w
    feats = jnp.concatenate([m1, m2, jnp.abs(m1 - m2), m1 * m2],
                            axis=-1).astype(jnp.bfloat16)   # (B, 8H)
    h1 = jax.nn.relu(jnp.dot(feats, wm_ref[...],
                             preferred_element_type=jnp.float32) + bm_ref[...])
    out_ref[...] = (jnp.dot(h1.astype(jnp.bfloat16), wsm_ref[...],
                            preferred_element_type=jnp.float32) + bsm_ref[...])


def lstm2_pool_classify(gxf, gxb, whhf, whhb, l_all, p_weights,
                        mlp_w, mlp_b, sm_w, sm_b):
    T, Ball, G = gxf.shape
    H = G // 4
    B = Ball // 2
    MLP_D = mlp_w.shape[0]
    C = sm_w.shape[0]
    bf16 = jnp.bfloat16
    wm = mlp_w.T.astype(bf16)                               # (8H, MLP_D)
    bm = mlp_b.reshape(1, MLP_D).astype(jnp.float32)
    wsm = sm_w.T.astype(bf16)                               # (MLP_D, C)
    bsm = sm_b.reshape(1, C).astype(jnp.float32)
    lens = l_all.reshape(Ball, 1).astype(jnp.int32)
    pw = p_weights.reshape(B, 1).astype(jnp.float32)

    return pl.pallas_call(
        lstm2_pool_classify_kernel,
        out_shape=jax.ShapeDtypeStruct((B, C), jnp.float32),
        grid=(1,),
        in_specs=[pl.BlockSpec((T, Ball, G), lambda i: (0, 0, 0)),
                  pl.BlockSpec((T, Ball, G), lambda i: (0, 0, 0)),
                  pl.BlockSpec((H, G), lambda i: (0, 0)),
                  pl.BlockSpec((H, G), lambda i: (0, 0)),
                  pl.BlockSpec((Ball, 1), lambda i: (0, 0)),
                  pl.BlockSpec((B, 1), lambda i: (0, 0)),
                  pl.BlockSpec((8 * H, MLP_D), lambda i: (0, 0)),
                  pl.BlockSpec((1, MLP_D), lambda i: (0, 0)),
                  pl.BlockSpec((MLP_D, C), lambda i: (0, 0)),
                  pl.BlockSpec((1, C), lambda i: (0, 0))],
        out_specs=pl.BlockSpec((B, C), lambda i: (0, 0)),
        compiler_params=pltpu.CompilerParams(
            dimension_semantics=("arbitrary",)),
    )(gxf, gxb, whhf, whhb, lens, pw, wm, bm, wsm, bsm)


# ----------------------------------------------------------------------------
# Hoisted LSTM input projection (one big bf16 MXU matmul, f32 accumulate)
# ----------------------------------------------------------------------------
def gate_proj(x, w_ih, bias):
    # x: (Ball, T, Din) f32 batch-major -> time-major (T, Ball, 4H) f32
    return jnp.einsum('btd,dg->tbg', x.astype(jnp.bfloat16),
                      w_ih.T.astype(jnp.bfloat16),
                      preferred_element_type=jnp.float32) + bias


# ----------------------------------------------------------------------------
# Parameter init (deterministic, PyTorch-default-style uniform ranges)
# ----------------------------------------------------------------------------
def init_lstm(key, in_d, H):
    k = jax.random.split(key, 8)
    s = 1.0 / float(H) ** 0.5
    u = lambda kk, shape: jax.random.uniform(kk, shape, jnp.float32, -s, s)
    return {
        'w_ih_f': u(k[0], (4 * H, in_d)), 'w_hh_f': u(k[1], (4 * H, H)),
        'b_ih_f': u(k[2], (4 * H,)),      'b_hh_f': u(k[3], (4 * H,)),
        'w_ih_b': u(k[4], (4 * H, in_d)), 'w_hh_b': u(k[5], (4 * H, H)),
        'b_ih_b': u(k[6], (4 * H,)),      'b_hh_b': u(k[7], (4 * H,)),
    }


def init_params(key, D1, D2, H, MLP_D, C):
    k_l1, k_l2, k_pr, k_m, k_sm = jax.random.split(key, 5)

    def linear(k, out_d, in_d):
        kw, kb = jax.random.split(k)
        s = 1.0 / float(in_d) ** 0.5
        w = jax.random.uniform(kw, (out_d, in_d), jnp.float32, -s, s)
        b = jax.random.uniform(kb, (out_d,), jnp.float32, -s, s)
        return w, b

    params = {'lstm1': init_lstm(k_l1, D1, H),
              'lstm2': init_lstm(k_l2, H + D2, H)}
    params['proj_w'], params['proj_b'] = linear(k_pr, H, 8 * H)
    params['mlp_w'], params['mlp_b'] = linear(k_m, MLP_D, 8 * H)
    params['sm_w'], params['sm_b'] = linear(k_sm, C, MLP_D)
    return params


# ----------------------------------------------------------------------------
# Full forward
# ----------------------------------------------------------------------------
def esim_forward(params, layer1_s1, layer2_s1, l1, layer1_s2, layer2_s2, l2,
                 p_weights):
    bf16 = jnp.bfloat16
    B, T1, _ = layer1_s1.shape
    _, T2, _ = layer1_s2.shape
    H = params['lstm1']['w_hh_f'].shape[1]

    # Dropout layers are identity at inference.
    # Pad premise/hypothesis to a common T so they share one recurrence call
    # (they share LSTM weights); length masks keep padded positions inert in
    # the attention softmax and the final pooling.
    T = max(T1, T2)

    def pad_t(x):
        p = T - x.shape[1]
        return x if p == 0 else jnp.pad(x, ((0, 0), (0, p), (0, 0)))

    x_all = jnp.concatenate([pad_t(layer1_s1), pad_t(layer1_s2)], axis=0)
    e_all = jnp.concatenate([pad_t(layer2_s1), pad_t(layer2_s2)], axis=0)
    l1 = l1.astype(jnp.int32)
    l2 = l2.astype(jnp.int32)
    l_all = jnp.concatenate([l1, l2], axis=0)

    # ---- layer-1 BiLSTM: both sequences + both directions, one kernel call --
    lp = params['lstm1']
    gx_f = gate_proj(x_all, lp['w_ih_f'], lp['b_ih_f'] + lp['b_hh_f'])
    gx_b = gate_proj(x_all, lp['w_ih_b'], lp['b_ih_b'] + lp['b_hh_b'])
    out_f, out_b = bilstm_recurrence(gx_f, gx_b,
                                     lp['w_hh_f'].T.astype(bf16),
                                     lp['w_hh_b'].T.astype(bf16))
    s_l1 = jnp.transpose(jnp.concatenate([out_f, out_b], axis=-1), (1, 0, 2))
    # (2B, T, 2H) batch-major

    # ---- BiDAF similarity + both attention tiles + coattention projection ---
    p_all = bidaf_coattention(s_l1, l1, l2,
                              params['proj_w'], params['proj_b'])  # (2B, T, H)

    # ---- layer-2 input projection with split W_ih (no [p, layer2] concat) ---
    lp2 = params['lstm2']

    def gate_proj2(w_ih, bias):
        wp = w_ih[:, :H].T.astype(bf16)      # acts on coattention features
        wl = w_ih[:, H:].T.astype(bf16)      # acts on layer-2 embeddings
        return (jnp.einsum('bth,hg->tbg', p_all.astype(bf16), wp,
                           preferred_element_type=jnp.float32)
                + jnp.einsum('btd,dg->tbg', e_all.astype(bf16), wl,
                             preferred_element_type=jnp.float32)
                + bias)

    gx2_f = gate_proj2(lp2['w_ih_f'], lp2['b_ih_f'] + lp2['b_hh_f'])
    gx2_b = gate_proj2(lp2['w_ih_b'], lp2['b_ih_b'] + lp2['b_hh_b'])

    # ---- layer-2 BiLSTM fused with weighted max-pool + MLP + softmax layer --
    return lstm2_pool_classify(gx2_f, gx2_b,
                               lp2['w_hh_f'].T.astype(bf16),
                               lp2['w_hh_b'].T.astype(bf16),
                               l_all, p_weights,
                               params['mlp_w'], params['mlp_b'],
                               params['sm_w'], params['sm_b'])


if __name__ == "__main__":
    B, T1, T2 = 2, 8, 8
    D1, D2 = 48, 16        # rnn_size_in = (D1, H + D2)
    H, MLP_D, C = 32, 32, 3

    key = jax.random.PRNGKey(0)
    k_par, k1, k2, k3, k4, kw = jax.random.split(key, 6)
    params = init_params(k_par, D1, D2, H, MLP_D, C)

    layer1_s1 = jax.random.normal(k1, (B, T1, D1), jnp.float32)
    layer2_s1 = jax.random.normal(k2, (B, T1, D2), jnp.float32)
    layer1_s2 = jax.random.normal(k3, (B, T2, D1), jnp.float32)
    layer2_s2 = jax.random.normal(k4, (B, T2, D2), jnp.float32)
    l1 = jnp.full((B,), T1, jnp.int32)
    l2 = jnp.full((B,), T2, jnp.int32)
    p_weights = jax.random.uniform(kw, (B,), jnp.float32, 0.5, 1.0)

    fwd = jax.jit(esim_forward)
    logits = fwd(params, layer1_s1, layer2_s1, l1,
                 layer1_s2, layer2_s2, l2, p_weights)
    jax.block_until_ready(logits)
    assert logits.shape == (B, C)
    assert bool(jnp.all(jnp.isfinite(logits)))
    print("KERNEL_OK")
</pallas_src>

<mosaic_0001>
module attributes {stable_mosaic.version = 11 : i64} {
  func.func @bilstm_rec_kernel(%arg0: i32, %arg1: memref<8x4x128xf32, #tpu.memory_space<vmem>>, %arg2: memref<8x4x128xf32, #tpu.memory_space<vmem>>, %arg3: memref<32x128xbf16, #tpu.memory_space<vmem>>, %arg4: memref<32x128xbf16, #tpu.memory_space<vmem>>, %arg5: memref<8x4x32xf32, #tpu.memory_space<vmem>>, %arg6: memref<8x4x32xf32, #tpu.memory_space<vmem>>) attributes {dimension_semantics = [#tpu.dimension_semantics<arbitrary>], iteration_bounds = array<i64: 1>, scalar_prefetch = 0 : i64, scratch_operands = 0 : i64, tpu.core_type = #tpu.core_type<tc>, window_params = [{pipeline_mode = #tpu.pipeline_mode<synchronous>, transform_indices = @transform_0, window_bounds = array<i64: 8, 4, 128>}, {pipeline_mode = #tpu.pipeline_mode<synchronous>, transform_indices = @transform_1, window_bounds = array<i64: 8, 4, 128>}, {pipeline_mode = #tpu.pipeline_mode<synchronous>, transform_indices = @transform_2, window_bounds = array<i64: 32, 128>}, {pipeline_mode = #tpu.pipeline_mode<synchronous>, transform_indices = @transform_3, window_bounds = array<i64: 32, 128>}, {pipeline_mode = #tpu.pipeline_mode<synchronous>, transform_indices = @transform_4, window_bounds = array<i64: 8, 4, 32>}, {pipeline_mode = #tpu.pipeline_mode<synchronous>, transform_indices = @transform_5, window_bounds = array<i64: 8, 4, 32>}]} {
    %c0 = arith.constant 0 : index
    %c0_0 = arith.constant 0 : index
    %0 = vector.load %arg3[%c0, %c0_0] : memref<32x128xbf16, #tpu.memory_space<vmem>>, vector<32x128xbf16>
    %c0_1 = arith.constant 0 : index
    %c0_2 = arith.constant 0 : index
    %1 = vector.load %arg4[%c0_1, %c0_2] : memref<32x128xbf16, #tpu.memory_space<vmem>>, vector<32x128xbf16>
    %cst = arith.constant 0.000000e+00 : f32
    %2 = vector.broadcast %cst : f32 to vector<4x32xf32>
    %c0_i32 = arith.constant 0 : i32
    %c7_i32 = arith.constant 7 : i32
    %3 = arith.subi %c7_i32, %c0_i32 : i32
    %4 = arith.index_cast %c0_i32 : i32 to index
    %c0_3 = arith.constant 0 : index
    %c0_4 = arith.constant 0 : index
    %5 = vector.load %arg1[%4, %c0_3, %c0_4] : memref<8x4x128xf32, #tpu.memory_space<vmem>>, vector<1x4x128xf32>
    %6 = vector.shape_cast %5 : vector<1x4x128xf32> to vector<4x128xf32>
    %7 = arith.truncf %2 : vector<4x32xf32> to vector<4x32xbf16>
    %cst_5 = arith.constant dense<0.000000e+00> : vector<4x128xf32>
    %8 = tpu.matmul %7, %0, %cst_5 {dimension_numbers = #tpu.dot_dimension_numbers<[1], [0], [0], [1], [0, 0, 1, 1], [], []>} : vector<4x32xbf16>, vector<32x128xbf16>, vector<4x128xf32> -> vector<4x128xf32>
    %9 = arith.addf %6, %8 : vector<4x128xf32>
    %10 = vector.extract_strided_slice %9 {offsets = [0, 0], sizes = [4, 32], strides = [1, 1]} : vector<4x128xf32> to vector<4x32xf32>
    %11 = arith.negf %10 : vector<4x32xf32>
    %12 = math.exp %11 : vector<4x32xf32>
    %cst_6 = arith.constant 1.000000e+00 : f32
    %13 = vector.broadcast %cst_6 : f32 to vector<4x32xf32>
    %14 = arith.addf %13, %12 : vector<4x32xf32>
    %15 = arith.divf %13, %14 : vector<4x32xf32>
    %16 = vector.extract_strided_slice %9 {offsets = [0, 32], sizes = [4, 32], strides = [1, 1]} : vector<4x128xf32> to vector<4x32xf32>
    %17 = arith.negf %16 : vector<4x32xf32>
    %18 = math.exp %17 : vector<4x32xf32>
    %cst_7 = arith.constant 1.000000e+00 : f32
    %19 = vector.broadcast %cst_7 : f32 to vector<4x32xf32>
    %20 = arith.addf %19, %18 : vector<4x32xf32>
    %21 = arith.divf %19, %20 : vector<4x32xf32>
    %22 = vector.extract_strided_slice %9 {offsets = [0, 64], sizes = [4, 32], strides = [1, 1]} : vector<4x128xf32> to vector<4x32xf32>
    %23 = math.tanh %22 : vector<4x32xf32>
    %24 = vector.extract_strided_slice %9 {offsets = [0, 96], sizes = [4, 32], strides = [1, 1]} : vector<4x128xf32> to vector<4x32xf32>
    %25 = arith.negf %24 : vector<4x32xf32>
    %26 = math.exp %25 : vector<4x32xf32>
    %cst_8 = arith.constant 1.000000e+00 : f32
    %27 = vector.broadcast %cst_8 : f32 to vector<4x32xf32>
    %28 = arith.addf %27, %26 : vector<4x32xf32>
    %29 = arith.divf %27, %28 : vector<4x32xf32>
    %30 = arith.mulf %21, %2 : vector<4x32xf32>
    %31 = arith.mulf %15, %23 : vector<4x32xf32>
    %32 = arith.addf %30, %31 : vector<4x32xf32>
    %33 = math.tanh %32 : vector<4x32xf32>
    %34 = arith.mulf %29, %33 : vector<4x32xf32>
    %35 = arith.index_cast %3 : i32 to index
    %c0_9 = arith.constant 0 : index
    %c0_10 = arith.constant 0 : index
    %36 = vector.load %arg2[%35, %c0_9, %c0_10] : memref<8x4x128xf32, #tpu.memory_space<vmem>>, vector<1x4x128xf32>
    %37 = vector.shape_cast %36 : vector<1x4x128xf32> to vector<4x128xf32>
    %38 = arith.truncf %2 : vector<4x32xf32> to vector<4x32xbf16>
    %cst_11 = arith.constant dense<0.000000e+00> : vector<4x128xf32>
    %39 = tpu.matmul %38, %1, %cst_11 {dimension_numbers = #tpu.dot_dimension_numbers<[1], [0], [0], [1], [0, 0, 1, 1], [], []>} : vector<4x32xbf16>, vector<32x128xbf16>, vector<4x128xf32> -> vector<4x128xf32>
    %40 = arith.addf %37, %39 : vector<4x128xf32>
    %41 = vector.extract_strided_slice %40 {offsets = [0, 0], sizes = [4, 32], strides = [1, 1]} : vector<4x128xf32> to vector<4x32xf32>
    %42 = arith.negf %41 : vector<4x32xf32>
    %43 = math.exp %42 : vector<4x32xf32>
    %cst_12 = arith.constant 1.000000e+00 : f32
    %44 = vector.broadcast %cst_12 : f32 to vector<4x32xf32>
    %45 = arith.addf %44, %43 : vector<4x32xf32>
    %46 = arith.divf %44, %45 : vector<4x32xf32>
    %47 = vector.extract_strided_slice %40 {offsets = [0, 32], sizes = [4, 32], strides = [1, 1]} : vector<4x128xf32> to vector<4x32xf32>
    %48 = arith.negf %47 : vector<4x32xf32>
    %49 = math.exp %48 : vector<4x32xf32>
    %cst_13 = arith.constant 1.000000e+00 : f32
    %50 = vector.broadcast %cst_13 : f32 to vector<4x32xf32>
    %51 = arith.addf %50, %49 : vector<4x32xf32>
    %52 = arith.divf %50, %51 : vector<4x32xf32>
    %53 = vector.extract_strided_slice %40 {offsets = [0, 64], sizes = [4, 32], strides = [1, 1]} : vector<4x128xf32> to vector<4x32xf32>
    %54 = math.tanh %53 : vector<4x32xf32>
    %55 = vector.extract_strided_slice %40 {offsets = [0, 96], sizes = [4, 32], strides = [1, 1]} : vector<4x128xf32> to vector<4x32xf32>
    %56 = arith.negf %55 : vector<4x32xf32>
    %57 = math.exp %56 : vector<4x32xf32>
    %cst_14 = arith.constant 1.000000e+00 : f32
    %58 = vector.broadcast %cst_14 : f32 to vector<4x32xf32>
    %59 = arith.addf %58, %57 : vector<4x32xf32>
    %60 = arith.divf %58, %59 : vector<4x32xf32>
    %61 = arith.mulf %52, %2 : vector<4x32xf32>
    %62 = arith.mulf %46, %54 : vector<4x32xf32>
    %63 = arith.addf %61, %62 : vector<4x32xf32>
    %64 = math.tanh %63 : vector<4x32xf32>
    %65 = arith.mulf %60, %64 : vector<4x32xf32>
    %66 = arith.index_cast %c0_i32 : i32 to index
    %c0_15 = arith.constant 0 : index
    %c0_16 = arith.constant 0 : index
    %67 = vector.load %arg5[%66, %c0_15, %c0_16] : memref<8x4x32xf32, #tpu.memory_space<vmem>>, vector<1x4x32xf32>
    %68 = vector.shape_cast %67 : vector<1x4x32xf32> to vector<4x32xf32>
    %69 = vector.shape_cast %34 : vector<4x32xf32> to vector<1x4x32xf32>
    tpu.vector_store %arg5[%66, %c0_15, %c0_16], %69 {strides = array<i32>} : memref<8x4x32xf32, #tpu.memory_space<vmem>>, vector<1x4x32xf32>,
    %70 = arith.index_cast %3 : i32 to index
    %c0_17 = arith.constant 0 : index
    %c0_18 = arith.constant 0 : index
    %71 = vector.load %arg6[%70, %c0_17, %c0_18] : memref<8x4x32xf32, #tpu.memory_space<vmem>>, vector<1x4x32xf32>
    %72 = vector.shape_cast %71 : vector<1x4x32xf32> to vector<4x32xf32>
    %73 = vector.shape_cast %65 : vector<4x32xf32> to vector<1x4x32xf32>
    tpu.vector_store %arg6[%70, %c0_17, %c0_18], %73 {strides = array<i32>} : memref<8x4x32xf32, #tpu.memory_space<vmem>>, vector<1x4x32xf32>,
    %c1_i32 = arith.constant 1 : i32
    %c7_i32_19 = arith.constant 7 : i32
    %74 = arith.subi %c7_i32_19, %c1_i32 : i32
    %75 = arith.index_cast %c1_i32 : i32 to index
    %c0_20 = arith.constant 0 : index
    %c0_21 = arith.constant 0 : index
    %76 = vector.load %arg1[%75, %c0_20, %c0_21] : memref<8x4x128xf32, #tpu.memory_space<vmem>>, vector<1x4x128xf32>
    %77 = vector.shape_cast %76 : vector<1x4x128xf32> to vector<4x128xf32>
    %78 = arith.truncf %34 : vector<4x32xf32> to vector<4x32xbf16>
    %cst_22 = arith.constant dense<0.000000e+00> : vector<4x128xf32>
    %79 = tpu.matmul %78, %0, %cst_22 {dimension_numbers = #tpu.dot_dimension_numbers<[1], [0], [0], [1], [0, 0, 1, 1], [], []>} : vector<4x32xbf16>, vector<32x128xbf16>, vector<4x128xf32> -> vector<4x128xf32>
    %80 = arith.addf %77, %79 : vector<4x128xf32>
    %81 = vector.extract_strided_slice %80 {offsets = [0, 0], sizes = [4, 32], strides = [1, 1]} : vector<4x128xf32> to vector<4x32xf32>
    %82 = arith.negf %81 : vector<4x32xf32>
    %83 = math.exp %82 : vector<4x32xf32>
    %cst_23 = arith.constant 1.000000e+00 : f32
    %84 = vector.broadcast %cst_23 : f32 to vector<4x32xf32>
    %85 = arith.addf %84, %83 : vector<4x32xf32>
    %86 = arith.divf %84, %85 : vector<4x32xf32>
    %87 = vector.extract_strided_slice %80 {offsets = [0, 32], sizes = [4, 32], strides = [1, 1]} : vector<4x128xf32> to vector<4x32xf32>
    %88 = arith.negf %87 : vector<4x32xf32>
    %89 = math.exp %88 : vector<4x32xf32>
    %cst_24 = arith.constant 1.000000e+00 : f32
    %90 = vector.broadcast %cst_24 : f32 to vector<4x32xf32>
    %91 = arith.addf %90, %89 : vector<4x32xf32>
    %92 = arith.divf %90, %91 : vector<4x32xf32>
    %93 = vector.extract_strided_slice %80 {offsets = [0, 64], sizes = [4, 32], strides = [1, 1]} : vector<4x128xf32> to vector<4x32xf32>
    %94 = math.tanh %93 : vector<4x32xf32>
    %95 = vector.extract_strided_slice %80 {offsets = [0, 96], sizes = [4, 32], strides = [1, 1]} : vector<4x128xf32> to vector<4x32xf32>
    %96 = arith.negf %95 : vector<4x32xf32>
    %97 = math.exp %96 : vector<4x32xf32>
    %cst_25 = arith.constant 1.000000e+00 : f32
    %98 = vector.broadcast %cst_25 : f32 to vector<4x32xf32>
    %99 = arith.addf %98, %97 : vector<4x32xf32>
    %100 = arith.divf %98, %99 : vector<4x32xf32>
    %101 = arith.mulf %92, %32 : vector<4x32xf32>
    %102 = arith.mulf %86, %94 : vector<4x32xf32>
    %103 = arith.addf %101, %102 : vector<4x32xf32>
    %104 = math.tanh %103 : vector<4x32xf32>
    %105 = arith.mulf %100, %104 : vector<4x32xf32>
    %106 = arith.index_cast %74 : i32 to index
    %c0_26 = arith.constant 0 : index
    %c0_27 = arith.constant 0 : index
    %107 = vector.load %arg2[%106, %c0_26, %c0_27] : memref<8x4x128xf32, #tpu.memory_space<vmem>>, vector<1x4x128xf32>
    %108 = vector.shape_cast %107 : vector<1x4x128xf32> to vector<4x128xf32>
    %109 = arith.truncf %65 : vector<4x32xf32> to vector<4x32xbf16>
    %cst_28 = arith.constant dense<0.000000e+00> : vector<4x128xf32>
    %110 = tpu.matmul %109, %1, %cst_28 {dimension_numbers = #tpu.dot_dimension_numbers<[1], [0], [0], [1], [0, 0, 1, 1], [], []>} : vector<4x32xbf16>, vector<32x128xbf16>, vector<4x128xf32> -> vector<4x128xf32>
    %111 = arith.addf %108, %110 : vector<4x128xf32>
    %112 = vector.extract_strided_slice %111 {offsets = [0, 0], sizes = [4, 32], strides = [1, 1]} : vector<4x128xf32> to vector<4x32xf32>
    %113 = arith.negf %112 : vector<4x32xf32>
    %114 = math.exp %113 : vector<4x32xf32>
    %cst_29 = arith.constant 1.000000e+00 : f32
    %115 = vector.broadcast %cst_29 : f32 to vector<4x32xf32>
    %116 = arith.addf %115, %114 : vector<4x32xf32>
    %117 = arith.divf %115, %116 : vector<4x32xf32>
    %118 = vector.extract_strided_slice %111 {offsets = [0, 32], sizes = [4, 32], strides = [1, 1]} : vector<4x128xf32> to vector<4x32xf32>
    %119 = arith.negf %118 : vector<4x32xf32>
    %120 = math.exp %119 : vector<4x32xf32>
    %cst_30 = arith.constant 1.000000e+00 : f32
    %121 = vector.broadcast %cst_30 : f32 to vector<4x32xf32>
    %122 = arith.addf %121, %120 : vector<4x32xf32>
    %123 = arith.divf %121, %122 : vector<4x32xf32>
    %124 = vector.extract_strided_slice %111 {offsets = [0, 64], sizes = [4, 32], strides = [1, 1]} : vector<4x128xf32> to vector<4x32xf32>
    %125 = math.tanh %124 : vector<4x32xf32>
    %126 = vector.extract_strided_slice %111 {offsets = [0, 96], sizes = [4, 32], strides = [1, 1]} : vector<4x128xf32> to vector<4x32xf32>
    %127 = arith.negf %126 : vector<4x32xf32>
    %128 = math.exp %127 : vector<4x32xf32>
    %cst_31 = arith.constant 1.000000e+00 : f32
    %129 = vector.broadcast %cst_31 : f32 to vector<4x32xf32>
    %130 = arith.addf %129, %128 : vector<4x32xf32>
    %131 = arith.divf %129, %130 : vector<4x32xf32>
    %132 = arith.mulf %123, %63 : vector<4x32xf32>
    %133 = arith.mulf %117, %125 : vector<4x32xf32>
    %134 = arith.addf %132, %133 : vector<4x32xf32>
    %135 = math.tanh %134 : vector<4x32xf32>
    %136 = arith.mulf %131, %135 : vector<4x32xf32>
    %137 = arith.index_cast %c1_i32 : i32 to index
    %c0_32 = arith.constant 0 : index
    %c0_33 = arith.constant 0 : index
    %138 = vector.load %arg5[%137, %c0_32, %c0_33] : memref<8x4x32xf32, #tpu.memory_space<vmem>>, vector<1x4x32xf32>
    %139 = vector.shape_cast %138 : vector<1x4x32xf32> to vector<4x32xf32>
    %140 = vector.shape_cast %105 : vector<4x32xf32> to vector<1x4x32xf32>
    tpu.vector_store %arg5[%137, %c0_32, %c0_33], %140 {strides = array<i32>} : memref<8x4x32xf32, #tpu.memory_space<vmem>>, vector<1x4x32xf32>,
    %141 = arith.index_cast %74 : i32 to index
    %c0_34 = arith.constant 0 : index
    %c0_35 = arith.constant 0 : index
    %142 = vector.load %arg6[%141, %c0_34, %c0_35] : memref<8x4x32xf32, #tpu.memory_space<vmem>>, vector<1x4x32xf32>
    %143 = vector.shape_cast %142 : vector<1x4x32xf32> to vector<4x32xf32>
    %144 = vector.shape_cast %136 : vector<4x32xf32> to vector<1x4x32xf32>
    tpu.vector_store %arg6[%141, %c0_34, %c0_35], %144 {strides = array<i32>} : memref<8x4x32xf32, #tpu.memory_space<vmem>>, vector<1x4x32xf32>,
    %c2_i32 = arith.constant 2 : i32
    %c7_i32_36 = arith.constant 7 : i32
    %145 = arith.subi %c7_i32_36, %c2_i32 : i32
    %146 = arith.index_cast %c2_i32 : i32 to index
    %c0_37 = arith.constant 0 : index
    %c0_38 = arith.constant 0 : index
    %147 = vector.load %arg1[%146, %c0_37, %c0_38] : memref<8x4x128xf32, #tpu.memory_space<vmem>>, vector<1x4x128xf32>
    %148 = vector.shape_cast %147 : vector<1x4x128xf32> to vector<4x128xf32>
    %149 = arith.truncf %105 : vector<4x32xf32> to vector<4x32xbf16>
    %cst_39 = arith.constant dense<0.000000e+00> : vector<4x128xf32>
    %150 = tpu.matmul %149, %0, %cst_39 {dimension_numbers = #tpu.dot_dimension_numbers<[1], [0], [0], [1], [0, 0, 1, 1], [], []>} : vector<4x32xbf16>, vector<32x128xbf16>, vector<4x128xf32> -> vector<4x128xf32>
    %151 = arith.addf %148, %150 : vector<4x128xf32>
    %152 = vector.extract_strided_slice %151 {offsets = [0, 0], sizes = [4, 32], strides = [1, 1]} : vector<4x128xf32> to vector<4x32xf32>
    %153 = arith.negf %152 : vector<4x32xf32>
    %154 = math.exp %153 : vector<4x32xf32>
    %cst_40 = arith.constant 1.000000e+00 : f32
    %155 = vector.broadcast %cst_40 : f32 to vector<4x32xf32>
    %156 = arith.addf %155, %154 : vector<4x32xf32>
    %157 = arith.divf %155, %156 : vector<4x32xf32>
    %158 = vector.extract_strided_slice %151 {offsets = [0, 32], sizes = [4, 32], strides = [1, 1]} : vector<4x128xf32> to vector<4x32xf32>
    %159 = arith.negf %158 : vector<4x32xf32>
    %160 = math.exp %159 : vector<4x32xf32>
    %cst_41 = arith.constant 1.000000e+00 : f32
    %161 = vector.broadcast %cst_41 : f32 to vector<4x32xf32>
    %162 = arith.addf %161, %160 : vector<4x32xf32>
    %163 = arith.divf %161, %162 : vector<4x32xf32>
    %164 = vector.extract_strided_slice %151 {offsets = [0, 64], sizes = [4, 32], strides = [1, 1]} : vector<4x128xf32> to vector<4x32xf32>
    %165 = math.tanh %164 : vector<4x32xf32>
    %166 = vector.extract_strided_slice %151 {offsets = [0, 96], sizes = [4, 32], strides = [1, 1]} : vector<4x128xf32> to vector<4x32xf32>
    %167 = arith.negf %166 : vector<4x32xf32>
    %168 = math.exp %167 : vector<4x32xf32>
    %cst_42 = arith.constant 1.000000e+00 : f32
    %169 = vector.broadcast %cst_42 : f32 to vector<4x32xf32>
    %170 = arith.addf %169, %168 : vector<4x32xf32>
    %171 = arith.divf %169, %170 : vector<4x32xf32>
    %172 = arith.mulf %163, %103 : vector<4x32xf32>
    %173 = arith.mulf %157, %165 : vector<4x32xf32>
    %174 = arith.addf %172, %173 : vector<4x32xf32>
    %175 = math.tanh %174 : vector<4x32xf32>
    %176 = arith.mulf %171, %175 : vector<4x32xf32>
    %177 = arith.index_cast %145 : i32 to index
    %c0_43 = arith.constant 0 : index
    %c0_44 = arith.constant 0 : index
    %178 = vector.load %arg2[%177, %c0_43, %c0_44] : memref<8x4x128xf32, #tpu.memory_space<vmem>>, vector<1x4x128xf32>
    %179 = vector.shape_cast %178 : vector<1x4x128xf32> to vector<4x128xf32>
    %180 = arith.truncf %136 : vector<4x32xf32> to vector<4x32xbf16>
    %cst_45 = arith.constant dense<0.000000e+00> : vector<4x128xf32>
    %181 = tpu.matmul %180, %1, %cst_45 {dimension_numbers = #tpu.dot_dimension_numbers<[1], [0], [0], [1], [0, 0, 1, 1], [], []>} : vector<4x32xbf16>, vector<32x128xbf16>, vector<4x128xf32> -> vector<4x128xf32>
    %182 = arith.addf %179, %181 : vector<4x128xf32>
    %183 = vector.extract_strided_slice %182 {offsets = [0, 0], sizes = [4, 32], strides = [1, 1]} : vector<4x128xf32> to vector<4x32xf32>
    %184 = arith.negf %183 : vector<4x32xf32>
    %185 = math.exp %184 : vector<4x32xf32>
    %cst_46 = arith.constant 1.000000e+00 : f32
    %186 = vector.broadcast %cst_46 : f32 to vector<4x32xf32>
    %187 = arith.addf %186, %185 : vector<4x32xf32>
    %188 = arith.divf %186, %187 : vector<4x32xf32>
    %189 = vector.extract_strided_slice %182 {offsets = [0, 32], sizes = [4, 32], strides = [1, 1]} : vector<4x128xf32> to vector<4x32xf32>
    %190 = arith.negf %189 : vector<4x32xf32>
    %191 = math.exp %190 : vector<4x32xf32>
    %cst_47 = arith.constant 1.000000e+00 : f32
    %192 = vector.broadcast %cst_47 : f32 to vector<4x32xf32>
    %193 = arith.addf %192, %191 : vector<4x32xf32>
    %194 = arith.divf %192, %193 : vector<4x32xf32>
    %195 = vector.extract_strided_slice %182 {offsets = [0, 64], sizes = [4, 32], strides = [1, 1]} : vector<4x128xf32> to vector<4x32xf32>
    %196 = math.tanh %195 : vector<4x32xf32>
    %197 = vector.extract_strided_slice %182 {offsets = [0, 96], sizes = [4, 32], strides = [1, 1]} : vector<4x128xf32> to vector<4x32xf32>
    %198 = arith.negf %197 : vector<4x32xf32>
    %199 = math.exp %198 : vector<4x32xf32>
    %cst_48 = arith.constant 1.000000e+00 : f32
    %200 = vector.broadcast %cst_48 : f32 to vector<4x32xf32>
    %201 = arith.addf %200, %199 : vector<4x32xf32>
    %202 = arith.divf %200, %201 : vector<4x32xf32>
    %203 = arith.mulf %194, %134 : vector<4x32xf32>
    %204 = arith.mulf %188, %196 : vector<4x32xf32>
    %205 = arith.addf %203, %204 : vector<4x32xf32>
    %206 = math.tanh %205 : vector<4x32xf32>
    %207 = arith.mulf %202, %206 : vector<4x32xf32>
    %208 = arith.index_cast %c2_i32 : i32 to index
    %c0_49 = arith.constant 0 : index
    %c0_50 = arith.constant 0 : index
    %209 = vector.load %arg5[%208, %c0_49, %c0_50] : memref<8x4x32xf32, #tpu.memory_space<vmem>>, vector<1x4x32xf32>
    %210 = vector.shape_cast %209 : vector<1x4x32xf32> to vector<4x32xf32>
    %211 = vector.shape_cast %176 : vector<4x32xf32> to vector<1x4x32xf32>
    tpu.vector_store %arg5[%208, %c0_49, %c0_50], %211 {strides = array<i32>} : memref<8x4x32xf32, #tpu.memory_space<vmem>>, vector<1x4x32xf32>,
    %212 = arith.index_cast %145 : i32 to index
    %c0_51 = arith.constant 0 : index
    %c0_52 = arith.constant 0 : index
    %213 = vector.load %arg6[%212, %c0_51, %c0_52] : memref<8x4x32xf32, #tpu.memory_space<vmem>>, vector<1x4x32xf32>
    %214 = vector.shape_cast %213 : vector<1x4x32xf32> to vector<4x32xf32>
    %215 = vector.shape_cast %207 : vector<4x32xf32> to vector<1x4x32xf32>
    tpu.vector_store %arg6[%212, %c0_51, %c0_52], %215 {strides = array<i32>} : memref<8x4x32xf32, #tpu.memory_space<vmem>>, vector<1x4x32xf32>,
    %c3_i32 = arith.constant 3 : i32
    %c7_i32_53 = arith.constant 7 : i32
    %216 = arith.subi %c7_i32_53, %c3_i32 : i32
    %217 = arith.index_cast %c3_i32 : i32 to index
    %c0_54 = arith.constant 0 : index
    %c0_55 = arith.constant 0 : index
    %218 = vector.load %arg1[%217, %c0_54, %c0_55] : memref<8x4x128xf32, #tpu.memory_space<vmem>>, vector<1x4x128xf32>
    %219 = vector.shape_cast %218 : vector<1x4x128xf32> to vector<4x128xf32>
    %220 = arith.truncf %176 : vector<4x32xf32> to vector<4x32xbf16>
    %cst_56 = arith.constant dense<0.000000e+00> : vector<4x128xf32>
    %221 = tpu.matmul %220, %0, %cst_56 {dimension_numbers = #tpu.dot_dimension_numbers<[1], [0], [0], [1], [0, 0, 1, 1], [], []>} : vector<4x32xbf16>, vector<32x128xbf16>, vector<4x128xf32> -> vector<4x128xf32>
    %222 = arith.addf %219, %221 : vector<4x128xf32>
    %223 = vector.extract_strided_slice %222 {offsets = [0, 0], sizes = [4, 32], strides = [1, 1]} : vector<4x128xf32> to vector<4x32xf32>
    %224 = arith.negf %223 : vector<4x32xf32>
    %225 = math.exp %224 : vector<4x32xf32>
    %cst_57 = arith.constant 1.000000e+00 : f32
    %226 = vector.broadcast %cst_57 : f32 to vector<4x32xf32>
    %227 = arith.addf %226, %225 : vector<4x32xf32>
    %228 = arith.divf %226, %227 : vector<4x32xf32>
    %229 = vector.extract_strided_slice %222 {offsets = [0, 32], sizes = [4, 32], strides = [1, 1]} : vector<4x128xf32> to vector<4x32xf32>
    %230 = arith.negf %229 : vector<4x32xf32>
    %231 = math.exp %230 : vector<4x32xf32>
    %cst_58 = arith.constant 1.000000e+00 : f32
    %232 = vector.broadcast %cst_58 : f32 to vector<4x32xf32>
    %233 = arith.addf %232, %231 : vector<4x32xf32>
    %234 = arith.divf %232, %233 : vector<4x32xf32>
    %235 = vector.extract_strided_slice %222 {offsets = [0, 64], sizes = [4, 32], strides = [1, 1]} : vector<4x128xf32> to vector<4x32xf32>
    %236 = math.tanh %235 : vector<4x32xf32>
    %237 = vector.extract_strided_slice %222 {offsets = [0, 96], sizes = [4, 32], strides = [1, 1]} : vector<4x128xf32> to vector<4x32xf32>
    %238 = arith.negf %237 : vector<4x32xf32>
    %239 = math.exp %238 : vector<4x32xf32>
    %cst_59 = arith.constant 1.000000e+00 : f32
    %240 = vector.broadcast %cst_59 : f32 to vector<4x32xf32>
    %241 = arith.addf %240, %239 : vector<4x32xf32>
    %242 = arith.divf %240, %241 : vector<4x32xf32>
    %243 = arith.mulf %234, %174 : vector<4x32xf32>
    %244 = arith.mulf %228, %236 : vector<4x32xf32>
    %245 = arith.addf %243, %244 : vector<4x32xf32>
    %246 = math.tanh %245 : vector<4x32xf32>
    %247 = arith.mulf %242, %246 : vector<4x32xf32>
    %248 = arith.index_cast %216 : i32 to index
    %c0_60 = arith.constant 0 : index
    %c0_61 = arith.constant 0 : index
    %249 = vector.load %arg2[%248, %c0_60, %c0_61] : memref<8x4x128xf32, #tpu.memory_space<vmem>>, vector<1x4x128xf32>
    %250 = vector.shape_cast %249 : vector<1x4x128xf32> to vector<4x128xf32>
    %251 = arith.truncf %207 : vector<4x32xf32> to vector<4x32xbf16>
    %cst_62 = arith.constant dense<0.000000e+00> : vector<4x128xf32>
    %252 = tpu.matmul %251, %1, %cst_62 {dimension_numbers = #tpu.dot_dimension_numbers<[1], [0], [0], [1], [0, 0, 1, 1], [], []>} : vector<4x32xbf16>, vector<32x128xbf16>, vector<4x128xf32> -> vector<4x128xf32>
    %253 = arith.addf %250, %252 : vector<4x128xf32>
    %254 = vector.extract_strided_slice %253 {offsets = [0, 0], sizes = [4, 32], strides = [1, 1]} : vector<4x128xf32> to vector<4x32xf32>
    %255 = arith.negf %254 : vector<4x32xf32>
    %256 = math.exp %255 : vector<4x32xf32>
    %cst_63 = arith.constant 1.000000e+00 : f32
    %257 = vector.broadcast %cst_63 : f32 to vector<4x32xf32>
    %258 = arith.addf %257, %256 : vector<4x32xf32>
    %259 = arith.divf %257, %258 : vector<4x32xf32>
    %260 = vector.extract_strided_slice %253 {offsets = [0, 32], sizes = [4, 32], strides = [1, 1]} : vector<4x128xf32> to vector<4x32xf32>
    %261 = arith.negf %260 : vector<4x32xf32>
    %262 = math.exp %261 : vector<4x32xf32>
    %cst_64 = arith.constant 1.000000e+00 : f32
    %263 = vector.broadcast %cst_64 : f32 to vector<4x32xf32>
    %264 = arith.addf %263, %262 : vector<4x32xf32>
    %265 = arith.divf %263, %264 : vector<4x32xf32>
    %266 = vector.extract_strided_slice %253 {offsets = [0, 64], sizes = [4, 32], strides = [1, 1]} : vector<4x128xf32> to vector<4x32xf32>
    %267 = math.tanh %266 : vector<4x32xf32>
    %268 = vector.extract_strided_slice %253 {offsets = [0, 96], sizes = [4, 32], strides = [1, 1]} : vector<4x128xf32> to vector<4x32xf32>
    %269 = arith.negf %268 : vector<4x32xf32>
    %270 = math.exp %269 : vector<4x32xf32>
    %cst_65 = arith.constant 1.000000e+00 : f32
    %271 = vector.broadcast %cst_65 : f32 to vector<4x32xf32>
    %272 = arith.addf %271, %270 : vector<4x32xf32>
    %273 = arith.divf %271, %272 : vector<4x32xf32>
    %274 = arith.mulf %265, %205 : vector<4x32xf32>
    %275 = arith.mulf %259, %267 : vector<4x32xf32>
    %276 = arith.addf %274, %275 : vector<4x32xf32>
    %277 = math.tanh %276 : vector<4x32xf32>
    %278 = arith.mulf %273, %277 : vector<4x32xf32>
    %279 = arith.index_cast %c3_i32 : i32 to index
    %c0_66 = arith.constant 0 : index
    %c0_67 = arith.constant 0 : index
    %280 = vector.load %arg5[%279, %c0_66, %c0_67] : memref<8x4x32xf32, #tpu.memory_space<vmem>>, vector<1x4x32xf32>
    %281 = vector.shape_cast %280 : vector<1x4x32xf32> to vector<4x32xf32>
    %282 = vector.shape_cast %247 : vector<4x32xf32> to vector<1x4x32xf32>
    tpu.vector_store %arg5[%279, %c0_66, %c0_67], %282 {strides = array<i32>} : memref<8x4x32xf32, #tpu.memory_space<vmem>>, vector<1x4x32xf32>,
    %283 = arith.index_cast %216 : i32 to index
    %c0_68 = arith.constant 0 : index
    %c0_69 = arith.constant 0 : index
    %284 = vector.load %arg6[%283, %c0_68, %c0_69] : memref<8x4x32xf32, #tpu.memory_space<vmem>>, vector<1x4x32xf32>
    %285 = vector.shape_cast %284 : vector<1x4x32xf32> to vector<4x32xf32>
    %286 = vector.shape_cast %278 : vector<4x32xf32> to vector<1x4x32xf32>
    tpu.vector_store %arg6[%283, %c0_68, %c0_69], %286 {strides = array<i32>} : memref<8x4x32xf32, #tpu.memory_space<vmem>>, vector<1x4x32xf32>,
    %c4_i32 = arith.constant 4 : i32
    %c7_i32_70 = arith.constant 7 : i32
    %287 = arith.subi %c7_i32_70, %c4_i32 : i32
    %288 = arith.index_cast %c4_i32 : i32 to index
    %c0_71 = arith.constant 0 : index
    %c0_72 = arith.constant 0 : index
    %289 = vector.load %arg1[%288, %c0_71, %c0_72] : memref<8x4x128xf32, #tpu.memory_space<vmem>>, vector<1x4x128xf32>
    %290 = vector.shape_cast %289 : vector<1x4x128xf32> to vector<4x128xf32>
    %291 = arith.truncf %247 : vector<4x32xf32> to vector<4x32xbf16>
    %cst_73 = arith.constant dense<0.000000e+00> : vector<4x128xf32>
    %292 = tpu.matmul %291, %0, %cst_73 {dimension_numbers = #tpu.dot_dimension_numbers<[1], [0], [0], [1], [0, 0, 1, 1], [], []>} : vector<4x32xbf16>, vector<32x128xbf16>, vector<4x128xf32> -> vector<4x128xf32>
    %293 = arith.addf %290, %292 : vector<4x128xf32>
    %294 = vector.extract_strided_slice %293 {offsets = [0, 0], sizes = [4, 32], strides = [1, 1]} : vector<4x128xf32> to vector<4x32xf32>
    %295 = arith.negf %294 : vector<4x32xf32>
    %296 = math.exp %295 : vector<4x32xf32>
    %cst_74 = arith.constant 1.000000e+00 : f32
    %297 = vector.broadcast %cst_74 : f32 to vector<4x32xf32>
    %298 = arith.addf %297, %296 : vector<4x32xf32>
    %299 = arith.divf %297, %298 : vector<4x32xf32>
    %300 = vector.extract_strided_slice %293 {offsets = [0, 32], sizes = [4, 32], strides = [1, 1]} : vector<4x128xf32> to vector<4x32xf32>
    %301 = arith.negf %300 : vector<4x32xf32>
    %302 = math.exp %301 : vector<4x32xf32>
    %cst_75 = arith.constant 1.000000e+00 : f32
    %303 = vector.broadcast %cst_75 : f32 to vector<4x32xf32>
    %304 = arith.addf %303, %302 : vector<4x32xf32>
    %305 = arith.divf %303, %304 : vector<4x32xf32>
    %306 = vector.extract_strided_slice %293 {offsets = [0, 64], sizes = [4, 32], strides = [1, 1]} : vector<4x128xf32> to vector<4x32xf32>
    %307 = math.tanh %306 : vector<4x32xf32>
    %308 = vector.extract_strided_slice %293 {offsets = [0, 96], sizes = [4, 32], strides = [1, 1]} : vector<4x128xf32> to vector<4x32xf32>
    %309 = arith.negf %308 : vector<4x32xf32>
    %310 = math.exp %309 : vector<4x32xf32>
    %cst_76 = arith.constant 1.000000e+00 : f32
    %311 = vector.broadcast %cst_76 : f32 to vector<4x32xf32>
    %312 = arith.addf %311, %310 : vector<4x32xf32>
    %313 = arith.divf %311, %312 : vector<4x32xf32>
    %314 = arith.mulf %305, %245 : vector<4x32xf32>
    %315 = arith.mulf %299, %307 : vector<4x32xf32>
    %316 = arith.addf %314, %315 : vector<4x32xf32>
    %317 = math.tanh %316 : vector<4x32xf32>
    %318 = arith.mulf %313, %317 : vector<4x32xf32>
    %319 = arith.index_cast %287 : i32 to index
    %c0_77 = arith.constant 0 : index
    %c0_78 = arith.constant 0 : index
    %320 = vector.load %arg2[%319, %c0_77, %c0_78] : memref<8x4x128xf32, #tpu.memory_space<vmem>>, vector<1x4x128xf32>
    %321 = vector.shape_cast %320 : vector<1x4x128xf32> to vector<4x128xf32>
    %322 = arith.truncf %278 : vector<4x32xf32> to vector<4x32xbf16>
    %cst_79 = arith.constant dense<0.000000e+00> : vector<4x128xf32>
    %323 = tpu.matmul %322, %1, %cst_79 {dimension_numbers = #tpu.dot_dimension_numbers<[1], [0], [0], [1], [0, 0, 1, 1], [], []>} : vector<4x32xbf16>, vector<32x128xbf16>, vector<4x128xf32> -> vector<4x128xf32>
    %324 = arith.addf %321, %323 : vector<4x128xf32>
    %325 = vector.extract_strided_slice %324 {offsets = [0, 0], sizes = [4, 32], strides = [1, 1]} : vector<4x128xf32> to vector<4x32xf32>
    %326 = arith.negf %325 : vector<4x32xf32>
    %327 = math.exp %326 : vector<4x32xf32>
    %cst_80 = arith.constant 1.000000e+00 : f32
    %328 = vector.broadcast %cst_80 : f32 to vector<4x32xf32>
    %329 = arith.addf %328, %327 : vector<4x32xf32>
    %330 = arith.divf %328, %329 : vector<4x32xf32>
    %331 = vector.extract_strided_slice %324 {offsets = [0, 32], sizes = [4, 32], strides = [1, 1]} : vector<4x128xf32> to vector<4x32xf32>
    %332 = arith.negf %331 : vector<4x32xf32>
    %333 = math.exp %332 : vector<4x32xf32>
    %cst_81 = arith.constant 1.000000e+00 : f32
    %334 = vector.broadcast %cst_81 : f32 to vector<4x32xf32>
    %335 = arith.addf %334, %333 : vector<4x32xf32>
    %336 = arith.divf %334, %335 : vector<4x32xf32>
    %337 = vector.extract_strided_slice %324 {offsets = [0, 64], sizes = [4, 32], strides = [1, 1]} : vector<4x128xf32> to vector<4x32xf32>
    %338 = math.tanh %337 : vector<4x32xf32>
    %339 = vector.extract_strided_slice %324 {offsets = [0, 96], sizes = [4, 32], strides = [1, 1]} : vector<4x128xf32> to vector<4x32xf32>
    %340 = arith.negf %339 : vector<4x32xf32>
    %341 = math.exp %340 : vector<4x32xf32>
    %cst_82 = arith.constant 1.000000e+00 : f32
    %342 = vector.broadcast %cst_82 : f32 to vector<4x32xf32>
    %343 = arith.addf %342, %341 : vector<4x32xf32>
    %344 = arith.divf %342, %343 : vector<4x32xf32>
    %345 = arith.mulf %336, %276 : vector<4x32xf32>
    %346 = arith.mulf %330, %338 : vector<4x32xf32>
    %347 = arith.addf %345, %346 : vector<4x32xf32>
    %348 = math.tanh %347 : vector<4x32xf32>
    %349 = arith.mulf %344, %348 : vector<4x32xf32>
    %350 = arith.index_cast %c4_i32 : i32 to index
    %c0_83 = arith.constant 0 : index
    %c0_84 = arith.constant 0 : index
    %351 = vector.load %arg5[%350, %c0_83, %c0_84] : memref<8x4x32xf32, #tpu.memory_space<vmem>>, vector<1x4x32xf32>
    %352 = vector.shape_cast %351 : vector<1x4x32xf32> to vector<4x32xf32>
    %353 = vector.shape_cast %318 : vector<4x32xf32> to vector<1x4x32xf32>
    tpu.vector_store %arg5[%350, %c0_83, %c0_84], %353 {strides = array<i32>} : memref<8x4x32xf32, #tpu.memory_space<vmem>>, vector<1x4x32xf32>,
    %354 = arith.index_cast %287 : i32 to index
    %c0_85 = arith.constant 0 : index
    %c0_86 = arith.constant 0 : index
    %355 = vector.load %arg6[%354, %c0_85, %c0_86] : memref<8x4x32xf32, #tpu.memory_space<vmem>>, vector<1x4x32xf32>
    %356 = vector.shape_cast %355 : vector<1x4x32xf32> to vector<4x32xf32>
    %357 = vector.shape_cast %349 : vector<4x32xf32> to vector<1x4x32xf32>
    tpu.vector_store %arg6[%354, %c0_85, %c0_86], %357 {strides = array<i32>} : memref<8x4x32xf32, #tpu.memory_space<vmem>>, vector<1x4x32xf32>,
    %c5_i32 = arith.constant 5 : i32
    %c7_i32_87 = arith.constant 7 : i32
    %358 = arith.subi %c7_i32_87, %c5_i32 : i32
    %359 = arith.index_cast %c5_i32 : i32 to index
    %c0_88 = arith.constant 0 : index
    %c0_89 = arith.constant 0 : index
    %360 = vector.load %arg1[%359, %c0_88, %c0_89] : memref<8x4x128xf32, #tpu.memory_space<vmem>>, vector<1x4x128xf32>
    %361 = vector.shape_cast %360 : vector<1x4x128xf32> to vector<4x128xf32>
    %362 = arith.truncf %318 : vector<4x32xf32> to vector<4x32xbf16>
    %cst_90 = arith.constant dense<0.000000e+00> : vector<4x128xf32>
    %363 = tpu.matmul %362, %0, %cst_90 {dimension_numbers = #tpu.dot_dimension_numbers<[1], [0], [0], [1], [0, 0, 1, 1], [], []>} : vector<4x32xbf16>, vector<32x128xbf16>, vector<4x128xf32> -> vector<4x128xf32>
    %364 = arith.addf %361, %363 : vector<4x128xf32>
    %365 = vector.extract_strided_slice %364 {offsets = [0, 0], sizes = [4, 32], strides = [1, 1]} : vector<4x128xf32> to vector<4x32xf32>
    %366 = arith.negf %365 : vector<4x32xf32>
    %367 = math.exp %366 : vector<4x32xf32>
    %cst_91 = arith.constant 1.000000e+00 : f32
    %368 = vector.broadcast %cst_91 : f32 to vector<4x32xf32>
    %369 = arith.addf %368, %367 : vector<4x32xf32>
    %370 = arith.divf %368, %369 : vector<4x32xf32>
    %371 = vector.extract_strided_slice %364 {offsets = [0, 32], sizes = [4, 32], strides = [1, 1]} : vector<4x128xf32> to vector<4x32xf32>
    %372 = arith.negf %371 : vector<4x32xf32>
    %373 = math.exp %372 : vector<4x32xf32>
    %cst_92 = arith.constant 1.000000e+00 : f32
    %374 = vector.broadcast %cst_92 : f32 to vector<4x32xf32>
    %375 = arith.addf %374, %373 : vector<4x32xf32>
    %376 = arith.divf %374, %375 : vector<4x32xf32>
    %377 = vector.extract_strided_slice %364 {offsets = [0, 64], sizes = [4, 32], strides = [1, 1]} : vector<4x128xf32> to vector<4x32xf32>
    %378 = math.tanh %377 : vector<4x32xf32>
    %379 = vector.extract_strided_slice %364 {offsets = [0, 96], sizes = [4, 32], strides = [1, 1]} : vector<4x128xf32> to vector<4x32xf32>
    %380 = arith.negf %379 : vector<4x32xf32>
    %381 = math.exp %380 : vector<4x32xf32>
    %cst_93 = arith.constant 1.000000e+00 : f32
    %382 = vector.broadcast %cst_93 : f32 to vector<4x32xf32>
    %383 = arith.addf %382, %381 : vector<4x32xf32>
    %384 = arith.divf %382, %383 : vector<4x32xf32>
    %385 = arith.mulf %376, %316 : vector<4x32xf32>
    %386 = arith.mulf %370, %378 : vector<4x32xf32>
    %387 = arith.addf %385, %386 : vector<4x32xf32>
    %388 = math.tanh %387 : vector<4x32xf32>
    %389 = arith.mulf %384, %388 : vector<4x32xf32>
    %390 = arith.index_cast %358 : i32 to index
    %c0_94 = arith.constant 0 : index
    %c0_95 = arith.constant 0 : index
    %391 = vector.load %arg2[%390, %c0_94, %c0_95] : memref<8x4x128xf32, #tpu.memory_space<vmem>>, vector<1x4x128xf32>
    %392 = vector.shape_cast %391 : vector<1x4x128xf32> to vector<4x128xf32>
    %393 = arith.truncf %349 : vector<4x32xf32> to vector<4x32xbf16>
    %cst_96 = arith.constant dense<0.000000e+00> : vector<4x128xf32>
    %394 = tpu.matmul %393, %1, %cst_96 {dimension_numbers = #tpu.dot_dimension_numbers<[1], [0], [0], [1], [0, 0, 1, 1], [], []>} : vector<4x32xbf16>, vector<32x128xbf16>, vector<4x128xf32> -> vector<4x128xf32>
    %395 = arith.addf %392, %394 : vector<4x128xf32>
    %396 = vector.extract_strided_slice %395 {offsets = [0, 0], sizes = [4, 32], strides = [1, 1]} : vector<4x128xf32> to vector<4x32xf32>
    %397 = arith.negf %396 : vector<4x32xf32>
    %398 = math.exp %397 : vector<4x32xf32>
    %cst_97 = arith.constant 1.000000e+00 : f32
    %399 = vector.broadcast %cst_97 : f32 to vector<4x32xf32>
    %400 = arith.addf %399, %398 : vector<4x32xf32>
    %401 = arith.divf %399, %400 : vector<4x32xf32>
    %402 = vector.extract_strided_slice %395 {offsets = [0, 32], sizes = [4, 32], strides = [1, 1]} : vector<4x128xf32> to vector<4x32xf32>
    %403 = arith.negf %402 : vector<4x32xf32>
    %404 = math.exp %403 : vector<4x32xf32>
    %cst_98 = arith.constant 1.000000e+00 : f32
    %405 = vector.broadcast %cst_98 : f32 to vector<4x32xf32>
    %406 = arith.addf %405, %404 : vector<4x32xf32>
    %407 = arith.divf %405, %406 : vector<4x32xf32>
    %408 = vector.extract_strided_slice %395 {offsets = [0, 64], sizes = [4, 32], strides = [1, 1]} : vector<4x128xf32> to vector<4x32xf32>
    %409 = math.tanh %408 : vector<4x32xf32>
    %410 = vector.extract_strided_slice %395 {offsets = [0, 96], sizes = [4, 32], strides = [1, 1]} : vector<4x128xf32> to vector<4x32xf32>
    %411 = arith.negf %410 : vector<4x32xf32>
    %412 = math.exp %411 : vector<4x32xf32>
    %cst_99 = arith.constant 1.000000e+00 : f32
    %413 = vector.broadcast %cst_99 : f32 to vector<4x32xf32>
    %414 = arith.addf %413, %412 : vector<4x32xf32>
    %415 = arith.divf %413, %414 : vector<4x32xf32>
    %416 = arith.mulf %407, %347 : vector<4x32xf32>
    %417 = arith.mulf %401, %409 : vector<4x32xf32>
    %418 = arith.addf %416, %417 : vector<4x32xf32>
    %419 = math.tanh %418 : vector<4x32xf32>
    %420 = arith.mulf %415, %419 : vector<4x32xf32>
    %421 = arith.index_cast %c5_i32 : i32 to index
    %c0_100 = arith.constant 0 : index
    %c0_101 = arith.constant 0 : index
    %422 = vector.load %arg5[%421, %c0_100, %c0_101] : memref<8x4x32xf32, #tpu.memory_space<vmem>>, vector<1x4x32xf32>
    %423 = vector.shape_cast %422 : vector<1x4x32xf32> to vector<4x32xf32>
    %424 = vector.shape_cast %389 : vector<4x32xf32> to vector<1x4x32xf32>
    tpu.vector_store %arg5[%421, %c0_100, %c0_101], %424 {strides = array<i32>} : memref<8x4x32xf32, #tpu.memory_space<vmem>>, vector<1x4x32xf32>,
    %425 = arith.index_cast %358 : i32 to index
    %c0_102 = arith.constant 0 : index
    %c0_103 = arith.constant 0 : index
    %426 = vector.load %arg6[%425, %c0_102, %c0_103] : memref<8x4x32xf32, #tpu.memory_space<vmem>>, vector<1x4x32xf32>
    %427 = vector.shape_cast %426 : vector<1x4x32xf32> to vector<4x32xf32>
    %428 = vector.shape_cast %420 : vector<4x32xf32> to vector<1x4x32xf32>
    tpu.vector_store %arg6[%425, %c0_102, %c0_103], %428 {strides = array<i32>} : memref<8x4x32xf32, #tpu.memory_space<vmem>>, vector<1x4x32xf32>,
    %c6_i32 = arith.constant 6 : i32
    %c7_i32_104 = arith.constant 7 : i32
    %429 = arith.subi %c7_i32_104, %c6_i32 : i32
    %430 = arith.index_cast %c6_i32 : i32 to index
    %c0_105 = arith.constant 0 : index
    %c0_106 = arith.constant 0 : index
    %431 = vector.load %arg1[%430, %c0_105, %c0_106] : memref<8x4x128xf32, #tpu.memory_space<vmem>>, vector<1x4x128xf32>
    %432 = vector.shape_cast %431 : vector<1x4x128xf32> to vector<4x128xf32>
    %433 = arith.truncf %389 : vector<4x32xf32> to vector<4x32xbf16>
    %cst_107 = arith.constant dense<0.000000e+00> : vector<4x128xf32>
    %434 = tpu.matmul %433, %0, %cst_107 {dimension_numbers = #tpu.dot_dimension_numbers<[1], [0], [0], [1], [0, 0, 1, 1], [], []>} : vector<4x32xbf16>, vector<32x128xbf16>, vector<4x128xf32> -> vector<4x128xf32>
    %435 = arith.addf %432, %434 : vector<4x128xf32>
    %436 = vector.extract_strided_slice %435 {offsets = [0, 0], sizes = [4, 32], strides = [1, 1]} : vector<4x128xf32> to vector<4x32xf32>
    %437 = arith.negf %436 : vector<4x32xf32>
    %438 = math.exp %437 : vector<4x32xf32>
    %cst_108 = arith.constant 1.000000e+00 : f32
    %439 = vector.broadcast %cst_108 : f32 to vector<4x32xf32>
    %440 = arith.addf %439, %438 : vector<4x32xf32>
    %441 = arith.divf %439, %440 : vector<4x32xf32>
    %442 = vector.extract_strided_slice %435 {offsets = [0, 32], sizes = [4, 32], strides = [1, 1]} : vector<4x128xf32> to vector<4x32xf32>
    %443 = arith.negf %442 : vector<4x32xf32>
    %444 = math.exp %443 : vector<4x32xf32>
    %cst_109 = arith.constant 1.000000e+00 : f32
    %445 = vector.broadcast %cst_109 : f32 to vector<4x32xf32>
    %446 = arith.addf %445, %444 : vector<4x32xf32>
    %447 = arith.divf %445, %446 : vector<4x32xf32>
    %448 = vector.extract_strided_slice %435 {offsets = [0, 64], sizes = [4, 32], strides = [1, 1]} : vector<4x128xf32> to vector<4x32xf32>
    %449 = math.tanh %448 : vector<4x32xf32>
    %450 = vector.extract_strided_slice %435 {offsets = [0, 96], sizes = [4, 32], strides = [1, 1]} : vector<4x128xf32> to vector<4x32xf32>
    %451 = arith.negf %450 : vector<4x32xf32>
    %452 = math.exp %451 : vector<4x32xf32>
    %cst_110 = arith.constant 1.000000e+00 : f32
    %453 = vector.broadcast %cst_110 : f32 to vector<4x32xf32>
    %454 = arith.addf %453, %452 : vector<4x32xf32>
    %455 = arith.divf %453, %454 : vector<4x32xf32>
    %456 = arith.mulf %447, %387 : vector<4x32xf32>
    %457 = arith.mulf %441, %449 : vector<4x32xf32>
    %458 = arith.addf %456, %457 : vector<4x32xf32>
    %459 = math.tanh %458 : vector<4x32xf32>
    %460 = arith.mulf %455, %459 : vector<4x32xf32>
    %461 = arith.index_cast %429 : i32 to index
    %c0_111 = arith.constant 0 : index
    %c0_112 = arith.constant 0 : index
    %462 = vector.load %arg2[%461, %c0_111, %c0_112] : memref<8x4x128xf32, #tpu.memory_space<vmem>>, vector<1x4x128xf32>
    %463 = vector.shape_cast %462 : vector<1x4x128xf32> to vector<4x128xf32>
    %464 = arith.truncf %420 : vector<4x32xf32> to vector<4x32xbf16>
    %cst_113 = arith.constant dense<0.000000e+00> : vector<4x128xf32>
    %465 = tpu.matmul %464, %1, %cst_113 {dimension_numbers = #tpu.dot_dimension_numbers<[1], [0], [0], [1], [0, 0, 1, 1], [], []>} : vector<4x32xbf16>, vector<32x128xbf16>, vector<4x128xf32> -> vector<4x128xf32>
    %466 = arith.addf %463, %465 : vector<4x128xf32>
    %467 = vector.extract_strided_slice %466 {offsets = [0, 0], sizes = [4, 32], strides = [1, 1]} : vector<4x128xf32> to vector<4x32xf32>
    %468 = arith.negf %467 : vector<4x32xf32>
    %469 = math.exp %468 : vector<4x32xf32>
    %cst_114 = arith.constant 1.000000e+00 : f32
    %470 = vector.broadcast %cst_114 : f32 to vector<4x32xf32>
    %471 = arith.addf %470, %469 : vector<4x32xf32>
    %472 = arith.divf %470, %471 : vector<4x32xf32>
    %473 = vector.extract_strided_slice %466 {offsets = [0, 32], sizes = [4, 32], strides = [1, 1]} : vector<4x128xf32> to vector<4x32xf32>
    %474 = arith.negf %473 : vector<4x32xf32>
    %475 = math.exp %474 : vector<4x32xf32>
    %cst_115 = arith.constant 1.000000e+00 : f32
    %476 = vector.broadcast %cst_115 : f32 to vector<4x32xf32>
    %477 = arith.addf %476, %475 : vector<4x32xf32>
    %478 = arith.divf %476, %477 : vector<4x32xf32>
    %479 = vector.extract_strided_slice %466 {offsets = [0, 64], sizes = [4, 32], strides = [1, 1]} : vector<4x128xf32> to vector<4x32xf32>
    %480 = math.tanh %479 : vector<4x32xf32>
    %481 = vector.extract_strided_slice %466 {offsets = [0, 96], sizes = [4, 32], strides = [1, 1]} : vector<4x128xf32> to vector<4x32xf32>
    %482 = arith.negf %481 : vector<4x32xf32>
    %483 = math.exp %482 : vector<4x32xf32>
    %cst_116 = arith.constant 1.000000e+00 : f32
    %484 = vector.broadcast %cst_116 : f32 to vector<4x32xf32>
    %485 = arith.addf %484, %483 : vector<4x32xf32>
    %486 = arith.divf %484, %485 : vector<4x32xf32>
    %487 = arith.mulf %478, %418 : vector<4x32xf32>
    %488 = arith.mulf %472, %480 : vector<4x32xf32>
    %489 = arith.addf %487, %488 : vector<4x32xf32>
    %490 = math.tanh %489 : vector<4x32xf32>
    %491 = arith.mulf %486, %490 : vector<4x32xf32>
    %492 = arith.index_cast %c6_i32 : i32 to index
    %c0_117 = arith.constant 0 : index
    %c0_118 = arith.constant 0 : index
    %493 = vector.load %arg5[%492, %c0_117, %c0_118] : memref<8x4x32xf32, #tpu.memory_space<vmem>>, vector<1x4x32xf32>
    %494 = vector.shape_cast %493 : vector<1x4x32xf32> to vector<4x32xf32>
    %495 = vector.shape_cast %460 : vector<4x32xf32> to vector<1x4x32xf32>
    tpu.vector_store %arg5[%492, %c0_117, %c0_118], %495 {strides = array<i32>} : memref<8x4x32xf32, #tpu.memory_space<vmem>>, vector<1x4x32xf32>,
    %496 = arith.index_cast %429 : i32 to index
    %c0_119 = arith.constant 0 : index
    %c0_120 = arith.constant 0 : index
    %497 = vector.load %arg6[%496, %c0_119, %c0_120] : memref<8x4x32xf32, #tpu.memory_space<vmem>>, vector<1x4x32xf32>
    %498 = vector.shape_cast %497 : vector<1x4x32xf32> to vector<4x32xf32>
    %499 = vector.shape_cast %491 : vector<4x32xf32> to vector<1x4x32xf32>
    tpu.vector_store %arg6[%496, %c0_119, %c0_120], %499 {strides = array<i32>} : memref<8x4x32xf32, #tpu.memory_space<vmem>>, vector<1x4x32xf32>,
    %c7_i32_121 = arith.constant 7 : i32
    %c7_i32_122 = arith.constant 7 : i32
    %500 = arith.subi %c7_i32_122, %c7_i32_121 : i32
    %501 = arith.index_cast %c7_i32_121 : i32 to index
    %c0_123 = arith.constant 0 : index
    %c0_124 = arith.constant 0 : index
    %502 = vector.load %arg1[%501, %c0_123, %c0_124] : memref<8x4x128xf32, #tpu.memory_space<vmem>>, vector<1x4x128xf32>
    %503 = vector.shape_cast %502 : vector<1x4x128xf32> to vector<4x128xf32>
    %504 = arith.truncf %460 : vector<4x32xf32> to vector<4x32xbf16>
    %cst_125 = arith.constant dense<0.000000e+00> : vector<4x128xf32>
    %505 = tpu.matmul %504, %0, %cst_125 {dimension_numbers = #tpu.dot_dimension_numbers<[1], [0], [0], [1], [0, 0, 1, 1], [], []>} : vector<4x32xbf16>, vector<32x128xbf16>, vector<4x128xf32> -> vector<4x128xf32>
    %506 = arith.addf %503, %505 : vector<4x128xf32>
    %507 = vector.extract_strided_slice %506 {offsets = [0, 0], sizes = [4, 32], strides = [1, 1]} : vector<4x128xf32> to vector<4x32xf32>
    %508 = arith.negf %507 : vector<4x32xf32>
    %509 = math.exp %508 : vector<4x32xf32>
    %cst_126 = arith.constant 1.000000e+00 : f32
    %510 = vector.broadcast %cst_126 : f32 to vector<4x32xf32>
    %511 = arith.addf %510, %509 : vector<4x32xf32>
    %512 = arith.divf %510, %511 : vector<4x32xf32>
    %513 = vector.extract_strided_slice %506 {offsets = [0, 32], sizes = [4, 32], strides = [1, 1]} : vector<4x128xf32> to vector<4x32xf32>
    %514 = arith.negf %513 : vector<4x32xf32>
    %515 = math.exp %514 : vector<4x32xf32>
    %cst_127 = arith.constant 1.000000e+00 : f32
    %516 = vector.broadcast %cst_127 : f32 to vector<4x32xf32>
    %517 = arith.addf %516, %515 : vector<4x32xf32>
    %518 = arith.divf %516, %517 : vector<4x32xf32>
    %519 = vector.extract_strided_slice %506 {offsets = [0, 64], sizes = [4, 32], strides = [1, 1]} : vector<4x128xf32> to vector<4x32xf32>
    %520 = math.tanh %519 : vector<4x32xf32>
    %521 = vector.extract_strided_slice %506 {offsets = [0, 96], sizes = [4, 32], strides = [1, 1]} : vector<4x128xf32> to vector<4x32xf32>
    %522 = arith.negf %521 : vector<4x32xf32>
    %523 = math.exp %522 : vector<4x32xf32>
    %cst_128 = arith.constant 1.000000e+00 : f32
    %524 = vector.broadcast %cst_128 : f32 to vector<4x32xf32>
    %525 = arith.addf %524, %523 : vector<4x32xf32>
    %526 = arith.divf %524, %525 : vector<4x32xf32>
    %527 = arith.mulf %518, %458 : vector<4x32xf32>
    %528 = arith.mulf %512, %520 : vector<4x32xf32>
    %529 = arith.addf %527, %528 : vector<4x32xf32>
    %530 = math.tanh %529 : vector<4x32xf32>
    %531 = arith.mulf %526, %530 : vector<4x32xf32>
    %532 = arith.index_cast %500 : i32 to index
    %c0_129 = arith.constant 0 : index
    %c0_130 = arith.constant 0 : index
    %533 = vector.load %arg2[%532, %c0_129, %c0_130] : memref<8x4x128xf32, #tpu.memory_space<vmem>>, vector<1x4x128xf32>
    %534 = vector.shape_cast %533 : vector<1x4x128xf32> to vector<4x128xf32>
    %535 = arith.truncf %491 : vector<4x32xf32> to vector<4x32xbf16>
    %cst_131 = arith.constant dense<0.000000e+00> : vector<4x128xf32>
    %536 = tpu.matmul %535, %1, %cst_131 {dimension_numbers = #tpu.dot_dimension_numbers<[1], [0], [0], [1], [0, 0, 1, 1], [], []>} : vector<4x32xbf16>, vector<32x128xbf16>, vector<4x128xf32> -> vector<4x128xf32>
    %537 = arith.addf %534, %536 : vector<4x128xf32>
    %538 = vector.extract_strided_slice %537 {offsets = [0, 0], sizes = [4, 32], strides = [1, 1]} : vector<4x128xf32> to vector<4x32xf32>
    %539 = arith.negf %538 : vector<4x32xf32>
    %540 = math.exp %539 : vector<4x32xf32>
    %cst_132 = arith.constant 1.000000e+00 : f32
    %541 = vector.broadcast %cst_132 : f32 to vector<4x32xf32>
    %542 = arith.addf %541, %540 : vector<4x32xf32>
    %543 = arith.divf %541, %542 : vector<4x32xf32>
    %544 = vector.extract_strided_slice %537 {offsets = [0, 32], sizes = [4, 32], strides = [1, 1]} : vector<4x128xf32> to vector<4x32xf32>
    %545 = arith.negf %544 : vector<4x32xf32>
    %546 = math.exp %545 : vector<4x32xf32>
    %cst_133 = arith.constant 1.000000e+00 : f32
    %547 = vector.broadcast %cst_133 : f32 to vector<4x32xf32>
    %548 = arith.addf %547, %546 : vector<4x32xf32>
    %549 = arith.divf %547, %548 : vector<4x32xf32>
    %550 = vector.extract_strided_slice %537 {offsets = [0, 64], sizes = [4, 32], strides = [1, 1]} : vector<4x128xf32> to vector<4x32xf32>
    %551 = math.tanh %550 : vector<4x32xf32>
    %552 = vector.extract_strided_slice %537 {offsets = [0, 96], sizes = [4, 32], strides = [1, 1]} : vector<4x128xf32> to vector<4x32xf32>
    %553 = arith.negf %552 : vector<4x32xf32>
    %554 = math.exp %553 : vector<4x32xf32>
    %cst_134 = arith.constant 1.000000e+00 : f32
    %555 = vector.broadcast %cst_134 : f32 to vector<4x32xf32>
    %556 = arith.addf %555, %554 : vector<4x32xf32>
    %557 = arith.divf %555, %556 : vector<4x32xf32>
    %558 = arith.mulf %549, %489 : vector<4x32xf32>
    %559 = arith.mulf %543, %551 : vector<4x32xf32>
    %560 = arith.addf %558, %559 : vector<4x32xf32>
    %561 = math.tanh %560 : vector<4x32xf32>
    %562 = arith.mulf %557, %561 : vector<4x32xf32>
    %563 = arith.index_cast %c7_i32_121 : i32 to index
    %c0_135 = arith.constant 0 : index
    %c0_136 = arith.constant 0 : index
    %564 = vector.load %arg5[%563, %c0_135, %c0_136] : memref<8x4x32xf32, #tpu.memory_space<vmem>>, vector<1x4x32xf32>
    %565 = vector.shape_cast %564 : vector<1x4x32xf32> to vector<4x32xf32>
    %566 = vector.shape_cast %531 : vector<4x32xf32> to vector<1x4x32xf32>
    tpu.vector_store %arg5[%563, %c0_135, %c0_136], %566 {strides = array<i32>} : memref<8x4x32xf32, #tpu.memory_space<vmem>>, vector<1x4x32xf32>,
    %567 = arith.index_cast %500 : i32 to index
    %c0_137 = arith.constant 0 : index
    %c0_138 = arith.constant 0 : index
    %568 = vector.load %arg6[%567, %c0_137, %c0_138] : memref<8x4x32xf32, #tpu.memory_space<vmem>>, vector<1x4x32xf32>
    %569 = vector.shape_cast %568 : vector<1x4x32xf32> to vector<4x32xf32>
    %570 = vector.shape_cast %562 : vector<4x32xf32> to vector<1x4x32xf32>
    tpu.vector_store %arg6[%567, %c0_137, %c0_138], %570 {strides = array<i32>} : memref<8x4x32xf32, #tpu.memory_space<vmem>>, vector<1x4x32xf32>,
    %c8_i32 = arith.constant 8 : i32
    return
  }
  func.func @transform_0(%arg0: i32) -> (i32, i32, i32) {
    %c0_i32 = arith.constant 0 : i32
    %c0_i32_0 = arith.constant 0 : i32
    %c0_i32_1 = arith.constant 0 : i32
    %c0_i32_2 = arith.constant 0 : i32
    return %c0_i32, %c0_i32_0, %c0_i32_1 : i32, i32, i32
  }
  func.func @transform_1(%arg0: i32) -> (i32, i32, i32) {
    %c0_i32 = arith.constant 0 : i32
    %c0_i32_0 = arith.constant 0 : i32
    %c0_i32_1 = arith.constant 0 : i32
    %c0_i32_2 = arith.constant 0 : i32
    return %c0_i32, %c0_i32_0, %c0_i32_1 : i32, i32, i32
  }
  func.func @transform_2(%arg0: i32) -> (i32, i32) {
    %c0_i32 = arith.constant 0 : i32
    %c0_i32_0 = arith.constant 0 : i32
    %c0_i32_1 = arith.constant 0 : i32
    return %c0_i32, %c0_i32_0 : i32, i32
  }
  func.func @transform_3(%arg0: i32) -> (i32, i32) {
    %c0_i32 = arith.constant 0 : i32
    %c0_i32_0 = arith.constant 0 : i32
    %c0_i32_1 = arith.constant 0 : i32
    return %c0_i32, %c0_i32_0 : i32, i32
  }
  func.func @transform_4(%arg0: i32) -> (i32, i32, i32) {
    %c0_i32 = arith.constant 0 : i32
    %c0_i32_0 = arith.constant 0 : i32
    %c0_i32_1 = arith.constant 0 : i32
    %c0_i32_2 = arith.constant 0 : i32
    return %c0_i32, %c0_i32_0, %c0_i32_1 : i32, i32, i32
  }
  func.func @transform_5(%arg0: i32) -> (i32, i32, i32) {
    %c0_i32 = arith.constant 0 : i32
    %c0_i32_0 = arith.constant 0 : i32
    %c0_i32_1 = arith.constant 0 : i32
    %c0_i32_2 = arith.constant 0 : i32
    return %c0_i32, %c0_i32_0, %c0_i32_1 : i32, i32, i32
  }
}

module attributes {stable_mosaic.version = 11 : i64} {
  func.func @bidaf_kernel(%arg0: i32, %arg1: memref<1x8x64xf32, #tpu.memory_space<vmem>>, %arg2: memref<1x8x64xf32, #tpu.memory_space<vmem>>, %arg3: memref<2xi32, #tpu.memory_space<smem>>, %arg4: memref<2xi32, #tpu.memory_space<smem>>, %arg5: memref<192x32xbf16, #tpu.memory_space<vmem>>, %arg6: memref<1x32xf32, #tpu.memory_space<vmem>>, %arg7: memref<1x8x32xf32, #tpu.memory_space<vmem>>, %arg8: memref<1x8x32xf32, #tpu.memory_space<vmem>>) attributes {dimension_semantics = [#tpu.dimension_semantics<parallel>], iteration_bounds = array<i64: 2>, scalar_prefetch = 0 : i64, scratch_operands = 0 : i64, tpu.core_type = #tpu.core_type<tc>, window_params = [{transform_indices = @transform_0, window_bounds = array<i64: 1, 8, 64>}, {transform_indices = @transform_1, window_bounds = array<i64: 1, 8, 64>}, {transform_indices = @transform_2, window_bounds = array<i64: 2>}, {transform_indices = @transform_3, window_bounds = array<i64: 2>}, {pipeline_mode = #tpu.pipeline_mode<synchronous>, transform_indices = @transform_4, window_bounds = array<i64: 192, 32>}, {pipeline_mode = #tpu.pipeline_mode<synchronous>, transform_indices = @transform_5, window_bounds = array<i64: 1, 32>}, {transform_indices = @transform_6, window_bounds = array<i64: 1, 8, 32>}, {transform_indices = @transform_7, window_bounds = array<i64: 1, 8, 32>}]} {
    %c0 = arith.constant 0 : index
    %c0_0 = arith.constant 0 : index
    %c0_1 = arith.constant 0 : index
    %0 = vector.load %arg1[%c0, %c0_0, %c0_1] : memref<1x8x64xf32, #tpu.memory_space<vmem>>, vector<1x8x64xf32>
    %1 = vector.shape_cast %0 : vector<1x8x64xf32> to vector<8x64xf32>
    %c0_2 = arith.constant 0 : index
    %c0_3 = arith.constant 0 : index
    %c0_4 = arith.constant 0 : index
    %2 = vector.load %arg2[%c0_2, %c0_3, %c0_4] : memref<1x8x64xf32, #tpu.memory_space<vmem>>, vector<1x8x64xf32>
    %3 = vector.shape_cast %2 : vector<1x8x64xf32> to vector<8x64xf32>
    %4 = arith.index_cast %arg0 : i32 to index
    %5 = memref.load %arg3[%4] : memref<2xi32, #tpu.memory_space<smem>>
    %6 = arith.index_cast %arg0 : i32 to index
    %7 = memref.load %arg4[%6] : memref<2xi32, #tpu.memory_space<smem>>
    %8 = arith.truncf %1 : vector<8x64xf32> to vector<8x64xbf16>
    %9 = arith.truncf %3 : vector<8x64xf32> to vector<8x64xbf16>
    %cst = arith.constant dense<0.000000e+00> : vector<8x8xf32>
    %10 = tpu.matmul %8, %9, %cst {dimension_numbers = #tpu.dot_dimension_numbers<[1], [1], [0], [0], [0, 0, 1, 0], [], []>} : vector<8x64xbf16>, vector<8x64xbf16>, vector<8x8xf32> -> vector<8x8xf32>
    %cst_5 = arith.constant dense<0.000000e+00> : vector<8x8xf32>
    %11 = tpu.matmul %9, %8, %cst_5 {dimension_numbers = #tpu.dot_dimension_numbers<[1], [1], [0], [0], [0, 0, 1, 0], [], []>} : vector<8x64xbf16>, vector<8x64xbf16>, vector<8x8xf32> -> vector<8x8xf32>
    %12 = tpu.iota {dimensions = array<i32: 0>} : vector<8x8xi32>
    %13 = tpu.iota {dimensions = array<i32: 1>} : vector<8x8xi32>
    %14 = vector.broadcast %5 : i32 to vector<8x8xi32>
    %15 = arith.cmpi slt, %12, %14 : vector<8x8xi32>
    %16 = vector.broadcast %7 : i32 to vector<8x8xi32>
    %17 = arith.cmpi slt, %13, %16 : vector<8x8xi32>
    %18 = arith.andi %15, %17 : vector<8x8xi1>
    %19 = tpu.iota {dimensions = array<i32: 0>} : vector<8x8xi32>
    %20 = tpu.iota {dimensions = array<i32: 1>} : vector<8x8xi32>
    %21 = vector.broadcast %7 : i32 to vector<8x8xi32>
    %22 = arith.cmpi slt, %19, %21 : vector<8x8xi32>
    %23 = vector.broadcast %5 : i32 to vector<8x8xi32>
    %24 = arith.cmpi slt, %20, %23 : vector<8x8xi32>
    %25 = arith.andi %22, %24 : vector<8x8xi1>
    %cst_6 = arith.constant -1.000000e+30 : f32
    %26 = vector.broadcast %cst_6 : f32 to vector<8x8xf32>
    %27 = arith.select %18, %10, %26 : vector<8x8xi1>, vector<8x8xf32>
    %cst_7 = arith.constant dense<0xFF800000> : vector<8xf32>
    %28 = vector.multi_reduction <maximumf>, %27, %cst_7 [1] : vector<8x8xf32> to vector<8xf32>
    %29 = vector.shape_cast %28 : vector<8xf32> to vector<8x1xf32>
    %30 = vector.broadcast %29 : vector<8x1xf32> to vector<8x8xf32>
    %31 = arith.subf %27, %30 : vector<8x8xf32>
    %32 = math.exp %31 : vector<8x8xf32>
    %33 = arith.extui %18 : vector<8x8xi1> to vector<8x8xi32>
    %34 = arith.sitofp %33 : vector<8x8xi32> to vector<8x8xf32>
    %35 = arith.mulf %32, %34 : vector<8x8xf32>
    %cst_8 = arith.constant dense<0.000000e+00> : vector<8xf32>
    %36 = vector.multi_reduction <add>, %35, %cst_8 [1] : vector<8x8xf32> to vector<8xf32>
    %37 = vector.shape_cast %36 : vector<8xf32> to vector<8x1xf32>
    %cst_9 = arith.constant 1.000000e-30 : f32
    %38 = vector.broadcast %cst_9 : f32 to vector<8x1xf32>
    %39 = arith.maximumf %37, %38 : vector<8x1xf32>
    %40 = tpu.reciprocal %39 {approx = true} : vector<8x1xf32> -> vector<8x1xf32>
    %41 = vector.broadcast %40 : vector<8x1xf32> to vector<8x8xf32>
    %42 = arith.mulf %35, %41 : vector<8x8xf32>
    %cst_10 = arith.constant -1.000000e+30 : f32
    %43 = vector.broadcast %cst_10 : f32 to vector<8x8xf32>
    %44 = arith.select %25, %11, %43 : vector<8x8xi1>, vector<8x8xf32>
    %cst_11 = arith.constant dense<0xFF800000> : vector<8xf32>
    %45 = vector.multi_reduction <maximumf>, %44, %cst_11 [1] : vector<8x8xf32> to vector<8xf32>
    %46 = vector.shape_cast %45 : vector<8xf32> to vector<8x1xf32>
    %47 = vector.broadcast %46 : vector<8x1xf32> to vector<8x8xf32>
    %48 = arith.subf %44, %47 : vector<8x8xf32>
    %49 = math.exp %48 : vector<8x8xf32>
    %50 = arith.extui %25 : vector<8x8xi1> to vector<8x8xi32>
    %51 = arith.sitofp %50 : vector<8x8xi32> to vector<8x8xf32>
    %52 = arith.mulf %49, %51 : vector<8x8xf32>
    %cst_12 = arith.constant dense<0.000000e+00> : vector<8xf32>
    %53 = vector.multi_reduction <add>, %52, %cst_12 [1] : vector<8x8xf32> to vector<8xf32>
    %54 = vector.shape_cast %53 : vector<8xf32> to vector<8x1xf32>
    %cst_13 = arith.constant 1.000000e-30 : f32
    %55 = vector.broadcast %cst_13 : f32 to vector<8x1xf32>
    %56 = arith.maximumf %54, %55 : vector<8x1xf32>
    %57 = tpu.reciprocal %56 {approx = true} : vector<8x1xf32> -> vector<8x1xf32>
    %58 = vector.broadcast %57 : vector<8x1xf32> to vector<8x8xf32>
    %59 = arith.mulf %52, %58 : vector<8x8xf32>
    %60 = arith.truncf %42 : vector<8x8xf32> to vector<8x8xbf16>
    %cst_14 = arith.constant dense<0.000000e+00> : vector<8x64xf32>
    %61 = tpu.matmul %60, %9, %cst_14 {dimension_numbers = #tpu.dot_dimension_numbers<[1], [0], [0], [1], [0, 0, 1, 1], [], []>} : vector<8x8xbf16>, vector<8x64xbf16>, vector<8x64xf32> -> vector<8x64xf32>
    %62 = arith.truncf %59 : vector<8x8xf32> to vector<8x8xbf16>
    %cst_15 = arith.constant dense<0.000000e+00> : vector<8x64xf32>
    %63 = tpu.matmul %62, %8, %cst_15 {dimension_numbers = #tpu.dot_dimension_numbers<[1], [0], [0], [1], [0, 0, 1, 1], [], []>} : vector<8x8xbf16>, vector<8x64xbf16>, vector<8x64xf32> -> vector<8x64xf32>
    %64 = arith.mulf %1, %61 : vector<8x64xf32>
    %65 = tpu.concatenate %1, %61, %64 in 1 : vector<8x64xf32>, vector<8x64xf32>, vector<8x64xf32> -> vector<8x192xf32>
    %66 = arith.truncf %65 : vector<8x192xf32> to vector<8x192xbf16>
    %c0_16 = arith.constant 0 : index
    %c0_17 = arith.constant 0 : index
    %67 = vector.load %arg5[%c0_16, %c0_17] : memref<192x32xbf16, #tpu.memory_space<vmem>>, vector<192x32xbf16>
    %cst_18 = arith.constant dense<0.000000e+00> : vector<8x32xf32>
    %68 = tpu.matmul %66, %67, %cst_18 {dimension_numbers = #tpu.dot_dimension_numbers<[1], [0], [0], [1], [0, 0, 1, 1], [], []>} : vector<8x192xbf16>, vector<192x32xbf16>, vector<8x32xf32> -> vector<8x32xf32>
    %c0_19 = arith.constant 0 : index
    %c0_20 = arith.constant 0 : index
    %69 = vector.load %arg6[%c0_19, %c0_20] : memref<1x32xf32, #tpu.memory_space<vmem>>, vector<1x32xf32>
    %70 = vector.broadcast %69 : vector<1x32xf32> to vector<8x32xf32>
    %71 = arith.addf %68, %70 : vector<8x32xf32>
    %cst_21 = arith.constant 0.000000e+00 : f32
    %72 = vector.broadcast %cst_21 : f32 to vector<8x32xf32>
    %73 = arith.maximumf %71, %72 : vector<8x32xf32>
    %c0_22 = arith.constant 0 : index
    %c0_23 = arith.constant 0 : index
    %c0_24 = arith.constant 0 : index
    %74 = vector.load %arg7[%c0_22, %c0_23, %c0_24] : memref<1x8x32xf32, #tpu.memory_space<vmem>>, vector<1x8x32xf32>
    %75 = vector.shape_cast %74 : vector<1x8x32xf32> to vector<8x32xf32>
    %76 = vector.shape_cast %73 : vector<8x32xf32> to vector<1x8x32xf32>
    tpu.vector_store %arg7[%c0_22, %c0_23, %c0_24], %76 {strides = array<i32>} : memref<1x8x32xf32, #tpu.memory_space<vmem>>, vector<1x8x32xf32>,
    %77 = arith.mulf %3, %63 : vector<8x64xf32>
    %78 = tpu.concatenate %3, %63, %77 in 1 : vector<8x64xf32>, vector<8x64xf32>, vector<8x64xf32> -> vector<8x192xf32>
    %79 = arith.truncf %78 : vector<8x192xf32> to vector<8x192xbf16>
    %c0_25 = arith.constant 0 : index
    %c0_26 = arith.constant 0 : index
    %80 = vector.load %arg5[%c0_25, %c0_26] : memref<192x32xbf16, #tpu.memory_space<vmem>>, vector<192x32xbf16>
    %cst_27 = arith.constant dense<0.000000e+00> : vector<8x32xf32>
    %81 = tpu.matmul %79, %80, %cst_27 {dimension_numbers = #tpu.dot_dimension_numbers<[1], [0], [0], [1], [0, 0, 1, 1], [], []>} : vector<8x192xbf16>, vector<192x32xbf16>, vector<8x32xf32> -> vector<8x32xf32>
    %c0_28 = arith.constant 0 : index
    %c0_29 = arith.constant 0 : index
    %82 = vector.load %arg6[%c0_28, %c0_29] : memref<1x32xf32, #tpu.memory_space<vmem>>, vector<1x32xf32>
    %83 = vector.broadcast %82 : vector<1x32xf32> to vector<8x32xf32>
    %84 = arith.addf %81, %83 : vector<8x32xf32>
    %cst_30 = arith.constant 0.000000e+00 : f32
    %85 = vector.broadcast %cst_30 : f32 to vector<8x32xf32>
    %86 = arith.maximumf %84, %85 : vector<8x32xf32>
    %c0_31 = arith.constant 0 : index
    %c0_32 = arith.constant 0 : index
    %c0_33 = arith.constant 0 : index
    %87 = vector.load %arg8[%c0_31, %c0_32, %c0_33] : memref<1x8x32xf32, #tpu.memory_space<vmem>>, vector<1x8x32xf32>
    %88 = vector.shape_cast %87 : vector<1x8x32xf32> to vector<8x32xf32>
    %89 = vector.shape_cast %86 : vector<8x32xf32> to vector<1x8x32xf32>
    tpu.vector_store %arg8[%c0_31, %c0_32, %c0_33], %89 {strides = array<i32>} : memref<1x8x32xf32, #tpu.memory_space<vmem>>, vector<1x8x32xf32>,
    return
  }
  func.func @transform_0(%arg0: i32) -> (i32, i32, i32) {
    %c0_i32 = arith.constant 0 : i32
    %c0_i32_0 = arith.constant 0 : i32
    %c0_i32_1 = arith.constant 0 : i32
    return %arg0, %c0_i32, %c0_i32_0 : i32, i32, i32
  }
  func.func @transform_1(%arg0: i32) -> (i32, i32, i32) {
    %c2_i32 = arith.constant 2 : i32
    %0 = arith.addi %c2_i32, %arg0 : i32
    %c0_i32 = arith.constant 0 : i32
    %c0_i32_0 = arith.constant 0 : i32
    %c0_i32_1 = arith.constant 0 : i32
    return %0, %c0_i32, %c0_i32_0 : i32, i32, i32
  }
  func.func @transform_2(%arg0: i32) -> i32 {
    %c0_i32 = arith.constant 0 : i32
    %c0_i32_0 = arith.constant 0 : i32
    return %c0_i32 : i32
  }
  func.func @transform_3(%arg0: i32) -> i32 {
    %c0_i32 = arith.constant 0 : i32
    %c0_i32_0 = arith.constant 0 : i32
    return %c0_i32 : i32
  }
  func.func @transform_4(%arg0: i32) -> (i32, i32) {
    %c0_i32 = arith.constant 0 : i32
    %c0_i32_0 = arith.constant 0 : i32
    %c0_i32_1 = arith.constant 0 : i32
    return %c0_i32, %c0_i32_0 : i32, i32
  }
  func.func @transform_5(%arg0: i32) -> (i32, i32) {
    %c0_i32 = arith.constant 0 : i32
    %c0_i32_0 = arith.constant 0 : i32
    %c0_i32_1 = arith.constant 0 : i32
    return %c0_i32, %c0_i32_0 : i32, i32
  }
  func.func @transform_6(%arg0: i32) -> (i32, i32, i32) {
    %c0_i32 = arith.constant 0 : i32
    %c0_i32_0 = arith.constant 0 : i32
    %c0_i32_1 = arith.constant 0 : i32
    return %arg0, %c0_i32, %c0_i32_0 : i32, i32, i32
  }
  func.func @transform_7(%arg0: i32) -> (i32, i32, i32) {
    %c0_i32 = arith.constant 0 : i32
    %c0_i32_0 = arith.constant 0 : i32
    %c0_i32_1 = arith.constant 0 : i32
    return %arg0, %c0_i32, %c0_i32_0 : i32, i32, i32
  }
}

module attributes {stable_mosaic.version = 11 : i64} {
  func.func @lstm2_pool_classify_kernel(%arg0: i32, %arg1: memref<8x4x128xf32, #tpu.memory_space<vmem>>, %arg2: memref<8x4x128xf32, #tpu.memory_space<vmem>>, %arg3: memref<32x128xbf16, #tpu.memory_space<vmem>>, %arg4: memref<32x128xbf16, #tpu.memory_space<vmem>>, %arg5: memref<4x1xi32, #tpu.memory_space<vmem>>, %arg6: memref<2x1xf32, #tpu.memory_space<vmem>>, %arg7: memref<256x32xbf16, #tpu.memory_space<vmem>>, %arg8: memref<1x32xf32, #tpu.memory_space<vmem>>, %arg9: memref<32x3xbf16, #tpu.memory_space<vmem>>, %arg10: memref<1x3xf32, #tpu.memory_space<vmem>>, %arg11: memref<2x3xf32, #tpu.memory_space<vmem>>) attributes {dimension_semantics = [#tpu.dimension_semantics<arbitrary>], iteration_bounds = array<i64: 1>, scalar_prefetch = 0 : i64, scratch_operands = 0 : i64, tpu.core_type = #tpu.core_type<tc>, window_params = [{pipeline_mode = #tpu.pipeline_mode<synchronous>, transform_indices = @transform_0, window_bounds = array<i64: 8, 4, 128>}, {pipeline_mode = #tpu.pipeline_mode<synchronous>, transform_indices = @transform_1, window_bounds = array<i64: 8, 4, 128>}, {pipeline_mode = #tpu.pipeline_mode<synchronous>, transform_indices = @transform_2, window_bounds = array<i64: 32, 128>}, {pipeline_mode = #tpu.pipeline_mode<synchronous>, transform_indices = @transform_3, window_bounds = array<i64: 32, 128>}, {pipeline_mode = #tpu.pipeline_mode<synchronous>, transform_indices = @transform_4, window_bounds = array<i64: 4, 1>}, {pipeline_mode = #tpu.pipeline_mode<synchronous>, transform_indices = @transform_5, window_bounds = array<i64: 2, 1>}, {pipeline_mode = #tpu.pipeline_mode<synchronous>, transform_indices = @transform_6, window_bounds = array<i64: 256, 32>}, {pipeline_mode = #tpu.pipeline_mode<synchronous>, transform_indices = @transform_7, window_bounds = array<i64: 1, 32>}, {pipeline_mode = #tpu.pipeline_mode<synchronous>, transform_indices = @transform_8, window_bounds = array<i64: 32, 3>}, {pipeline_mode = #tpu.pipeline_mode<synchronous>, transform_indices = @transform_9, window_bounds = array<i64: 1, 3>}, {pipeline_mode = #tpu.pipeline_mode<synchronous>, transform_indices = @transform_10, window_bounds = array<i64: 2, 3>}]} {
    %c0 = arith.constant 0 : index
    %c0_0 = arith.constant 0 : index
    %0 = vector.load %arg3[%c0, %c0_0] : memref<32x128xbf16, #tpu.memory_space<vmem>>, vector<32x128xbf16>
    %c0_1 = arith.constant 0 : index
    %c0_2 = arith.constant 0 : index
    %1 = vector.load %arg4[%c0_1, %c0_2] : memref<32x128xbf16, #tpu.memory_space<vmem>>, vector<32x128xbf16>
    %c0_3 = arith.constant 0 : index
    %c0_4 = arith.constant 0 : index
    %2 = vector.load %arg5[%c0_3, %c0_4] : memref<4x1xi32, #tpu.memory_space<vmem>>, vector<4x1xi32>
    %cst = arith.constant 0.000000e+00 : f32
    %3 = vector.broadcast %cst : f32 to vector<4x32xf32>
    %cst_5 = arith.constant -1.000000e+30 : f32
    %4 = vector.broadcast %cst_5 : f32 to vector<4x32xf32>
    %c0_i32 = arith.constant 0 : i32
    %c7_i32 = arith.constant 7 : i32
    %5 = arith.subi %c7_i32, %c0_i32 : i32
    %6 = arith.index_cast %c0_i32 : i32 to index
    %c0_6 = arith.constant 0 : index
    %c0_7 = arith.constant 0 : index
    %7 = vector.load %arg1[%6, %c0_6, %c0_7] : memref<8x4x128xf32, #tpu.memory_space<vmem>>, vector<1x4x128xf32>
    %8 = vector.shape_cast %7 : vector<1x4x128xf32> to vector<4x128xf32>
    %9 = arith.truncf %3 : vector<4x32xf32> to vector<4x32xbf16>
    %cst_8 = arith.constant dense<0.000000e+00> : vector<4x128xf32>
    %10 = tpu.matmul %9, %0, %cst_8 {dimension_numbers = #tpu.dot_dimension_numbers<[1], [0], [0], [1], [0, 0, 1, 1], [], []>} : vector<4x32xbf16>, vector<32x128xbf16>, vector<4x128xf32> -> vector<4x128xf32>
    %11 = arith.addf %8, %10 : vector<4x128xf32>
    %12 = vector.extract_strided_slice %11 {offsets = [0, 0], sizes = [4, 32], strides = [1, 1]} : vector<4x128xf32> to vector<4x32xf32>
    %13 = arith.negf %12 : vector<4x32xf32>
    %14 = math.exp %13 : vector<4x32xf32>
    %cst_9 = arith.constant 1.000000e+00 : f32
    %15 = vector.broadcast %cst_9 : f32 to vector<4x32xf32>
    %16 = arith.addf %15, %14 : vector<4x32xf32>
    %17 = arith.divf %15, %16 : vector<4x32xf32>
    %18 = vector.extract_strided_slice %11 {offsets = [0, 32], sizes = [4, 32], strides = [1, 1]} : vector<4x128xf32> to vector<4x32xf32>
    %19 = arith.negf %18 : vector<4x32xf32>
    %20 = math.exp %19 : vector<4x32xf32>
    %cst_10 = arith.constant 1.000000e+00 : f32
    %21 = vector.broadcast %cst_10 : f32 to vector<4x32xf32>
    %22 = arith.addf %21, %20 : vector<4x32xf32>
    %23 = arith.divf %21, %22 : vector<4x32xf32>
    %24 = vector.extract_strided_slice %11 {offsets = [0, 64], sizes = [4, 32], strides = [1, 1]} : vector<4x128xf32> to vector<4x32xf32>
    %25 = math.tanh %24 : vector<4x32xf32>
    %26 = vector.extract_strided_slice %11 {offsets = [0, 96], sizes = [4, 32], strides = [1, 1]} : vector<4x128xf32> to vector<4x32xf32>
    %27 = arith.negf %26 : vector<4x32xf32>
    %28 = math.exp %27 : vector<4x32xf32>
    %cst_11 = arith.constant 1.000000e+00 : f32
    %29 = vector.broadcast %cst_11 : f32 to vector<4x32xf32>
    %30 = arith.addf %29, %28 : vector<4x32xf32>
    %31 = arith.divf %29, %30 : vector<4x32xf32>
    %32 = arith.mulf %23, %3 : vector<4x32xf32>
    %33 = arith.mulf %17, %25 : vector<4x32xf32>
    %34 = arith.addf %32, %33 : vector<4x32xf32>
    %35 = math.tanh %34 : vector<4x32xf32>
    %36 = arith.mulf %31, %35 : vector<4x32xf32>
    %37 = arith.index_cast %5 : i32 to index
    %c0_12 = arith.constant 0 : index
    %c0_13 = arith.constant 0 : index
    %38 = vector.load %arg2[%37, %c0_12, %c0_13] : memref<8x4x128xf32, #tpu.memory_space<vmem>>, vector<1x4x128xf32>
    %39 = vector.shape_cast %38 : vector<1x4x128xf32> to vector<4x128xf32>
    %40 = arith.truncf %3 : vector<4x32xf32> to vector<4x32xbf16>
    %cst_14 = arith.constant dense<0.000000e+00> : vector<4x128xf32>
    %41 = tpu.matmul %40, %1, %cst_14 {dimension_numbers = #tpu.dot_dimension_numbers<[1], [0], [0], [1], [0, 0, 1, 1], [], []>} : vector<4x32xbf16>, vector<32x128xbf16>, vector<4x128xf32> -> vector<4x128xf32>
    %42 = arith.addf %39, %41 : vector<4x128xf32>
    %43 = vector.extract_strided_slice %42 {offsets = [0, 0], sizes = [4, 32], strides = [1, 1]} : vector<4x128xf32> to vector<4x32xf32>
    %44 = arith.negf %43 : vector<4x32xf32>
    %45 = math.exp %44 : vector<4x32xf32>
    %cst_15 = arith.constant 1.000000e+00 : f32
    %46 = vector.broadcast %cst_15 : f32 to vector<4x32xf32>
    %47 = arith.addf %46, %45 : vector<4x32xf32>
    %48 = arith.divf %46, %47 : vector<4x32xf32>
    %49 = vector.extract_strided_slice %42 {offsets = [0, 32], sizes = [4, 32], strides = [1, 1]} : vector<4x128xf32> to vector<4x32xf32>
    %50 = arith.negf %49 : vector<4x32xf32>
    %51 = math.exp %50 : vector<4x32xf32>
    %cst_16 = arith.constant 1.000000e+00 : f32
    %52 = vector.broadcast %cst_16 : f32 to vector<4x32xf32>
    %53 = arith.addf %52, %51 : vector<4x32xf32>
    %54 = arith.divf %52, %53 : vector<4x32xf32>
    %55 = vector.extract_strided_slice %42 {offsets = [0, 64], sizes = [4, 32], strides = [1, 1]} : vector<4x128xf32> to vector<4x32xf32>
    %56 = math.tanh %55 : vector<4x32xf32>
    %57 = vector.extract_strided_slice %42 {offsets = [0, 96], sizes = [4, 32], strides = [1, 1]} : vector<4x128xf32> to vector<4x32xf32>
    %58 = arith.negf %57 : vector<4x32xf32>
    %59 = math.exp %58 : vector<4x32xf32>
    %cst_17 = arith.constant 1.000000e+00 : f32
    %60 = vector.broadcast %cst_17 : f32 to vector<4x32xf32>
    %61 = arith.addf %60, %59 : vector<4x32xf32>
    %62 = arith.divf %60, %61 : vector<4x32xf32>
    %63 = arith.mulf %54, %3 : vector<4x32xf32>
    %64 = arith.mulf %48, %56 : vector<4x32xf32>
    %65 = arith.addf %63, %64 : vector<4x32xf32>
    %66 = math.tanh %65 : vector<4x32xf32>
    %67 = arith.mulf %62, %66 : vector<4x32xf32>
    %68 = vector.broadcast %c0_i32 : i32 to vector<4x1xi32>
    %69 = arith.cmpi sgt, %2, %68 : vector<4x1xi32>
    %cst_18 = arith.constant -1.000000e+30 : f32
    %70 = vector.shape_cast %69 : vector<4x1xi1> to vector<4x1xi1>
    %71 = vector.broadcast %70 : vector<4x1xi1> to vector<4x32xi1>
    %72 = vector.broadcast %cst_18 : f32 to vector<4x32xf32>
    %73 = arith.select %71, %36, %72 : vector<4x32xi1>, vector<4x32xf32>
    %74 = arith.maximumf %4, %73 : vector<4x32xf32>
    %75 = vector.broadcast %5 : i32 to vector<4x1xi32>
    %76 = arith.cmpi sgt, %2, %75 : vector<4x1xi32>
    %cst_19 = arith.constant -1.000000e+30 : f32
    %77 = vector.shape_cast %76 : vector<4x1xi1> to vector<4x1xi1>
    %78 = vector.broadcast %77 : vector<4x1xi1> to vector<4x32xi1>
    %79 = vector.broadcast %cst_19 : f32 to vector<4x32xf32>
    %80 = arith.select %78, %67, %79 : vector<4x32xi1>, vector<4x32xf32>
    %81 = arith.maximumf %4, %80 : vector<4x32xf32>
    %c1_i32 = arith.constant 1 : i32
    %c7_i32_20 = arith.constant 7 : i32
    %82 = arith.subi %c7_i32_20, %c1_i32 : i32
    %83 = arith.index_cast %c1_i32 : i32 to index
    %c0_21 = arith.constant 0 : index
    %c0_22 = arith.constant 0 : index
    %84 = vector.load %arg1[%83, %c0_21, %c0_22] : memref<8x4x128xf32, #tpu.memory_space<vmem>>, vector<1x4x128xf32>
    %85 = vector.shape_cast %84 : vector<1x4x128xf32> to vector<4x128xf32>
    %86 = arith.truncf %36 : vector<4x32xf32> to vector<4x32xbf16>
    %cst_23 = arith.constant dense<0.000000e+00> : vector<4x128xf32>
    %87 = tpu.matmul %86, %0, %cst_23 {dimension_numbers = #tpu.dot_dimension_numbers<[1], [0], [0], [1], [0, 0, 1, 1], [], []>} : vector<4x32xbf16>, vector<32x128xbf16>, vector<4x128xf32> -> vector<4x128xf32>
    %88 = arith.addf %85, %87 : vector<4x128xf32>
    %89 = vector.extract_strided_slice %88 {offsets = [0, 0], sizes = [4, 32], strides = [1, 1]} : vector<4x128xf32> to vector<4x32xf32>
    %90 = arith.negf %89 : vector<4x32xf32>
    %91 = math.exp %90 : vector<4x32xf32>
    %cst_24 = arith.constant 1.000000e+00 : f32
    %92 = vector.broadcast %cst_24 : f32 to vector<4x32xf32>
    %93 = arith.addf %92, %91 : vector<4x32xf32>
    %94 = arith.divf %92, %93 : vector<4x32xf32>
    %95 = vector.extract_strided_slice %88 {offsets = [0, 32], sizes = [4, 32], strides = [1, 1]} : vector<4x128xf32> to vector<4x32xf32>
    %96 = arith.negf %95 : vector<4x32xf32>
    %97 = math.exp %96 : vector<4x32xf32>
    %cst_25 = arith.constant 1.000000e+00 : f32
    %98 = vector.broadcast %cst_25 : f32 to vector<4x32xf32>
    %99 = arith.addf %98, %97 : vector<4x32xf32>
    %100 = arith.divf %98, %99 : vector<4x32xf32>
    %101 = vector.extract_strided_slice %88 {offsets = [0, 64], sizes = [4, 32], strides = [1, 1]} : vector<4x128xf32> to vector<4x32xf32>
    %102 = math.tanh %101 : vector<4x32xf32>
    %103 = vector.extract_strided_slice %88 {offsets = [0, 96], sizes = [4, 32], strides = [1, 1]} : vector<4x128xf32> to vector<4x32xf32>
    %104 = arith.negf %103 : vector<4x32xf32>
    %105 = math.exp %104 : vector<4x32xf32>
    %cst_26 = arith.constant 1.000000e+00 : f32
    %106 = vector.broadcast %cst_26 : f32 to vector<4x32xf32>
    %107 = arith.addf %106, %105 : vector<4x32xf32>
    %108 = arith.divf %106, %107 : vector<4x32xf32>
    %109 = arith.mulf %100, %34 : vector<4x32xf32>
    %110 = arith.mulf %94, %102 : vector<4x32xf32>
    %111 = arith.addf %109, %110 : vector<4x32xf32>
    %112 = math.tanh %111 : vector<4x32xf32>
    %113 = arith.mulf %108, %112 : vector<4x32xf32>
    %114 = arith.index_cast %82 : i32 to index
    %c0_27 = arith.constant 0 : index
    %c0_28 = arith.constant 0 : index
    %115 = vector.load %arg2[%114, %c0_27, %c0_28] : memref<8x4x128xf32, #tpu.memory_space<vmem>>, vector<1x4x128xf32>
    %116 = vector.shape_cast %115 : vector<1x4x128xf32> to vector<4x128xf32>
    %117 = arith.truncf %67 : vector<4x32xf32> to vector<4x32xbf16>
    %cst_29 = arith.constant dense<0.000000e+00> : vector<4x128xf32>
    %118 = tpu.matmul %117, %1, %cst_29 {dimension_numbers = #tpu.dot_dimension_numbers<[1], [0], [0], [1], [0, 0, 1, 1], [], []>} : vector<4x32xbf16>, vector<32x128xbf16>, vector<4x128xf32> -> vector<4x128xf32>
    %119 = arith.addf %116, %118 : vector<4x128xf32>
    %120 = vector.extract_strided_slice %119 {offsets = [0, 0], sizes = [4, 32], strides = [1, 1]} : vector<4x128xf32> to vector<4x32xf32>
    %121 = arith.negf %120 : vector<4x32xf32>
    %122 = math.exp %121 : vector<4x32xf32>
    %cst_30 = arith.constant 1.000000e+00 : f32
    %123 = vector.broadcast %cst_30 : f32 to vector<4x32xf32>
    %124 = arith.addf %123, %122 : vector<4x32xf32>
    %125 = arith.divf %123, %124 : vector<4x32xf32>
    %126 = vector.extract_strided_slice %119 {offsets = [0, 32], sizes = [4, 32], strides = [1, 1]} : vector<4x128xf32> to vector<4x32xf32>
    %127 = arith.negf %126 : vector<4x32xf32>
    %128 = math.exp %127 : vector<4x32xf32>
    %cst_31 = arith.constant 1.000000e+00 : f32
    %129 = vector.broadcast %cst_31 : f32 to vector<4x32xf32>
    %130 = arith.addf %129, %128 : vector<4x32xf32>
    %131 = arith.divf %129, %130 : vector<4x32xf32>
    %132 = vector.extract_strided_slice %119 {offsets = [0, 64], sizes = [4, 32], strides = [1, 1]} : vector<4x128xf32> to vector<4x32xf32>
    %133 = math.tanh %132 : vector<4x32xf32>
    %134 = vector.extract_strided_slice %119 {offsets = [0, 96], sizes = [4, 32], strides = [1, 1]} : vector<4x128xf32> to vector<4x32xf32>
    %135 = arith.negf %134 : vector<4x32xf32>
    %136 = math.exp %135 : vector<4x32xf32>
    %cst_32 = arith.constant 1.000000e+00 : f32
    %137 = vector.broadcast %cst_32 : f32 to vector<4x32xf32>
    %138 = arith.addf %137, %136 : vector<4x32xf32>
    %139 = arith.divf %137, %138 : vector<4x32xf32>
    %140 = arith.mulf %131, %65 : vector<4x32xf32>
    %141 = arith.mulf %125, %133 : vector<4x32xf32>
    %142 = arith.addf %140, %141 : vector<4x32xf32>
    %143 = math.tanh %142 : vector<4x32xf32>
    %144 = arith.mulf %139, %143 : vector<4x32xf32>
    %145 = vector.broadcast %c1_i32 : i32 to vector<4x1xi32>
    %146 = arith.cmpi sgt, %2, %145 : vector<4x1xi32>
    %cst_33 = arith.constant -1.000000e+30 : f32
    %147 = vector.shape_cast %146 : vector<4x1xi1> to vector<4x1xi1>
    %148 = vector.broadcast %147 : vector<4x1xi1> to vector<4x32xi1>
    %149 = vector.broadcast %cst_33 : f32 to vector<4x32xf32>
    %150 = arith.select %148, %113, %149 : vector<4x32xi1>, vector<4x32xf32>
    %151 = arith.maximumf %74, %150 : vector<4x32xf32>
    %152 = vector.broadcast %82 : i32 to vector<4x1xi32>
    %153 = arith.cmpi sgt, %2, %152 : vector<4x1xi32>
    %cst_34 = arith.constant -1.000000e+30 : f32
    %154 = vector.shape_cast %153 : vector<4x1xi1> to vector<4x1xi1>
    %155 = vector.broadcast %154 : vector<4x1xi1> to vector<4x32xi1>
    %156 = vector.broadcast %cst_34 : f32 to vector<4x32xf32>
    %157 = arith.select %155, %144, %156 : vector<4x32xi1>, vector<4x32xf32>
    %158 = arith.maximumf %81, %157 : vector<4x32xf32>
    %c2_i32 = arith.constant 2 : i32
    %c7_i32_35 = arith.constant 7 : i32
    %159 = arith.subi %c7_i32_35, %c2_i32 : i32
    %160 = arith.index_cast %c2_i32 : i32 to index
    %c0_36 = arith.constant 0 : index
    %c0_37 = arith.constant 0 : index
    %161 = vector.load %arg1[%160, %c0_36, %c0_37] : memref<8x4x128xf32, #tpu.memory_space<vmem>>, vector<1x4x128xf32>
    %162 = vector.shape_cast %161 : vector<1x4x128xf32> to vector<4x128xf32>
    %163 = arith.truncf %113 : vector<4x32xf32> to vector<4x32xbf16>
    %cst_38 = arith.constant dense<0.000000e+00> : vector<4x128xf32>
    %164 = tpu.matmul %163, %0, %cst_38 {dimension_numbers = #tpu.dot_dimension_numbers<[1], [0], [0], [1], [0, 0, 1, 1], [], []>} : vector<4x32xbf16>, vector<32x128xbf16>, vector<4x128xf32> -> vector<4x128xf32>
    %165 = arith.addf %162, %164 : vector<4x128xf32>
    %166 = vector.extract_strided_slice %165 {offsets = [0, 0], sizes = [4, 32], strides = [1, 1]} : vector<4x128xf32> to vector<4x32xf32>
    %167 = arith.negf %166 : vector<4x32xf32>
    %168 = math.exp %167 : vector<4x32xf32>
    %cst_39 = arith.constant 1.000000e+00 : f32
    %169 = vector.broadcast %cst_39 : f32 to vector<4x32xf32>
    %170 = arith.addf %169, %168 : vector<4x32xf32>
    %171 = arith.divf %169, %170 : vector<4x32xf32>
    %172 = vector.extract_strided_slice %165 {offsets = [0, 32], sizes = [4, 32], strides = [1, 1]} : vector<4x128xf32> to vector<4x32xf32>
    %173 = arith.negf %172 : vector<4x32xf32>
    %174 = math.exp %173 : vector<4x32xf32>
    %cst_40 = arith.constant 1.000000e+00 : f32
    %175 = vector.broadcast %cst_40 : f32 to vector<4x32xf32>
    %176 = arith.addf %175, %174 : vector<4x32xf32>
    %177 = arith.divf %175, %176 : vector<4x32xf32>
    %178 = vector.extract_strided_slice %165 {offsets = [0, 64], sizes = [4, 32], strides = [1, 1]} : vector<4x128xf32> to vector<4x32xf32>
    %179 = math.tanh %178 : vector<4x32xf32>
    %180 = vector.extract_strided_slice %165 {offsets = [0, 96], sizes = [4, 32], strides = [1, 1]} : vector<4x128xf32> to vector<4x32xf32>
    %181 = arith.negf %180 : vector<4x32xf32>
    %182 = math.exp %181 : vector<4x32xf32>
    %cst_41 = arith.constant 1.000000e+00 : f32
    %183 = vector.broadcast %cst_41 : f32 to vector<4x32xf32>
    %184 = arith.addf %183, %182 : vector<4x32xf32>
    %185 = arith.divf %183, %184 : vector<4x32xf32>
    %186 = arith.mulf %177, %111 : vector<4x32xf32>
    %187 = arith.mulf %171, %179 : vector<4x32xf32>
    %188 = arith.addf %186, %187 : vector<4x32xf32>
    %189 = math.tanh %188 : vector<4x32xf32>
    %190 = arith.mulf %185, %189 : vector<4x32xf32>
    %191 = arith.index_cast %159 : i32 to index
    %c0_42 = arith.constant 0 : index
    %c0_43 = arith.constant 0 : index
    %192 = vector.load %arg2[%191, %c0_42, %c0_43] : memref<8x4x128xf32, #tpu.memory_space<vmem>>, vector<1x4x128xf32>
    %193 = vector.shape_cast %192 : vector<1x4x128xf32> to vector<4x128xf32>
    %194 = arith.truncf %144 : vector<4x32xf32> to vector<4x32xbf16>
    %cst_44 = arith.constant dense<0.000000e+00> : vector<4x128xf32>
    %195 = tpu.matmul %194, %1, %cst_44 {dimension_numbers = #tpu.dot_dimension_numbers<[1], [0], [0], [1], [0, 0, 1, 1], [], []>} : vector<4x32xbf16>, vector<32x128xbf16>, vector<4x128xf32> -> vector<4x128xf32>
    %196 = arith.addf %193, %195 : vector<4x128xf32>
    %197 = vector.extract_strided_slice %196 {offsets = [0, 0], sizes = [4, 32], strides = [1, 1]} : vector<4x128xf32> to vector<4x32xf32>
    %198 = arith.negf %197 : vector<4x32xf32>
    %199 = math.exp %198 : vector<4x32xf32>
    %cst_45 = arith.constant 1.000000e+00 : f32
    %200 = vector.broadcast %cst_45 : f32 to vector<4x32xf32>
    %201 = arith.addf %200, %199 : vector<4x32xf32>
    %202 = arith.divf %200, %201 : vector<4x32xf32>
    %203 = vector.extract_strided_slice %196 {offsets = [0, 32], sizes = [4, 32], strides = [1, 1]} : vector<4x128xf32> to vector<4x32xf32>
    %204 = arith.negf %203 : vector<4x32xf32>
    %205 = math.exp %204 : vector<4x32xf32>
    %cst_46 = arith.constant 1.000000e+00 : f32
    %206 = vector.broadcast %cst_46 : f32 to vector<4x32xf32>
    %207 = arith.addf %206, %205 : vector<4x32xf32>
    %208 = arith.divf %206, %207 : vector<4x32xf32>
    %209 = vector.extract_strided_slice %196 {offsets = [0, 64], sizes = [4, 32], strides = [1, 1]} : vector<4x128xf32> to vector<4x32xf32>
    %210 = math.tanh %209 : vector<4x32xf32>
    %211 = vector.extract_strided_slice %196 {offsets = [0, 96], sizes = [4, 32], strides = [1, 1]} : vector<4x128xf32> to vector<4x32xf32>
    %212 = arith.negf %211 : vector<4x32xf32>
    %213 = math.exp %212 : vector<4x32xf32>
    %cst_47 = arith.constant 1.000000e+00 : f32
    %214 = vector.broadcast %cst_47 : f32 to vector<4x32xf32>
    %215 = arith.addf %214, %213 : vector<4x32xf32>
    %216 = arith.divf %214, %215 : vector<4x32xf32>
    %217 = arith.mulf %208, %142 : vector<4x32xf32>
    %218 = arith.mulf %202, %210 : vector<4x32xf32>
    %219 = arith.addf %217, %218 : vector<4x32xf32>
    %220 = math.tanh %219 : vector<4x32xf32>
    %221 = arith.mulf %216, %220 : vector<4x32xf32>
    %222 = vector.broadcast %c2_i32 : i32 to vector<4x1xi32>
    %223 = arith.cmpi sgt, %2, %222 : vector<4x1xi32>
    %cst_48 = arith.constant -1.000000e+30 : f32
    %224 = vector.shape_cast %223 : vector<4x1xi1> to vector<4x1xi1>
    %225 = vector.broadcast %224 : vector<4x1xi1> to vector<4x32xi1>
    %226 = vector.broadcast %cst_48 : f32 to vector<4x32xf32>
    %227 = arith.select %225, %190, %226 : vector<4x32xi1>, vector<4x32xf32>
    %228 = arith.maximumf %151, %227 : vector<4x32xf32>
    %229 = vector.broadcast %159 : i32 to vector<4x1xi32>
    %230 = arith.cmpi sgt, %2, %229 : vector<4x1xi32>
    %cst_49 = arith.constant -1.000000e+30 : f32
    %231 = vector.shape_cast %230 : vector<4x1xi1> to vector<4x1xi1>
    %232 = vector.broadcast %231 : vector<4x1xi1> to vector<4x32xi1>
    %233 = vector.broadcast %cst_49 : f32 to vector<4x32xf32>
    %234 = arith.select %232, %221, %233 : vector<4x32xi1>, vector<4x32xf32>
    %235 = arith.maximumf %158, %234 : vector<4x32xf32>
    %c3_i32 = arith.constant 3 : i32
    %c7_i32_50 = arith.constant 7 : i32
    %236 = arith.subi %c7_i32_50, %c3_i32 : i32
    %237 = arith.index_cast %c3_i32 : i32 to index
    %c0_51 = arith.constant 0 : index
    %c0_52 = arith.constant 0 : index
    %238 = vector.load %arg1[%237, %c0_51, %c0_52] : memref<8x4x128xf32, #tpu.memory_space<vmem>>, vector<1x4x128xf32>
    %239 = vector.shape_cast %238 : vector<1x4x128xf32> to vector<4x128xf32>
    %240 = arith.truncf %190 : vector<4x32xf32> to vector<4x32xbf16>
    %cst_53 = arith.constant dense<0.000000e+00> : vector<4x128xf32>
    %241 = tpu.matmul %240, %0, %cst_53 {dimension_numbers = #tpu.dot_dimension_numbers<[1], [0], [0], [1], [0, 0, 1, 1], [], []>} : vector<4x32xbf16>, vector<32x128xbf16>, vector<4x128xf32> -> vector<4x128xf32>
    %242 = arith.addf %239, %241 : vector<4x128xf32>
    %243 = vector.extract_strided_slice %242 {offsets = [0, 0], sizes = [4, 32], strides = [1, 1]} : vector<4x128xf32> to vector<4x32xf32>
    %244 = arith.negf %243 : vector<4x32xf32>
    %245 = math.exp %244 : vector<4x32xf32>
    %cst_54 = arith.constant 1.000000e+00 : f32
    %246 = vector.broadcast %cst_54 : f32 to vector<4x32xf32>
    %247 = arith.addf %246, %245 : vector<4x32xf32>
    %248 = arith.divf %246, %247 : vector<4x32xf32>
    %249 = vector.extract_strided_slice %242 {offsets = [0, 32], sizes = [4, 32], strides = [1, 1]} : vector<4x128xf32> to vector<4x32xf32>
    %250 = arith.negf %249 : vector<4x32xf32>
    %251 = math.exp %250 : vector<4x32xf32>
    %cst_55 = arith.constant 1.000000e+00 : f32
    %252 = vector.broadcast %cst_55 : f32 to vector<4x32xf32>
    %253 = arith.addf %252, %251 : vector<4x32xf32>
    %254 = arith.divf %252, %253 : vector<4x32xf32>
    %255 = vector.extract_strided_slice %242 {offsets = [0, 64], sizes = [4, 32], strides = [1, 1]} : vector<4x128xf32> to vector<4x32xf32>
    %256 = math.tanh %255 : vector<4x32xf32>
    %257 = vector.extract_strided_slice %242 {offsets = [0, 96], sizes = [4, 32], strides = [1, 1]} : vector<4x128xf32> to vector<4x32xf32>
    %258 = arith.negf %257 : vector<4x32xf32>
    %259 = math.exp %258 : vector<4x32xf32>
    %cst_56 = arith.constant 1.000000e+00 : f32
    %260 = vector.broadcast %cst_56 : f32 to vector<4x32xf32>
    %261 = arith.addf %260, %259 : vector<4x32xf32>
    %262 = arith.divf %260, %261 : vector<4x32xf32>
    %263 = arith.mulf %254, %188 : vector<4x32xf32>
    %264 = arith.mulf %248, %256 : vector<4x32xf32>
    %265 = arith.addf %263, %264 : vector<4x32xf32>
    %266 = math.tanh %265 : vector<4x32xf32>
    %267 = arith.mulf %262, %266 : vector<4x32xf32>
    %268 = arith.index_cast %236 : i32 to index
    %c0_57 = arith.constant 0 : index
    %c0_58 = arith.constant 0 : index
    %269 = vector.load %arg2[%268, %c0_57, %c0_58] : memref<8x4x128xf32, #tpu.memory_space<vmem>>, vector<1x4x128xf32>
    %270 = vector.shape_cast %269 : vector<1x4x128xf32> to vector<4x128xf32>
    %271 = arith.truncf %221 : vector<4x32xf32> to vector<4x32xbf16>
    %cst_59 = arith.constant dense<0.000000e+00> : vector<4x128xf32>
    %272 = tpu.matmul %271, %1, %cst_59 {dimension_numbers = #tpu.dot_dimension_numbers<[1], [0], [0], [1], [0, 0, 1, 1], [], []>} : vector<4x32xbf16>, vector<32x128xbf16>, vector<4x128xf32> -> vector<4x128xf32>
    %273 = arith.addf %270, %272 : vector<4x128xf32>
    %274 = vector.extract_strided_slice %273 {offsets = [0, 0], sizes = [4, 32], strides = [1, 1]} : vector<4x128xf32> to vector<4x32xf32>
    %275 = arith.negf %274 : vector<4x32xf32>
    %276 = math.exp %275 : vector<4x32xf32>
    %cst_60 = arith.constant 1.000000e+00 : f32
    %277 = vector.broadcast %cst_60 : f32 to vector<4x32xf32>
    %278 = arith.addf %277, %276 : vector<4x32xf32>
    %279 = arith.divf %277, %278 : vector<4x32xf32>
    %280 = vector.extract_strided_slice %273 {offsets = [0, 32], sizes = [4, 32], strides = [1, 1]} : vector<4x128xf32> to vector<4x32xf32>
    %281 = arith.negf %280 : vector<4x32xf32>
    %282 = math.exp %281 : vector<4x32xf32>
    %cst_61 = arith.constant 1.000000e+00 : f32
    %283 = vector.broadcast %cst_61 : f32 to vector<4x32xf32>
    %284 = arith.addf %283, %282 : vector<4x32xf32>
    %285 = arith.divf %283, %284 : vector<4x32xf32>
    %286 = vector.extract_strided_slice %273 {offsets = [0, 64], sizes = [4, 32], strides = [1, 1]} : vector<4x128xf32> to vector<4x32xf32>
    %287 = math.tanh %286 : vector<4x32xf32>
    %288 = vector.extract_strided_slice %273 {offsets = [0, 96], sizes = [4, 32], strides = [1, 1]} : vector<4x128xf32> to vector<4x32xf32>
    %289 = arith.negf %288 : vector<4x32xf32>
    %290 = math.exp %289 : vector<4x32xf32>
    %cst_62 = arith.constant 1.000000e+00 : f32
    %291 = vector.broadcast %cst_62 : f32 to vector<4x32xf32>
    %292 = arith.addf %291, %290 : vector<4x32xf32>
    %293 = arith.divf %291, %292 : vector<4x32xf32>
    %294 = arith.mulf %285, %219 : vector<4x32xf32>
    %295 = arith.mulf %279, %287 : vector<4x32xf32>
    %296 = arith.addf %294, %295 : vector<4x32xf32>
    %297 = math.tanh %296 : vector<4x32xf32>
    %298 = arith.mulf %293, %297 : vector<4x32xf32>
    %299 = vector.broadcast %c3_i32 : i32 to vector<4x1xi32>
    %300 = arith.cmpi sgt, %2, %299 : vector<4x1xi32>
    %cst_63 = arith.constant -1.000000e+30 : f32
    %301 = vector.shape_cast %300 : vector<4x1xi1> to vector<4x1xi1>
    %302 = vector.broadcast %301 : vector<4x1xi1> to vector<4x32xi1>
    %303 = vector.broadcast %cst_63 : f32 to vector<4x32xf32>
    %304 = arith.select %302, %267, %303 : vector<4x32xi1>, vector<4x32xf32>
    %305 = arith.maximumf %228, %304 : vector<4x32xf32>
    %306 = vector.broadcast %236 : i32 to vector<4x1xi32>
    %307 = arith.cmpi sgt, %2, %306 : vector<4x1xi32>
    %cst_64 = arith.constant -1.000000e+30 : f32
    %308 = vector.shape_cast %307 : vector<4x1xi1> to vector<4x1xi1>
    %309 = vector.broadcast %308 : vector<4x1xi1> to vector<4x32xi1>
    %310 = vector.broadcast %cst_64 : f32 to vector<4x32xf32>
    %311 = arith.select %309, %298, %310 : vector<4x32xi1>, vector<4x32xf32>
    %312 = arith.maximumf %235, %311 : vector<4x32xf32>
    %c4_i32 = arith.constant 4 : i32
    %c7_i32_65 = arith.constant 7 : i32
    %313 = arith.subi %c7_i32_65, %c4_i32 : i32
    %314 = arith.index_cast %c4_i32 : i32 to index
    %c0_66 = arith.constant 0 : index
    %c0_67 = arith.constant 0 : index
    %315 = vector.load %arg1[%314, %c0_66, %c0_67] : memref<8x4x128xf32, #tpu.memory_space<vmem>>, vector<1x4x128xf32>
    %316 = vector.shape_cast %315 : vector<1x4x128xf32> to vector<4x128xf32>
    %317 = arith.truncf %267 : vector<4x32xf32> to vector<4x32xbf16>
    %cst_68 = arith.constant dense<0.000000e+00> : vector<4x128xf32>
    %318 = tpu.matmul %317, %0, %cst_68 {dimension_numbers = #tpu.dot_dimension_numbers<[1], [0], [0], [1], [0, 0, 1, 1], [], []>} : vector<4x32xbf16>, vector<32x128xbf16>, vector<4x128xf32> -> vector<4x128xf32>
    %319 = arith.addf %316, %318 : vector<4x128xf32>
    %320 = vector.extract_strided_slice %319 {offsets = [0, 0], sizes = [4, 32], strides = [1, 1]} : vector<4x128xf32> to vector<4x32xf32>
    %321 = arith.negf %320 : vector<4x32xf32>
    %322 = math.exp %321 : vector<4x32xf32>
    %cst_69 = arith.constant 1.000000e+00 : f32
    %323 = vector.broadcast %cst_69 : f32 to vector<4x32xf32>
    %324 = arith.addf %323, %322 : vector<4x32xf32>
    %325 = arith.divf %323, %324 : vector<4x32xf32>
    %326 = vector.extract_strided_slice %319 {offsets = [0, 32], sizes = [4, 32], strides = [1, 1]} : vector<4x128xf32> to vector<4x32xf32>
    %327 = arith.negf %326 : vector<4x32xf32>
    %328 = math.exp %327 : vector<4x32xf32>
    %cst_70 = arith.constant 1.000000e+00 : f32
    %329 = vector.broadcast %cst_70 : f32 to vector<4x32xf32>
    %330 = arith.addf %329, %328 : vector<4x32xf32>
    %331 = arith.divf %329, %330 : vector<4x32xf32>
    %332 = vector.extract_strided_slice %319 {offsets = [0, 64], sizes = [4, 32], strides = [1, 1]} : vector<4x128xf32> to vector<4x32xf32>
    %333 = math.tanh %332 : vector<4x32xf32>
    %334 = vector.extract_strided_slice %319 {offsets = [0, 96], sizes = [4, 32], strides = [1, 1]} : vector<4x128xf32> to vector<4x32xf32>
    %335 = arith.negf %334 : vector<4x32xf32>
    %336 = math.exp %335 : vector<4x32xf32>
    %cst_71 = arith.constant 1.000000e+00 : f32
    %337 = vector.broadcast %cst_71 : f32 to vector<4x32xf32>
    %338 = arith.addf %337, %336 : vector<4x32xf32>
    %339 = arith.divf %337, %338 : vector<4x32xf32>
    %340 = arith.mulf %331, %265 : vector<4x32xf32>
    %341 = arith.mulf %325, %333 : vector<4x32xf32>
    %342 = arith.addf %340, %341 : vector<4x32xf32>
    %343 = math.tanh %342 : vector<4x32xf32>
    %344 = arith.mulf %339, %343 : vector<4x32xf32>
    %345 = arith.index_cast %313 : i32 to index
    %c0_72 = arith.constant 0 : index
    %c0_73 = arith.constant 0 : index
    %346 = vector.load %arg2[%345, %c0_72, %c0_73] : memref<8x4x128xf32, #tpu.memory_space<vmem>>, vector<1x4x128xf32>
    %347 = vector.shape_cast %346 : vector<1x4x128xf32> to vector<4x128xf32>
    %348 = arith.truncf %298 : vector<4x32xf32> to vector<4x32xbf16>
    %cst_74 = arith.constant dense<0.000000e+00> : vector<4x128xf32>
    %349 = tpu.matmul %348, %1, %cst_74 {dimension_numbers = #tpu.dot_dimension_numbers<[1], [0], [0], [1], [0, 0, 1, 1], [], []>} : vector<4x32xbf16>, vector<32x128xbf16>, vector<4x128xf32> -> vector<4x128xf32>
    %350 = arith.addf %347, %349 : vector<4x128xf32>
    %351 = vector.extract_strided_slice %350 {offsets = [0, 0], sizes = [4, 32], strides = [1, 1]} : vector<4x128xf32> to vector<4x32xf32>
    %352 = arith.negf %351 : vector<4x32xf32>
    %353 = math.exp %352 : vector<4x32xf32>
    %cst_75 = arith.constant 1.000000e+00 : f32
    %354 = vector.broadcast %cst_75 : f32 to vector<4x32xf32>
    %355 = arith.addf %354, %353 : vector<4x32xf32>
    %356 = arith.divf %354, %355 : vector<4x32xf32>
    %357 = vector.extract_strided_slice %350 {offsets = [0, 32], sizes = [4, 32], strides = [1, 1]} : vector<4x128xf32> to vector<4x32xf32>
    %358 = arith.negf %357 : vector<4x32xf32>
    %359 = math.exp %358 : vector<4x32xf32>
    %cst_76 = arith.constant 1.000000e+00 : f32
    %360 = vector.broadcast %cst_76 : f32 to vector<4x32xf32>
    %361 = arith.addf %360, %359 : vector<4x32xf32>
    %362 = arith.divf %360, %361 : vector<4x32xf32>
    %363 = vector.extract_strided_slice %350 {offsets = [0, 64], sizes = [4, 32], strides = [1, 1]} : vector<4x128xf32> to vector<4x32xf32>
    %364 = math.tanh %363 : vector<4x32xf32>
    %365 = vector.extract_strided_slice %350 {offsets = [0, 96], sizes = [4, 32], strides = [1, 1]} : vector<4x128xf32> to vector<4x32xf32>
    %366 = arith.negf %365 : vector<4x32xf32>
    %367 = math.exp %366 : vector<4x32xf32>
    %cst_77 = arith.constant 1.000000e+00 : f32
    %368 = vector.broadcast %cst_77 : f32 to vector<4x32xf32>
    %369 = arith.addf %368, %367 : vector<4x32xf32>
    %370 = arith.divf %368, %369 : vector<4x32xf32>
    %371 = arith.mulf %362, %296 : vector<4x32xf32>
    %372 = arith.mulf %356, %364 : vector<4x32xf32>
    %373 = arith.addf %371, %372 : vector<4x32xf32>
    %374 = math.tanh %373 : vector<4x32xf32>
    %375 = arith.mulf %370, %374 : vector<4x32xf32>
    %376 = vector.broadcast %c4_i32 : i32 to vector<4x1xi32>
    %377 = arith.cmpi sgt, %2, %376 : vector<4x1xi32>
    %cst_78 = arith.constant -1.000000e+30 : f32
    %378 = vector.shape_cast %377 : vector<4x1xi1> to vector<4x1xi1>
    %379 = vector.broadcast %378 : vector<4x1xi1> to vector<4x32xi1>
    %380 = vector.broadcast %cst_78 : f32 to vector<4x32xf32>
    %381 = arith.select %379, %344, %380 : vector<4x32xi1>, vector<4x32xf32>
    %382 = arith.maximumf %305, %381 : vector<4x32xf32>
    %383 = vector.broadcast %313 : i32 to vector<4x1xi32>
    %384 = arith.cmpi sgt, %2, %383 : vector<4x1xi32>
    %cst_79 = arith.constant -1.000000e+30 : f32
    %385 = vector.shape_cast %384 : vector<4x1xi1> to vector<4x1xi1>
    %386 = vector.broadcast %385 : vector<4x1xi1> to vector<4x32xi1>
    %387 = vector.broadcast %cst_79 : f32 to vector<4x32xf32>
    %388 = arith.select %386, %375, %387 : vector<4x32xi1>, vector<4x32xf32>
    %389 = arith.maximumf %312, %388 : vector<4x32xf32>
    %c5_i32 = arith.constant 5 : i32
    %c7_i32_80 = arith.constant 7 : i32
    %390 = arith.subi %c7_i32_80, %c5_i32 : i32
    %391 = arith.index_cast %c5_i32 : i32 to index
    %c0_81 = arith.constant 0 : index
    %c0_82 = arith.constant 0 : index
    %392 = vector.load %arg1[%391, %c0_81, %c0_82] : memref<8x4x128xf32, #tpu.memory_space<vmem>>, vector<1x4x128xf32>
    %393 = vector.shape_cast %392 : vector<1x4x128xf32> to vector<4x128xf32>
    %394 = arith.truncf %344 : vector<4x32xf32> to vector<4x32xbf16>
    %cst_83 = arith.constant dense<0.000000e+00> : vector<4x128xf32>
    %395 = tpu.matmul %394, %0, %cst_83 {dimension_numbers = #tpu.dot_dimension_numbers<[1], [0], [0], [1], [0, 0, 1, 1], [], []>} : vector<4x32xbf16>, vector<32x128xbf16>, vector<4x128xf32> -> vector<4x128xf32>
    %396 = arith.addf %393, %395 : vector<4x128xf32>
    %397 = vector.extract_strided_slice %396 {offsets = [0, 0], sizes = [4, 32], strides = [1, 1]} : vector<4x128xf32> to vector<4x32xf32>
    %398 = arith.negf %397 : vector<4x32xf32>
    %399 = math.exp %398 : vector<4x32xf32>
    %cst_84 = arith.constant 1.000000e+00 : f32
    %400 = vector.broadcast %cst_84 : f32 to vector<4x32xf32>
    %401 = arith.addf %400, %399 : vector<4x32xf32>
    %402 = arith.divf %400, %401 : vector<4x32xf32>
    %403 = vector.extract_strided_slice %396 {offsets = [0, 32], sizes = [4, 32], strides = [1, 1]} : vector<4x128xf32> to vector<4x32xf32>
    %404 = arith.negf %403 : vector<4x32xf32>
    %405 = math.exp %404 : vector<4x32xf32>
    %cst_85 = arith.constant 1.000000e+00 : f32
    %406 = vector.broadcast %cst_85 : f32 to vector<4x32xf32>
    %407 = arith.addf %406, %405 : vector<4x32xf32>
    %408 = arith.divf %406, %407 : vector<4x32xf32>
    %409 = vector.extract_strided_slice %396 {offsets = [0, 64], sizes = [4, 32], strides = [1, 1]} : vector<4x128xf32> to vector<4x32xf32>
    %410 = math.tanh %409 : vector<4x32xf32>
    %411 = vector.extract_strided_slice %396 {offsets = [0, 96], sizes = [4, 32], strides = [1, 1]} : vector<4x128xf32> to vector<4x32xf32>
    %412 = arith.negf %411 : vector<4x32xf32>
    %413 = math.exp %412 : vector<4x32xf32>
    %cst_86 = arith.constant 1.000000e+00 : f32
    %414 = vector.broadcast %cst_86 : f32 to vector<4x32xf32>
    %415 = arith.addf %414, %413 : vector<4x32xf32>
    %416 = arith.divf %414, %415 : vector<4x32xf32>
    %417 = arith.mulf %408, %342 : vector<4x32xf32>
    %418 = arith.mulf %402, %410 : vector<4x32xf32>
    %419 = arith.addf %417, %418 : vector<4x32xf32>
    %420 = math.tanh %419 : vector<4x32xf32>
    %421 = arith.mulf %416, %420 : vector<4x32xf32>
    %422 = arith.index_cast %390 : i32 to index
    %c0_87 = arith.constant 0 : index
    %c0_88 = arith.constant 0 : index
    %423 = vector.load %arg2[%422, %c0_87, %c0_88] : memref<8x4x128xf32, #tpu.memory_space<vmem>>, vector<1x4x128xf32>
    %424 = vector.shape_cast %423 : vector<1x4x128xf32> to vector<4x128xf32>
    %425 = arith.truncf %375 : vector<4x32xf32> to vector<4x32xbf16>
    %cst_89 = arith.constant dense<0.000000e+00> : vector<4x128xf32>
    %426 = tpu.matmul %425, %1, %cst_89 {dimension_numbers = #tpu.dot_dimension_numbers<[1], [0], [0], [1], [0, 0, 1, 1], [], []>} : vector<4x32xbf16>, vector<32x128xbf16>, vector<4x128xf32> -> vector<4x128xf32>
    %427 = arith.addf %424, %426 : vector<4x128xf32>
    %428 = vector.extract_strided_slice %427 {offsets = [0, 0], sizes = [4, 32], strides = [1, 1]} : vector<4x128xf32> to vector<4x32xf32>
    %429 = arith.negf %428 : vector<4x32xf32>
    %430 = math.exp %429 : vector<4x32xf32>
    %cst_90 = arith.constant 1.000000e+00 : f32
    %431 = vector.broadcast %cst_90 : f32 to vector<4x32xf32>
    %432 = arith.addf %431, %430 : vector<4x32xf32>
    %433 = arith.divf %431, %432 : vector<4x32xf32>
    %434 = vector.extract_strided_slice %427 {offsets = [0, 32], sizes = [4, 32], strides = [1, 1]} : vector<4x128xf32> to vector<4x32xf32>
    %435 = arith.negf %434 : vector<4x32xf32>
    %436 = math.exp %435 : vector<4x32xf32>
    %cst_91 = arith.constant 1.000000e+00 : f32
    %437 = vector.broadcast %cst_91 : f32 to vector<4x32xf32>
    %438 = arith.addf %437, %436 : vector<4x32xf32>
    %439 = arith.divf %437, %438 : vector<4x32xf32>
    %440 = vector.extract_strided_slice %427 {offsets = [0, 64], sizes = [4, 32], strides = [1, 1]} : vector<4x128xf32> to vector<4x32xf32>
    %441 = math.tanh %440 : vector<4x32xf32>
    %442 = vector.extract_strided_slice %427 {offsets = [0, 96], sizes = [4, 32], strides = [1, 1]} : vector<4x128xf32> to vector<4x32xf32>
    %443 = arith.negf %442 : vector<4x32xf32>
    %444 = math.exp %443 : vector<4x32xf32>
    %cst_92 = arith.constant 1.000000e+00 : f32
    %445 = vector.broadcast %cst_92 : f32 to vector<4x32xf32>
    %446 = arith.addf %445, %444 : vector<4x32xf32>
    %447 = arith.divf %445, %446 : vector<4x32xf32>
    %448 = arith.mulf %439, %373 : vector<4x32xf32>
    %449 = arith.mulf %433, %441 : vector<4x32xf32>
    %450 = arith.addf %448, %449 : vector<4x32xf32>
    %451 = math.tanh %450 : vector<4x32xf32>
    %452 = arith.mulf %447, %451 : vector<4x32xf32>
    %453 = vector.broadcast %c5_i32 : i32 to vector<4x1xi32>
    %454 = arith.cmpi sgt, %2, %453 : vector<4x1xi32>
    %cst_93 = arith.constant -1.000000e+30 : f32
    %455 = vector.shape_cast %454 : vector<4x1xi1> to vector<4x1xi1>
    %456 = vector.broadcast %455 : vector<4x1xi1> to vector<4x32xi1>
    %457 = vector.broadcast %cst_93 : f32 to vector<4x32xf32>
    %458 = arith.select %456, %421, %457 : vector<4x32xi1>, vector<4x32xf32>
    %459 = arith.maximumf %382, %458 : vector<4x32xf32>
    %460 = vector.broadcast %390 : i32 to vector<4x1xi32>
    %461 = arith.cmpi sgt, %2, %460 : vector<4x1xi32>
    %cst_94 = arith.constant -1.000000e+30 : f32
    %462 = vector.shape_cast %461 : vector<4x1xi1> to vector<4x1xi1>
    %463 = vector.broadcast %462 : vector<4x1xi1> to vector<4x32xi1>
    %464 = vector.broadcast %cst_94 : f32 to vector<4x32xf32>
    %465 = arith.select %463, %452, %464 : vector<4x32xi1>, vector<4x32xf32>
    %466 = arith.maximumf %389, %465 : vector<4x32xf32>
    %c6_i32 = arith.constant 6 : i32
    %c7_i32_95 = arith.constant 7 : i32
    %467 = arith.subi %c7_i32_95, %c6_i32 : i32
    %468 = arith.index_cast %c6_i32 : i32 to index
    %c0_96 = arith.constant 0 : index
    %c0_97 = arith.constant 0 : index
    %469 = vector.load %arg1[%468, %c0_96, %c0_97] : memref<8x4x128xf32, #tpu.memory_space<vmem>>, vector<1x4x128xf32>
    %470 = vector.shape_cast %469 : vector<1x4x128xf32> to vector<4x128xf32>
    %471 = arith.truncf %421 : vector<4x32xf32> to vector<4x32xbf16>
    %cst_98 = arith.constant dense<0.000000e+00> : vector<4x128xf32>
    %472 = tpu.matmul %471, %0, %cst_98 {dimension_numbers = #tpu.dot_dimension_numbers<[1], [0], [0], [1], [0, 0, 1, 1], [], []>} : vector<4x32xbf16>, vector<32x128xbf16>, vector<4x128xf32> -> vector<4x128xf32>
    %473 = arith.addf %470, %472 : vector<4x128xf32>
    %474 = vector.extract_strided_slice %473 {offsets = [0, 0], sizes = [4, 32], strides = [1, 1]} : vector<4x128xf32> to vector<4x32xf32>
    %475 = arith.negf %474 : vector<4x32xf32>
    %476 = math.exp %475 : vector<4x32xf32>
    %cst_99 = arith.constant 1.000000e+00 : f32
    %477 = vector.broadcast %cst_99 : f32 to vector<4x32xf32>
    %478 = arith.addf %477, %476 : vector<4x32xf32>
    %479 = arith.divf %477, %478 : vector<4x32xf32>
    %480 = vector.extract_strided_slice %473 {offsets = [0, 32], sizes = [4, 32], strides = [1, 1]} : vector<4x128xf32> to vector<4x32xf32>
    %481 = arith.negf %480 : vector<4x32xf32>
    %482 = math.exp %481 : vector<4x32xf32>
    %cst_100 = arith.constant 1.000000e+00 : f32
    %483 = vector.broadcast %cst_100 : f32 to vector<4x32xf32>
    %484 = arith.addf %483, %482 : vector<4x32xf32>
    %485 = arith.divf %483, %484 : vector<4x32xf32>
    %486 = vector.extract_strided_slice %473 {offsets = [0, 64], sizes = [4, 32], strides = [1, 1]} : vector<4x128xf32> to vector<4x32xf32>
    %487 = math.tanh %486 : vector<4x32xf32>
    %488 = vector.extract_strided_slice %473 {offsets = [0, 96], sizes = [4, 32], strides = [1, 1]} : vector<4x128xf32> to vector<4x32xf32>
    %489 = arith.negf %488 : vector<4x32xf32>
    %490 = math.exp %489 : vector<4x32xf32>
    %cst_101 = arith.constant 1.000000e+00 : f32
    %491 = vector.broadcast %cst_101 : f32 to vector<4x32xf32>
    %492 = arith.addf %491, %490 : vector<4x32xf32>
    %493 = arith.divf %491, %492 : vector<4x32xf32>
    %494 = arith.mulf %485, %419 : vector<4x32xf32>
    %495 = arith.mulf %479, %487 : vector<4x32xf32>
    %496 = arith.addf %494, %495 : vector<4x32xf32>
    %497 = math.tanh %496 : vector<4x32xf32>
    %498 = arith.mulf %493, %497 : vector<4x32xf32>
    %499 = arith.index_cast %467 : i32 to index
    %c0_102 = arith.constant 0 : index
    %c0_103 = arith.constant 0 : index
    %500 = vector.load %arg2[%499, %c0_102, %c0_103] : memref<8x4x128xf32, #tpu.memory_space<vmem>>, vector<1x4x128xf32>
    %501 = vector.shape_cast %500 : vector<1x4x128xf32> to vector<4x128xf32>
    %502 = arith.truncf %452 : vector<4x32xf32> to vector<4x32xbf16>
    %cst_104 = arith.constant dense<0.000000e+00> : vector<4x128xf32>
    %503 = tpu.matmul %502, %1, %cst_104 {dimension_numbers = #tpu.dot_dimension_numbers<[1], [0], [0], [1], [0, 0, 1, 1], [], []>} : vector<4x32xbf16>, vector<32x128xbf16>, vector<4x128xf32> -> vector<4x128xf32>
    %504 = arith.addf %501, %503 : vector<4x128xf32>
    %505 = vector.extract_strided_slice %504 {offsets = [0, 0], sizes = [4, 32], strides = [1, 1]} : vector<4x128xf32> to vector<4x32xf32>
    %506 = arith.negf %505 : vector<4x32xf32>
    %507 = math.exp %506 : vector<4x32xf32>
    %cst_105 = arith.constant 1.000000e+00 : f32
    %508 = vector.broadcast %cst_105 : f32 to vector<4x32xf32>
    %509 = arith.addf %508, %507 : vector<4x32xf32>
    %510 = arith.divf %508, %509 : vector<4x32xf32>
    %511 = vector.extract_strided_slice %504 {offsets = [0, 32], sizes = [4, 32], strides = [1, 1]} : vector<4x128xf32> to vector<4x32xf32>
    %512 = arith.negf %511 : vector<4x32xf32>
    %513 = math.exp %512 : vector<4x32xf32>
    %cst_106 = arith.constant 1.000000e+00 : f32
    %514 = vector.broadcast %cst_106 : f32 to vector<4x32xf32>
    %515 = arith.addf %514, %513 : vector<4x32xf32>
    %516 = arith.divf %514, %515 : vector<4x32xf32>
    %517 = vector.extract_strided_slice %504 {offsets = [0, 64], sizes = [4, 32], strides = [1, 1]} : vector<4x128xf32> to vector<4x32xf32>
    %518 = math.tanh %517 : vector<4x32xf32>
    %519 = vector.extract_strided_slice %504 {offsets = [0, 96], sizes = [4, 32], strides = [1, 1]} : vector<4x128xf32> to vector<4x32xf32>
    %520 = arith.negf %519 : vector<4x32xf32>
    %521 = math.exp %520 : vector<4x32xf32>
    %cst_107 = arith.constant 1.000000e+00 : f32
    %522 = vector.broadcast %cst_107 : f32 to vector<4x32xf32>
    %523 = arith.addf %522, %521 : vector<4x32xf32>
    %524 = arith.divf %522, %523 : vector<4x32xf32>
    %525 = arith.mulf %516, %450 : vector<4x32xf32>
    %526 = arith.mulf %510, %518 : vector<4x32xf32>
    %527 = arith.addf %525, %526 : vector<4x32xf32>
    %528 = math.tanh %527 : vector<4x32xf32>
    %529 = arith.mulf %524, %528 : vector<4x32xf32>
    %530 = vector.broadcast %c6_i32 : i32 to vector<4x1xi32>
    %531 = arith.cmpi sgt, %2, %530 : vector<4x1xi32>
    %cst_108 = arith.constant -1.000000e+30 : f32
    %532 = vector.shape_cast %531 : vector<4x1xi1> to vector<4x1xi1>
    %533 = vector.broadcast %532 : vector<4x1xi1> to vector<4x32xi1>
    %534 = vector.broadcast %cst_108 : f32 to vector<4x32xf32>
    %535 = arith.select %533, %498, %534 : vector<4x32xi1>, vector<4x32xf32>
    %536 = arith.maximumf %459, %535 : vector<4x32xf32>
    %537 = vector.broadcast %467 : i32 to vector<4x1xi32>
    %538 = arith.cmpi sgt, %2, %537 : vector<4x1xi32>
    %cst_109 = arith.constant -1.000000e+30 : f32
    %539 = vector.shape_cast %538 : vector<4x1xi1> to vector<4x1xi1>
    %540 = vector.broadcast %539 : vector<4x1xi1> to vector<4x32xi1>
    %541 = vector.broadcast %cst_109 : f32 to vector<4x32xf32>
    %542 = arith.select %540, %529, %541 : vector<4x32xi1>, vector<4x32xf32>
    %543 = arith.maximumf %466, %542 : vector<4x32xf32>
    %c7_i32_110 = arith.constant 7 : i32
    %c7_i32_111 = arith.constant 7 : i32
    %544 = arith.subi %c7_i32_111, %c7_i32_110 : i32
    %545 = arith.index_cast %c7_i32_110 : i32 to index
    %c0_112 = arith.constant 0 : index
    %c0_113 = arith.constant 0 : index
    %546 = vector.load %arg1[%545, %c0_112, %c0_113] : memref<8x4x128xf32, #tpu.memory_space<vmem>>, vector<1x4x128xf32>
    %547 = vector.shape_cast %546 : vector<1x4x128xf32> to vector<4x128xf32>
    %548 = arith.truncf %498 : vector<4x32xf32> to vector<4x32xbf16>
    %cst_114 = arith.constant dense<0.000000e+00> : vector<4x128xf32>
    %549 = tpu.matmul %548, %0, %cst_114 {dimension_numbers = #tpu.dot_dimension_numbers<[1], [0], [0], [1], [0, 0, 1, 1], [], []>} : vector<4x32xbf16>, vector<32x128xbf16>, vector<4x128xf32> -> vector<4x128xf32>
    %550 = arith.addf %547, %549 : vector<4x128xf32>
    %551 = vector.extract_strided_slice %550 {offsets = [0, 0], sizes = [4, 32], strides = [1, 1]} : vector<4x128xf32> to vector<4x32xf32>
    %552 = arith.negf %551 : vector<4x32xf32>
    %553 = math.exp %552 : vector<4x32xf32>
    %cst_115 = arith.constant 1.000000e+00 : f32
    %554 = vector.broadcast %cst_115 : f32 to vector<4x32xf32>
    %555 = arith.addf %554, %553 : vector<4x32xf32>
    %556 = arith.divf %554, %555 : vector<4x32xf32>
    %557 = vector.extract_strided_slice %550 {offsets = [0, 32], sizes = [4, 32], strides = [1, 1]} : vector<4x128xf32> to vector<4x32xf32>
    %558 = arith.negf %557 : vector<4x32xf32>
    %559 = math.exp %558 : vector<4x32xf32>
    %cst_116 = arith.constant 1.000000e+00 : f32
    %560 = vector.broadcast %cst_116 : f32 to vector<4x32xf32>
    %561 = arith.addf %560, %559 : vector<4x32xf32>
    %562 = arith.divf %560, %561 : vector<4x32xf32>
    %563 = vector.extract_strided_slice %550 {offsets = [0, 64], sizes = [4, 32], strides = [1, 1]} : vector<4x128xf32> to vector<4x32xf32>
    %564 = math.tanh %563 : vector<4x32xf32>
    %565 = vector.extract_strided_slice %550 {offsets = [0, 96], sizes = [4, 32], strides = [1, 1]} : vector<4x128xf32> to vector<4x32xf32>
    %566 = arith.negf %565 : vector<4x32xf32>
    %567 = math.exp %566 : vector<4x32xf32>
    %cst_117 = arith.constant 1.000000e+00 : f32
    %568 = vector.broadcast %cst_117 : f32 to vector<4x32xf32>
    %569 = arith.addf %568, %567 : vector<4x32xf32>
    %570 = arith.divf %568, %569 : vector<4x32xf32>
    %571 = arith.mulf %562, %496 : vector<4x32xf32>
    %572 = arith.mulf %556, %564 : vector<4x32xf32>
    %573 = arith.addf %571, %572 : vector<4x32xf32>
    %574 = math.tanh %573 : vector<4x32xf32>
    %575 = arith.mulf %570, %574 : vector<4x32xf32>
    %576 = arith.index_cast %544 : i32 to index
    %c0_118 = arith.constant 0 : index
    %c0_119 = arith.constant 0 : index
    %577 = vector.load %arg2[%576, %c0_118, %c0_119] : memref<8x4x128xf32, #tpu.memory_space<vmem>>, vector<1x4x128xf32>
    %578 = vector.shape_cast %577 : vector<1x4x128xf32> to vector<4x128xf32>
    %579 = arith.truncf %529 : vector<4x32xf32> to vector<4x32xbf16>
    %cst_120 = arith.constant dense<0.000000e+00> : vector<4x128xf32>
    %580 = tpu.matmul %579, %1, %cst_120 {dimension_numbers = #tpu.dot_dimension_numbers<[1], [0], [0], [1], [0, 0, 1, 1], [], []>} : vector<4x32xbf16>, vector<32x128xbf16>, vector<4x128xf32> -> vector<4x128xf32>
    %581 = arith.addf %578, %580 : vector<4x128xf32>
    %582 = vector.extract_strided_slice %581 {offsets = [0, 0], sizes = [4, 32], strides = [1, 1]} : vector<4x128xf32> to vector<4x32xf32>
    %583 = arith.negf %582 : vector<4x32xf32>
    %584 = math.exp %583 : vector<4x32xf32>
    %cst_121 = arith.constant 1.000000e+00 : f32
    %585 = vector.broadcast %cst_121 : f32 to vector<4x32xf32>
    %586 = arith.addf %585, %584 : vector<4x32xf32>
    %587 = arith.divf %585, %586 : vector<4x32xf32>
    %588 = vector.extract_strided_slice %581 {offsets = [0, 32], sizes = [4, 32], strides = [1, 1]} : vector<4x128xf32> to vector<4x32xf32>
    %589 = arith.negf %588 : vector<4x32xf32>
    %590 = math.exp %589 : vector<4x32xf32>
    %cst_122 = arith.constant 1.000000e+00 : f32
    %591 = vector.broadcast %cst_122 : f32 to vector<4x32xf32>
    %592 = arith.addf %591, %590 : vector<4x32xf32>
    %593 = arith.divf %591, %592 : vector<4x32xf32>
    %594 = vector.extract_strided_slice %581 {offsets = [0, 64], sizes = [4, 32], strides = [1, 1]} : vector<4x128xf32> to vector<4x32xf32>
    %595 = math.tanh %594 : vector<4x32xf32>
    %596 = vector.extract_strided_slice %581 {offsets = [0, 96], sizes = [4, 32], strides = [1, 1]} : vector<4x128xf32> to vector<4x32xf32>
    %597 = arith.negf %596 : vector<4x32xf32>
    %598 = math.exp %597 : vector<4x32xf32>
    %cst_123 = arith.constant 1.000000e+00 : f32
    %599 = vector.broadcast %cst_123 : f32 to vector<4x32xf32>
    %600 = arith.addf %599, %598 : vector<4x32xf32>
    %601 = arith.divf %599, %600 : vector<4x32xf32>
    %602 = arith.mulf %593, %527 : vector<4x32xf32>
    %603 = arith.mulf %587, %595 : vector<4x32xf32>
    %604 = arith.addf %602, %603 : vector<4x32xf32>
    %605 = math.tanh %604 : vector<4x32xf32>
    %606 = arith.mulf %601, %605 : vector<4x32xf32>
    %607 = vector.broadcast %c7_i32_110 : i32 to vector<4x1xi32>
    %608 = arith.cmpi sgt, %2, %607 : vector<4x1xi32>
    %cst_124 = arith.constant -1.000000e+30 : f32
    %609 = vector.shape_cast %608 : vector<4x1xi1> to vector<4x1xi1>
    %610 = vector.broadcast %609 : vector<4x1xi1> to vector<4x32xi1>
    %611 = vector.broadcast %cst_124 : f32 to vector<4x32xf32>
    %612 = arith.select %610, %575, %611 : vector<4x32xi1>, vector<4x32xf32>
    %613 = arith.maximumf %536, %612 : vector<4x32xf32>
    %614 = vector.broadcast %544 : i32 to vector<4x1xi32>
    %615 = arith.cmpi sgt, %2, %614 : vector<4x1xi32>
    %cst_125 = arith.constant -1.000000e+30 : f32
    %616 = vector.shape_cast %615 : vector<4x1xi1> to vector<4x1xi1>
    %617 = vector.broadcast %616 : vector<4x1xi1> to vector<4x32xi1>
    %618 = vector.broadcast %cst_125 : f32 to vector<4x32xf32>
    %619 = arith.select %617, %606, %618 : vector<4x32xi1>, vector<4x32xf32>
    %620 = arith.maximumf %543, %619 : vector<4x32xf32>
    %c8_i32 = arith.constant 8 : i32
    %621 = tpu.concatenate %613, %620 in 1 : vector<4x32xf32>, vector<4x32xf32> -> vector<4x64xf32>
    %c0_126 = arith.constant 0 : index
    %c0_127 = arith.constant 0 : index
    %622 = vector.load %arg6[%c0_126, %c0_127] : memref<2x1xf32, #tpu.memory_space<vmem>>, vector<2x1xf32>
    %623 = vector.extract_strided_slice %621 {offsets = [0, 0], sizes = [2, 64], strides = [1, 1]} : vector<4x64xf32> to vector<2x64xf32>
    %624 = vector.broadcast %622 : vector<2x1xf32> to vector<2x64xf32>
    %625 = arith.mulf %623, %624 : vector<2x64xf32>
    %626 = vector.extract_strided_slice %621 {offsets = [2, 0], sizes = [2, 64], strides = [1, 1]} : vector<4x64xf32> to vector<2x64xf32>
    %627 = vector.broadcast %622 : vector<2x1xf32> to vector<2x64xf32>
    %628 = arith.mulf %626, %627 : vector<2x64xf32>
    %629 = arith.subf %625, %628 : vector<2x64xf32>
    %630 = math.absf %629 : vector<2x64xf32>
    %631 = arith.mulf %625, %628 : vector<2x64xf32>
    %632 = tpu.concatenate %625, %628, %630, %631 in 1 : vector<2x64xf32>, vector<2x64xf32>, vector<2x64xf32>, vector<2x64xf32> -> vector<2x256xf32>
    %633 = arith.truncf %632 : vector<2x256xf32> to vector<2x256xbf16>
    %c0_128 = arith.constant 0 : index
    %c0_129 = arith.constant 0 : index
    %634 = vector.load %arg7[%c0_128, %c0_129] : memref<256x32xbf16, #tpu.memory_space<vmem>>, vector<256x32xbf16>
    %cst_130 = arith.constant dense<0.000000e+00> : vector<2x32xf32>
    %635 = tpu.matmul %633, %634, %cst_130 {dimension_numbers = #tpu.dot_dimension_numbers<[1], [0], [0], [1], [0, 0, 1, 1], [], []>} : vector<2x256xbf16>, vector<256x32xbf16>, vector<2x32xf32> -> vector<2x32xf32>
    %c0_131 = arith.constant 0 : index
    %c0_132 = arith.constant 0 : index
    %636 = vector.load %arg8[%c0_131, %c0_132] : memref<1x32xf32, #tpu.memory_space<vmem>>, vector<1x32xf32>
    %637 = vector.broadcast %636 : vector<1x32xf32> to vector<2x32xf32>
    %638 = arith.addf %635, %637 : vector<2x32xf32>
    %cst_133 = arith.constant 0.000000e+00 : f32
    %639 = vector.broadcast %cst_133 : f32 to vector<2x32xf32>
    %640 = arith.maximumf %638, %639 : vector<2x32xf32>
    %641 = arith.truncf %640 : vector<2x32xf32> to vector<2x32xbf16>
    %c0_134 = arith.constant 0 : index
    %c0_135 = arith.constant 0 : index
    %642 = vector.load %arg9[%c0_134, %c0_135] : memref<32x3xbf16, #tpu.memory_space<vmem>>, vector<32x3xbf16>
    %cst_136 = arith.constant dense<0.000000e+00> : vector<2x3xf32>
    %643 = tpu.matmul %641, %642, %cst_136 {dimension_numbers = #tpu.dot_dimension_numbers<[1], [0], [0], [1], [0, 0, 1, 1], [], []>} : vector<2x32xbf16>, vector<32x3xbf16>, vector<2x3xf32> -> vector<2x3xf32>
    %c0_137 = arith.constant 0 : index
    %c0_138 = arith.constant 0 : index
    %644 = vector.load %arg10[%c0_137, %c0_138] : memref<1x3xf32, #tpu.memory_space<vmem>>, vector<1x3xf32>
    %645 = vector.broadcast %644 : vector<1x3xf32> to vector<2x3xf32>
    %646 = arith.addf %643, %645 : vector<2x3xf32>
    %c0_139 = arith.constant 0 : index
    %c0_140 = arith.constant 0 : index
    %647 = vector.load %arg11[%c0_139, %c0_140] : memref<2x3xf32, #tpu.memory_space<vmem>>, vector<2x3xf32>
    tpu.vector_store %arg11[%c0_139, %c0_140], %646 {strides = array<i32>} : memref<2x3xf32, #tpu.memory_space<vmem>>, vector<2x3xf32>,
    return
  }
  func.func @transform_0(%arg0: i32) -> (i32, i32, i32) {
    %c0_i32 = arith.constant 0 : i32
    %c0_i32_0 = arith.constant 0 : i32
    %c0_i32_1 = arith.constant 0 : i32
    %c0_i32_2 = arith.constant 0 : i32
    return %c0_i32, %c0_i32_0, %c0_i32_1 : i32, i32, i32
  }
  func.func @transform_1(%arg0: i32) -> (i32, i32, i32) {
    %c0_i32 = arith.constant 0 : i32
    %c0_i32_0 = arith.constant 0 : i32
    %c0_i32_1 = arith.constant 0 : i32
    %c0_i32_2 = arith.constant 0 : i32
    return %c0_i32, %c0_i32_0, %c0_i32_1 : i32, i32, i32
  }
  func.func @transform_2(%arg0: i32) -> (i32, i32) {
    %c0_i32 = arith.constant 0 : i32
    %c0_i32_0 = arith.constant 0 : i32
    %c0_i32_1 = arith.constant 0 : i32
    return %c0_i32, %c0_i32_0 : i32, i32
  }
  func.func @transform_3(%arg0: i32) -> (i32, i32) {
    %c0_i32 = arith.constant 0 : i32
    %c0_i32_0 = arith.constant 0 : i32
    %c0_i32_1 = arith.constant 0 : i32
    return %c0_i32, %c0_i32_0 : i32, i32
  }
  func.func @transform_4(%arg0: i32) -> (i32, i32) {
    %c0_i32 = arith.constant 0 : i32
    %c0_i32_0 = arith.constant 0 : i32
    %c0_i32_1 = arith.constant 0 : i32
    return %c0_i32, %c0_i32_0 : i32, i32
  }
  func.func @transform_5(%arg0: i32) -> (i32, i32) {
    %c0_i32 = arith.constant 0 : i32
    %c0_i32_0 = arith.constant 0 : i32
    %c0_i32_1 = arith.constant 0 : i32
    return %c0_i32, %c0_i32_0 : i32, i32
  }
  func.func @transform_6(%arg0: i32) -> (i32, i32) {
    %c0_i32 = arith.constant 0 : i32
    %c0_i32_0 = arith.constant 0 : i32
    %c0_i32_1 = arith.constant 0 : i32
    return %c0_i32, %c0_i32_0 : i32, i32
  }
  func.func @transform_7(%arg0: i32) -> (i32, i32) {
    %c0_i32 = arith.constant 0 : i32
    %c0_i32_0 = arith.constant 0 : i32
    %c0_i32_1 = arith.constant 0 : i32
    return %c0_i32, %c0_i32_0 : i32, i32
  }
  func.func @transform_8(%arg0: i32) -> (i32, i32) {
    %c0_i32 = arith.constant 0 : i32
    %c0_i32_0 = arith.constant 0 : i32
    %c0_i32_1 = arith.constant 0 : i32
    return %c0_i32, %c0_i32_0 : i32, i32
  }
  func.func @transform_9(%arg0: i32) -> (i32, i32) {
    %c0_i32 = arith.constant 0 : i32
    %c0_i32_0 = arith.constant 0 : i32
    %c0_i32_1 = arith.constant 0 : i32
    return %c0_i32, %c0_i32_0 : i32, i32
  }
  func.func @transform_10(%arg0: i32) -> (i32, i32) {
    %c0_i32 = arith.constant 0 : i32
    %c0_i32_0 = arith.constant 0 : i32
    %c0_i32_1 = arith.constant 0 : i32
    return %c0_i32, %c0_i32_0 : i32, i32
  }
}

</mosaic_0001>

<llo_original>
// kernel: esim_forward.4
$region0: #{esim_forward.4}
  #allocation0 [shape = 'u32[]', space=smem, size = 0x4, offset = 0x4, fixed_abs, tag = 'smem constant byte address 0x4 - core index']
  #allocation1 [shape = 'u32[144,128]{1,0:T(1,128)}', space=vmem, size = 0x12000, scoped, tag = 'internal scratch']
  %s0 = inlined_call_operand.vmem [shape: f32[4,8,64], index: 0, kind: input, shape index: {}, may-alias: {0,1}]
  %s1 = inlined_call_operand.vmem [shape: f32[4,8,64], index: 1, kind: input, shape index: {}, may-alias: {0,1}]
  %s2 = inlined_call_operand.vmem [shape: s32[2], index: 2, kind: input, shape index: {}]
  %s3 = inlined_call_operand.vmem [shape: s32[2], index: 3, kind: input, shape index: {}]
  %s4 = inlined_call_operand.vmem [shape: bf16[192,32], index: 4, kind: input, shape index: {}]
  %s5 = inlined_call_operand.vmem [shape: f32[1,32], index: 5, kind: input, shape index: {}]
  %s6 = inlined_call_operand.vmem [shape: f32[2,8,32], index: 6, kind: output, shape index: {0}]
  %s7 = inlined_call_operand.vmem [shape: f32[2,8,32], index: 7, kind: output, shape index: {1}]
  %8 = xla_tuple %s6, %s7
  %s9 = sld [smem:[#allocation0]]
  $region73: #{esim_forward.4} parent=0
    _
  %s11 = ssub.s32 1, %s9
  %s12 = scalar_select 0, %s11, %s9
  $region1: #{esim_forward.4} parent=0
    #allocation2 [shape = 'u8[512]{0}', space=smem, size = 0x200, scoped, tag = 'input window, operand 2, single buffered']
    #allocation3 [shape = 's32[2]{0}', space=sflag, size = 0x8, scoped, tag = 'scoped memory for esim_forward.4']
    #allocation4 [shape = 'u8[512]{0}', space=smem, size = 0x200, scoped, tag = 'input window, operand 3, single buffered']
    #allocation5 [shape = 's32[1]{0}', space=sflag, size = 0x4, scoped, tag = 'scoped memory for esim_forward.4']
    %13 = vsyncpa [#allocation3], 0
    %14 = vsyncpa [#allocation5], 0
    loop: start=0, step=1, limit=4
    $region2: #{esim_forward.4} parent=1 // loop_pre_header
      _
    $region3: #{esim_forward.4} parent=1 // loop_header
      %s16 = sphi 0, %s20
      %p17 = scmp.ge.s32.totalorder %s16, 4
      %s26 = sphi 0, %s28
      %s29 = sphi 0, %s26
      %s30 = sphi 0, %s29
      %s46 = sphi 0, %s30
      %s54 = sphi 0, %s56
      %s57 = sphi 0, %s54
      %s58 = sphi 0, %s57
      %s74 = sphi 0, %s58
      %s78 = sphi 0, %s78
      %s80 = sphi 0, %s78
      %s81 = sphi 0, %s80
      %s95 = sphi 0, %s81
      %s99 = sphi 0, %s99
      %s101 = sphi 0, %s99
      %s102 = sphi 0, %s101
      %s116 = sphi 0, %s102
      %s120 = sphi 0, %s120
      %s122 = sphi 0, %s120
      %s123 = sphi 0, %s122
      %s137 = sphi 0, %s123
      %s141 = sphi 0, %s141
      %s143 = sphi 0, %s141
      %s144 = sphi 0, %s143
      %s158 = sphi 0, %s144
      %s164 = sphi 0, %s166
      %s167 = sphi 0, %s164
      %s168 = sphi 0, %s167
      %s184 = sphi 0, %s168
      %s190 = sphi 0, %s192
      %s193 = sphi 0, %s190
      %s194 = sphi 0, %s193
      %s210 = sphi 0, %s194
    $region4: #{esim_forward.4} parent=1 // loop_header_branch
      %19 = sbr.rel (%p17) target = $region8
    $region5: #{esim_forward.4} parent=1 // loop_body
      %s21 = ssub.s32 %s16, 1
      %s22 = ssub.s32 %s16, 2
      %s23 = sadd.s32 %s16, 1
      %s24 = ssub.s32 %s16, %s23
      %p25 = scmp.eq.s32.totalorder %s24, 0
      %s27 = sadd.s32 %s26, 1
      %s28 = scalar_select %p25, %s26, %s27
      %p31 = pneg %p25
      %p32 = scmp.eq.s32.totalorder %s16, 1
      %p33 = por %p31, %p32
      %p34 = scmp.ne.s32.totalorder %s26, %s29
      %p35 = scmp.eq.s32.totalorder %s16, 0
      %p36 = por %p34, %p35
      %p37 = scmp.ne.s32.totalorder %s26, %s29
      %p38 = scmp.eq.s32.totalorder %s21, 1
      %p39 = por %p37, %p38
      %p40 = scmp.ne.s32.totalorder %s29, %s30
      %p41 = scmp.eq.s32.totalorder %s21, 0
      %p42 = por %p40, %p41
      %p43 = scmp.ne.s32.totalorder %s29, %s30
      %p44 = scmp.eq.s32.totalorder %s22, 1
      %p45 = por %p43, %p44
      %p47 = scmp.ne.s32.totalorder %s30, %s46
      %p48 = scmp.eq.s32.totalorder %s22, 0
      %p49 = por %p47, %p48
      %s50 = sadd.s32 %s16, 2
      %s51 = sadd.s32 %s23, 2
      %s52 = ssub.s32 %s50, %s51
      %p53 = scmp.eq.s32.totalorder %s52, 0
      %s55 = sadd.s32 %s54, 1
      %s56 = scalar_select %p53, %s54, %s55
      %p59 = pneg %p53
      %p60 = scmp.eq.s32.totalorder %s16, 1
      %p61 = por %p59, %p60
      %p62 = scmp.ne.s32.totalorder %s54, %s57
      %p63 = scmp.eq.s32.totalorder %s16, 0
      %p64 = por %p62, %p63
      %p65 = scmp.ne.s32.totalorder %s54, %s57
      %p66 = scmp.eq.s32.totalorder %s21, 1
      %p67 = por %p65, %p66
      %p68 = scmp.ne.s32.totalorder %s57, %s58
      %p69 = scmp.eq.s32.totalorder %s21, 0
      %p70 = por %p68, %p69
      %p71 = scmp.ne.s32.totalorder %s57, %s58
      %p72 = scmp.eq.s32.totalorder %s22, 1
      %p73 = por %p71, %p72
      %p75 = scmp.ne.s32.totalorder %s58, %s74
      %p76 = scmp.eq.s32.totalorder %s22, 0
      %p77 = por %p75, %p76
      %s79 = sadd.s32 %s78, 1
      %p82 = scmp.eq.s32.totalorder %s16, 1
      %p83 = scmp.ne.s32.totalorder %s78, %s80
      %p84 = scmp.eq.s32.totalorder %s16, 0
      %p85 = por %p83, %p84
      %p86 = scmp.ne.s32.totalorder %s78, %s80
      %p87 = scmp.eq.s32.totalorder %s21, 1
      %p88 = por %p86, %p87
      %p89 = scmp.ne.s32.totalorder %s80, %s81
      %p90 = scmp.eq.s32.totalorder %s21, 0
      %p91 = por %p89, %p90
      %p92 = scmp.ne.s32.totalorder %s80, %s81
      %p93 = scmp.eq.s32.totalorder %s22, 1
      %p94 = por %p92, %p93
      %p96 = scmp.ne.s32.totalorder %s81, %s95
      %p97 = scmp.eq.s32.totalorder %s22, 0
      %p98 = por %p96, %p97
      %s100 = sadd.s32 %s99, 1
      %p103 = scmp.eq.s32.totalorder %s16, 1
      %p104 = scmp.ne.s32.totalorder %s99, %s101
      %p105 = scmp.eq.s32.totalorder %s16, 0
      %p106 = por %p104, %p105
      %p107 = scmp.ne.s32.totalorder %s99, %s101
      %p108 = scmp.eq.s32.totalorder %s21, 1
      %p109 = por %p107, %p108
      %p110 = scmp.ne.s32.totalorder %s101, %s102
      %p111 = scmp.eq.s32.totalorder %s21, 0
      %p112 = por %p110, %p111
      %p113 = scmp.ne.s32.totalorder %s101, %s102
      %p114 = scmp.eq.s32.totalorder %s22, 1
      %p115 = por %p113, %p114
      %p117 = scmp.ne.s32.totalorder %s102, %s116
      %p118 = scmp.eq.s32.totalorder %s22, 0
      %p119 = por %p117, %p118
      %s121 = sadd.s32 %s120, 1
      %p124 = scmp.eq.s32.totalorder %s16, 1
      %p125 = scmp.ne.s32.totalorder %s120, %s122
      %p126 = scmp.eq.s32.totalorder %s16, 0
      %p127 = por %p125, %p126
      %p128 = scmp.ne.s32.totalorder %s120, %s122
      %p129 = scmp.eq.s32.totalorder %s21, 1
      %p130 = por %p128, %p129
      %p131 = scmp.ne.s32.totalorder %s122, %s123
      %p132 = scmp.eq.s32.totalorder %s21, 0
      %p133 = por %p131, %p132
      %p134 = scmp.ne.s32.totalorder %s122, %s123
      %p135 = scmp.eq.s32.totalorder %s22, 1
      %p136 = por %p134, %p135
      %p138 = scmp.ne.s32.totalorder %s123, %s137
      %p139 = scmp.eq.s32.totalorder %s22, 0
      %p140 = por %p138, %p139
      %s142 = sadd.s32 %s141, 1
      %p145 = scmp.eq.s32.totalorder %s16, 1
      %p146 = scmp.ne.s32.totalorder %s141, %s143
      %p147 = scmp.eq.s32.totalorder %s16, 0
      %p148 = por %p146, %p147
      %p149 = scmp.ne.s32.totalorder %s141, %s143
      %p150 = scmp.eq.s32.totalorder %s21, 1
      %p151 = por %p149, %p150
      %p152 = scmp.ne.s32.totalorder %s143, %s144
      %p153 = scmp.eq.s32.totalorder %s21, 0
      %p154 = por %p152, %p153
      %p155 = scmp.ne.s32.totalorder %s143, %s144
      %p156 = scmp.eq.s32.totalorder %s22, 1
      %p157 = por %p155, %p156
      %p159 = scmp.ne.s32.totalorder %s144, %s158
      %p160 = scmp.eq.s32.totalorder %s22, 0
      %p161 = por %p159, %p160
      %s162 = ssub.s32 %s16, %s23
      %p163 = scmp.eq.s32.totalorder %s162, 0
      %s165 = sadd.s32 %s164, 1
      %s166 = scalar_select %p163, %s164, %s165
      %p169 = pneg %p163
      %p170 = scmp.eq.s32.totalorder %s16, 1
      %p171 = por %p169, %p170
      %p172 = scmp.ne.s32.totalorder %s164, %s167
      %p173 = scmp.eq.s32.totalorder %s16, 0
      %p174 = por %p172, %p173
      %p175 = scmp.ne.s32.totalorder %s164, %s167
      %p176 = scmp.eq.s32.totalorder %s21, 1
      %p177 = por %p175, %p176
      %p178 = scmp.ne.s32.totalorder %s167, %s168
      %p179 = scmp.eq.s32.totalorder %s21, 0
      %p180 = por %p178, %p179
      %p181 = scmp.ne.s32.totalorder %s167, %s168
      %p182 = scmp.eq.s32.totalorder %s22, 1
      %p183 = por %p181, %p182
      %p185 = scmp.ne.s32.totalorder %s168, %s184
      %p186 = scmp.eq.s32.totalorder %s22, 0
      %p187 = por %p185, %p186
      %s188 = ssub.s32 %s16, %s23
      %p189 = scmp.eq.s32.totalorder %s188, 0
      %s191 = sadd.s32 %s190, 1
      %s192 = scalar_select %p189, %s190, %s191
      %p195 = pneg %p189
      %p196 = scmp.eq.s32.totalorder %s16, 1
      %p197 = por %p195, %p196
      %p198 = scmp.ne.s32.totalorder %s190, %s193
      %p199 = scmp.eq.s32.totalorder %s16, 0
      %p200 = por %p198, %p199
      %p201 = scmp.ne.s32.totalorder %s190, %s193
      %p202 = scmp.eq.s32.totalorder %s21, 1
      %p203 = por %p201, %p202
      %p204 = scmp.ne.s32.totalorder %s193, %s194
      %p205 = scmp.eq.s32.totalorder %s21, 0
      %p206 = por %p204, %p205
      %p207 = scmp.ne.s32.totalorder %s193, %s194
      %p208 = scmp.eq.s32.totalorder %s22, 1
      %p209 = por %p207, %p208
      %p211 = scmp.ne.s32.totalorder %s194, %s210
      %p212 = scmp.eq.s32.totalorder %s22, 0
      %p213 = por %p211, %p212
      %p214 = scmp.le.s32.totalorder 1, %s16
      %p215 = scmp.lt.s32.totalorder %s16, 3
      %p216 = pnand %p214, %p215
      %p217 = pneg %p216
      // Predicated region
      $region9: #{esim_forward.4} parent=5 // pred_check
        _
      $region10: #{esim_forward.4} parent=5 // pred_check_branch
        %219 = sbr.rel (%p216) target = $region12
      $region11: #{esim_forward.4} parent=5 // pred_region
        %s220 = ssub.s32 %s16, 1
        // Predicated region
        $region13: #{esim_forward.4} parent=11 // pred_check
          %p221 = pneg %p91
        $region14: #{esim_forward.4} parent=11 // pred_check_branch
          %223 = sbr.rel (%p221) target = $region16
        $region15: #{esim_forward.4} parent=11 // pred_region
          %s225 = ssub.s32 16, 16
          %226 = vsyncadd [#allocation3], %s225
          %s228 = sshll.u32 %s2, 4
          %s229 = int_to_ptr.vmem [resolvable:$true] %s228
          %231 = dma.vmem_to_smem %s229, 16, [#allocation2], [#allocation3]
        $region16: #{esim_forward.4} parent=11 // pred_fallthru
          _
        // Predicated region
        $region17: #{esim_forward.4} parent=11 // pred_check
          %p232 = pneg %p112
        $region18: #{esim_forward.4} parent=11 // pred_check_branch
          %234 = sbr.rel (%p232) target = $region20
        $region19: #{esim_forward.4} parent=11 // pred_region
          %s236 = ssub.s32 16, 16
          %237 = vsyncadd [#allocation5], %s236
          %s239 = sshll.u32 %s3, 4
          %s240 = int_to_ptr.vmem [resolvable:$true] %s239
          %242 = dma.vmem_to_smem %s240, 16, [#allocation4], [#allocation5]
        $region20: #{esim_forward.4} parent=11 // pred_fallthru
          _
        // Predicated region
        $region21: #{esim_forward.4} parent=11 // pred_check
          %p243 = pneg %p133
        $region22: #{esim_forward.4} parent=11 // pred_check_branch
          %245 = sbr.rel (%p243) target = $region24
        $region23: #{esim_forward.4} parent=11 // pred_region
          _
        $region24: #{esim_forward.4} parent=11 // pred_fallthru
          _
        // Predicated region
        $region25: #{esim_forward.4} parent=11 // pred_check
          %p246 = pneg %p154
        $region26: #{esim_forward.4} parent=11 // pred_check_branch
          %248 = sbr.rel (%p246) target = $region28
        $region27: #{esim_forward.4} parent=11 // pred_region
          _
        $region28: #{esim_forward.4} parent=11 // pred_fallthru
          _
      $region12: #{esim_forward.4} parent=5 // pred_fallthru
        _
      %p249 = scmp.lt.s32.totalorder %s16, 2
      // Predicated region
      $region29: #{esim_forward.4} parent=5 // pred_check
        %p250 = pneg %p249
      $region30: #{esim_forward.4} parent=5 // pred_check_branch
        %252 = sbr.rel (%p250) target = $region32
      $region31: #{esim_forward.4} parent=5 // pred_region
        // Predicated region
        $region33: #{esim_forward.4} parent=31 // pred_check
          %p253 = pneg %p36
        $region34: #{esim_forward.4} parent=31 // pred_check_branch
          %255 = sbr.rel (%p253) target = $region36
        $region35: #{esim_forward.4} parent=31 // pred_region
          %p256 = scmp.lt.s32.totalorder %s16, 3
          %s257 = scalar_select %p256, %s16, 3
          %s258 = smul.addr %s257, 8
          %s259 = scalar_lea.vmem %s0, %s258
        $region36: #{esim_forward.4} parent=31 // pred_fallthru
          _
        // Predicated region
        $region37: #{esim_forward.4} parent=31 // pred_check
          %p260 = pneg %p64
        $region38: #{esim_forward.4} parent=31 // pred_check_branch
          %262 = sbr.rel (%p260) target = $region40
        $region39: #{esim_forward.4} parent=31 // pred_region
          %s263 = sadd.s32 %s16, 2
          %p264 = scmp.lt.s32.totalorder %s263, 3
          %s265 = scalar_select %p264, %s263, 3
          %s266 = smul.addr %s265, 8
          %s267 = scalar_lea.vmem %s1, %s266
          %s268 = sadd.s32 %s16, 2
        $region40: #{esim_forward.4} parent=31 // pred_fallthru
          _
      $region32: #{esim_forward.4} parent=5 // pred_fallthru
        _
      %p269 = scmp.le.s32.totalorder 1, %s16
      %p270 = scmp.lt.s32.totalorder %s16, 3
      %p271 = pnand %p269, %p270
      %p272 = pneg %p271
      // Predicated region
      $region41: #{esim_forward.4} parent=5 // pred_check
        _
      $region42: #{esim_forward.4} parent=5 // pred_check_branch
        %274 = sbr.rel (%p271) target = $region44
      $region43: #{esim_forward.4} parent=5 // pred_region
        %s275 = ssub.s32 %s16, 1
        // Predicated region
        $region45: #{esim_forward.4} parent=43 // pred_check
          %p276 = pneg %p91
        $region46: #{esim_forward.4} parent=43 // pred_check_branch
          %278 = sbr.rel (%p276) target = $region48
        $region47: #{esim_forward.4} parent=43 // pred_region
          %279 = dma.done [#allocation3], 16
        $region48: #{esim_forward.4} parent=43 // pred_fallthru
          _
        // Predicated region
        $region49: #{esim_forward.4} parent=43 // pred_check
          %p280 = pneg %p112
        $region50: #{esim_forward.4} parent=43 // pred_check_branch
          %282 = sbr.rel (%p280) target = $region52
        $region51: #{esim_forward.4} parent=43 // pred_region
          %283 = dma.done [#allocation5], 16
        $region52: #{esim_forward.4} parent=43 // pred_fallthru
          _
        %284 = sfence
        %p285 = scmp.lt.s32.totalorder %s21, 3
        %s286 = scalar_select %p285, %s21, 3
        %s287 = smul.addr %s286, 8
        %s288 = scalar_lea.vmem %s0, %s287
        %p289 = pneg %p42
        %p290 = pneg %p39
        %s291 = sadd.s32 %s21, 2
        %p292 = scmp.lt.s32.totalorder %s291, 3
        %s293 = scalar_select %p292, %s291, 3
        %s294 = smul.addr %s293, 8
        %s295 = scalar_lea.vmem %s1, %s294
        %p296 = pneg %p70
        %p297 = pneg %p67
        %p298 = pneg %p91
        %p299 = pneg %p88
        %p300 = pneg %p112
        %p301 = pneg %p109
        %p302 = pneg %p133
        %p303 = pneg %p130
        %p304 = pneg %p154
        %p305 = pneg %p151
        %p306 = pneg %p180
        %p307 = pneg %p177
        %p308 = scmp.lt.s32.totalorder %s21, 1
        %s309 = scalar_select %p308, %s21, 1
        %s310 = smul.addr %s309, 8
        %s311 = scalar_lea.vmem %s6, %s310
        %p312 = pneg %p206
        %p313 = pneg %p203
        %p314 = scmp.lt.s32.totalorder %s21, 1
        %s315 = scalar_select %p314, %s21, 1
        %s316 = smul.addr %s315, 8
        %s317 = scalar_lea.vmem %s7, %s316
        %p318 = scmp.lt.s32.totalorder %s21, 3
        %s319 = scalar_select %p318, %s21, 3
        %s320 = smul.addr %s319, 8
        %s321 = scalar_lea.vmem %s0, %s320
        %s322 = sadd.s32 %s21, 2
        %p323 = scmp.lt.s32.totalorder %s322, 3
        %s324 = scalar_select %p323, %s322, 3
        %s325 = smul.addr %s324, 8
        %s326 = scalar_lea.vmem %s1, %s325
        %s327 = sadd.s32 %s21, 2
        %p328 = scmp.lt.s32.totalorder %s21, 1
        %s329 = scalar_select %p328, %s21, 1
        %s330 = smul.addr %s329, 8
        %s331 = scalar_lea.vmem %s6, %s330
        %p332 = scmp.lt.s32.totalorder %s21, 1
        %s333 = scalar_select %p332, %s21, 1
        %s334 = smul.addr %s333, 8
        %s335 = scalar_lea.vmem %s7, %s334
        %v337 = vld [vmem:[%s321] sm:$0xff]
        %v338 = vld [vmem:[%s326] sm:$0xff]
        %s339 = sld [smem:[#allocation2 + %s21]]
        %s340 = sld [smem:[#allocation4 + %s21]]
        %v341 = vpack.c.bf16 %v337, %v337
        %v342 = vpack.c.bf16 %v338, %v338
        %vm343 = vcmask 523264
        %v345 = vsel %vm343, %v341, 0
        %v348 = vsel %vm343, %v342, 0
        %350 = vmatprep.subr.bf16.mxu0 0
        %351 = vmatpush1.bf16.xpose.msra.mxu0 %v348
        %352 = vmatprep.subr.bf16.mxu0 0
        %353 = vmatpush1.bf16.xpose.msra.mxu0 0
        %354 = vmatprep.subr.bf16.mxu0 0
        %355 = vmatpush1.bf16.xpose.msra.mxu0 0
        %356 = vmatprep.subr.bf16.mxu0 0
        %357 = vmatpush1.bf16.xpose.msra.mxu0 0
        %358 = vmatprep.subr.bf16.mxu0 0
        %359 = vmatpush1.bf16.xpose.msra.mxu0 0
        %360 = vmatprep.subr.bf16.mxu0 0
        %361 = vmatpush1.bf16.xpose.msra.mxu0 0
        %362 = vmatprep.subr.bf16.mxu0 0
        %363 = vmatpush1.bf16.xpose.msra.mxu0 0
        %364 = vmatprep.subr.bf16.mxu0 0
        %365 = vmatpush1.bf16.xpose.msra.mxu0 0
        %366 = vmatprep.subr.bf16.mxu0 0
        %367 = vmatpush1.bf16.xpose.msra.mxu0 0
        %368 = vmatprep.subr.bf16.mxu0 0
        %369 = vmatpush1.bf16.xpose.msra.mxu0 0
        %370 = vmatprep.subr.bf16.mxu0 0
        %371 = vmatpush1.bf16.xpose.msra.mxu0 0
        %372 = vmatprep.subr.bf16.mxu0 0
        %373 = vmatpush1.bf16.xpose.msra.mxu0 0
        %374 = vmatprep.subr.bf16.mxu0 0
        %375 = vmatpush1.bf16.xpose.msra.mxu0 0
        %376 = vmatprep.subr.bf16.mxu0 0
        %377 = vmatpush1.bf16.xpose.msra.mxu0 0
        %378 = vmatprep.subr.bf16.mxu0 0
        %379 = vmatpush1.bf16.xpose.msra.mxu0 0
        %380 = vmatprep.subr.bf16.mxu0 0
        %381 = vmatpush1.bf16.xpose.msra.mxu0 0
        %382 = vmatprep.mubr.bf16.mxu0 0
        %383 = vmatmul.mubr.bf16.gmra.mrb[0].mxu0 %v345
        %v384 = vpop.f32.mrb[0].mxu0
        %v385 = vadd.f32 0.0, %v384
        %v386 = vpop.f32.mrb[0].mxu0
        %v387 = vpop.f32.mrb[0].mxu0
        %v388 = vpop.f32.mrb[0].mxu0
        %389 = vdwg.mxu0
        %390 = vmatprep.subr.bf16.mxu0 0
        %391 = vmatpush1.bf16.xpose.msra.mxu0 %v345
        %392 = vmatprep.subr.bf16.mxu0 0
        %393 = vmatpush1.bf16.xpose.msra.mxu0 0
        %394 = vmatprep.subr.bf16.mxu0 0
        %395 = vmatpush1.bf16.xpose.msra.mxu0 0
        %396 = vmatprep.subr.bf16.mxu0 0
        %397 = vmatpush1.bf16.xpose.msra.mxu0 0
        %398 = vmatprep.subr.bf16.mxu0 0
        %399 = vmatpush1.bf16.xpose.msra.mxu0 0
        %400 = vmatprep.subr.bf16.mxu0 0
        %401 = vmatpush1.bf16.xpose.msra.mxu0 0
        %402 = vmatprep.subr.bf16.mxu0 0
        %403 = vmatpush1.bf16.xpose.msra.mxu0 0
        %404 = vmatprep.subr.bf16.mxu0 0
        %405 = vmatpush1.bf16.xpose.msra.mxu0 0
        %406 = vmatprep.subr.bf16.mxu0 0
        %407 = vmatpush1.bf16.xpose.msra.mxu0 0
        %408 = vmatprep.subr.bf16.mxu0 0
        %409 = vmatpush1.bf16.xpose.msra.mxu0 0
        %410 = vmatprep.subr.bf16.mxu0 0
        %411 = vmatpush1.bf16.xpose.msra.mxu0 0
        %412 = vmatprep.subr.bf16.mxu0 0
        %413 = vmatpush1.bf16.xpose.msra.mxu0 0
        %414 = vmatprep.subr.bf16.mxu0 0
        %415 = vmatpush1.bf16.xpose.msra.mxu0 0
        %416 = vmatprep.subr.bf16.mxu0 0
        %417 = vmatpush1.bf16.xpose.msra.mxu0 0
        %418 = vmatprep.subr.bf16.mxu0 0
        %419 = vmatpush1.bf16.xpose.msra.mxu0 0
        %420 = vmatprep.subr.bf16.mxu0 0
        %421 = vmatpush1.bf16.xpose.msra.mxu0 0
        %422 = vmatprep.mubr.bf16.mxu0 0
        %423 = vmatmul.mubr.bf16.gmra.mrb[0].mxu0 %v348
        %v424 = vpop.f32.mrb[0].mxu0
        %v425 = vadd.f32 0.0, %v424
        %v426 = vpop.f32.mrb[0].mxu0
        %v427 = vpop.f32.mrb[0].mxu0
        %v428 = vpop.f32.mrb[0].mxu0
        %429 = vdwg.mxu0
        %v430 = vlaneseq
        %v431 = vshrl.u32 %v430, 7
        %v432 = vlaneseq
        %v433 = vand.u32 %v432, 127
        %v434 = vstv %s339
        %vm435 = vcmp.lt.s32.totalorder %v431, %v434
        %v436 = vstv %s340
        %vm437 = vcmp.lt.s32.totalorder %v433, %v436
        %vm438 = vmand %vm435, %vm437
        %vm439 = vcmp.lt.s32.totalorder %v431, %v436
        %vm440 = vcmp.lt.s32.totalorder %v433, %v434
        %vm441 = vmand %vm439, %vm440
        %v442 = vsel %vm438, %v385, -1e+30
        %vm443 = vcmask 64512
        %v444 = vsel %vm443, %v442, -inf
        %445 = vmax.xlane.f32.xlu0 %v444
        %v446 = vpop.xlane.xlu0 %445
        %v447 = vsub.f32 %v442, %v446
        %v448 = vmul.f32 %v447, 1.442695
        %v449 = vpow.pop %v448
        %v450 = vsel %vm438, 1, 0
        %v451 = vcvt.s32.f32 %v450
        %v452 = vmul.f32 %v449, %v451
        %v453 = vsel %vm443, %v452, 0.0
        %454 = vadd.xlane.f32.xlu0 %v453
        %v455 = vpop.xlane.xlu0 %454
        %v456 = vmax.f32 %v455, 1e-30
        %v457 = vrcp.pop %v456
        %v458 = vmul.f32 %v452, %v457
        %v459 = vsel %vm441, %v425, -1e+30
        %v460 = vsel %vm443, %v459, -inf
        %461 = vmax.xlane.f32.xlu0 %v460
        %v462 = vpop.xlane.xlu0 %461
        %v463 = vsub.f32 %v459, %v462
        %v464 = vmul.f32 %v463, 1.442695
        %v465 = vpow.pop %v464
        %v466 = vsel %vm441, 1, 0
        %v467 = vcvt.s32.f32 %v466
        %v468 = vmul.f32 %v465, %v467
        %v469 = vsel %vm443, %v468, 0.0
        %470 = vadd.xlane.f32.xlu0 %v469
        %v471 = vpop.xlane.xlu0 %470
        %v472 = vmax.f32 %v471, 1e-30
        %v473 = vrcp.pop %v472
        %v474 = vmul.f32 %v468, %v473
        %v475 = vpack.c.bf16 %v458, %v458
        %v477 = vsel %vm443, %v475, 0
        %vm479 = vcmask 1043456
        %v480 = vsel %vm479, %v342, 0
        %482 = vmatprep.subr.bf16.mxu0 0
        %483 = vmatpush1.bf16.msra.mxu0 %v480
        %484 = vmatprep.subr.bf16.mxu0 0
        %485 = vmatpush1.bf16.msra.mxu0 0
        %486 = vmatprep.subr.bf16.mxu0 0
        %487 = vmatpush1.bf16.msra.mxu0 0
        %488 = vmatprep.subr.bf16.mxu0 0
        %489 = vmatpush1.bf16.msra.mxu0 0
        %490 = vmatprep.subr.bf16.mxu0 0
        %491 = vmatpush1.bf16.msra.mxu0 0
        %492 = vmatprep.subr.bf16.mxu0 0
        %493 = vmatpush1.bf16.msra.mxu0 0
        %494 = vmatprep.subr.bf16.mxu0 0
        %495 = vmatpush1.bf16.msra.mxu0 0
        %496 = vmatprep.subr.bf16.mxu0 0
        %497 = vmatpush1.bf16.msra.mxu0 0
        %498 = vmatprep.subr.bf16.mxu0 0
        %499 = vmatpush1.bf16.msra.mxu0 0
        %500 = vmatprep.subr.bf16.mxu0 0
        %501 = vmatpush1.bf16.msra.mxu0 0
        %502 = vmatprep.subr.bf16.mxu0 0
        %503 = vmatpush1.bf16.msra.mxu0 0
        %504 = vmatprep.subr.bf16.mxu0 0
        %505 = vmatpush1.bf16.msra.mxu0 0
        %506 = vmatprep.subr.bf16.mxu0 0
        %507 = vmatpush1.bf16.msra.mxu0 0
        %508 = vmatprep.subr.bf16.mxu0 0
        %509 = vmatpush1.bf16.msra.mxu0 0
        %510 = vmatprep.subr.bf16.mxu0 0
        %511 = vmatpush1.bf16.msra.mxu0 0
        %512 = vmatprep.subr.bf16.mxu0 0
        %513 = vmatpush1.bf16.msra.mxu0 0
        %514 = vmatprep.mubr.bf16.mxu0 0
        %515 = vmatmul.mubr.bf16.gmra.mrb[0].mxu0 %v477
        %v516 = vpop.f32.mrb[0].mxu0
        %v517 = vadd.f32 0.0, %v516
        %v518 = vpop.f32.mrb[0].mxu0
        %v519 = vpop.f32.mrb[0].mxu0
        %v520 = vpop.f32.mrb[0].mxu0
        %521 = vdwg.mxu0
        %v522 = vpack.c.bf16 %v474, %v474
        %v524 = vsel %vm443, %v522, 0
        %v526 = vsel %vm479, %v341, 0
        %528 = vmatprep.subr.bf16.mxu0 0
        %529 = vmatpush1.bf16.msra.mxu0 %v526
        %530 = vmatprep.subr.bf16.mxu0 0
        %531 = vmatpush1.bf16.msra.mxu0 0
        %532 = vmatprep.subr.bf16.mxu0 0
        %533 = vmatpush1.bf16.msra.mxu0 0
        %534 = vmatprep.subr.bf16.mxu0 0
        %535 = vmatpush1.bf16.msra.mxu0 0
        %536 = vmatprep.subr.bf16.mxu0 0
        %537 = vmatpush1.bf16.msra.mxu0 0
        %538 = vmatprep.subr.bf16.mxu0 0
        %539 = vmatpush1.bf16.msra.mxu0 0
        %540 = vmatprep.subr.bf16.mxu0 0
        %541 = vmatpush1.bf16.msra.mxu0 0
        %542 = vmatprep.subr.bf16.mxu0 0
        %543 = vmatpush1.bf16.msra.mxu0 0
        %544 = vmatprep.subr.bf16.mxu0 0
        %545 = vmatpush1.bf16.msra.mxu0 0
        %546 = vmatprep.subr.bf16.mxu0 0
        %547 = vmatpush1.bf16.msra.mxu0 0
        %548 = vmatprep.subr.bf16.mxu0 0
        %549 = vmatpush1.bf16.msra.mxu0 0
        %550 = vmatprep.subr.bf16.mxu0 0
        %551 = vmatpush1.bf16.msra.mxu0 0
        %552 = vmatprep.subr.bf16.mxu0 0
        %553 = vmatpush1.bf16.msra.mxu0 0
        %554 = vmatprep.subr.bf16.mxu0 0
        %555 = vmatpush1.bf16.msra.mxu0 0
        %556 = vmatprep.subr.bf16.mxu0 0
        %557 = vmatpush1.bf16.msra.mxu0 0
        %558 = vmatprep.subr.bf16.mxu0 0
        %559 = vmatpush1.bf16.msra.mxu0 0
        %560 = vmatprep.mubr.bf16.mxu0 0
        %561 = vmatmul.mubr.bf16.gmra.mrb[0].mxu0 %v524
        %v562 = vpop.f32.mrb[0].mxu0
        %v563 = vadd.f32 0.0, %v562
        %v564 = vpop.f32.mrb[0].mxu0
        %v565 = vpop.f32.mrb[0].mxu0
        %v566 = vpop.f32.mrb[0].mxu0
        %567 = vdwg.mxu0
        %v568 = vmul.f32 %v337, %v517
        %570 = vrot.lane.b32.xlu0 %v517, 64
        %v571 = vpop.permute.xlu0 %570
        %v573 = vsel %vm343, %v337, %v571
        %v574 = vpack.c.bf16 %v573, %v573
        %v575 = vpack.c.bf16 %v568, %v568
        %v576 = vld [vmem:[%s4] sm:$0xf]
        %v577 = vld [vmem:[%s4 + $0x4] sm:$0xf]
        %v578 = vld [vmem:[%s4 + $0x8] sm:$0xf]
        %v579 = vld [vmem:[%s4 + $0xc] sm:$0xf]
        %v580 = vld [vmem:[%s4 + $0x10] sm:$0xf]
        %v581 = vld [vmem:[%s4 + $0x14] sm:$0xf]
        %v582 = vld [vmem:[%s4 + $0x18] sm:$0xf]
        %v583 = vld [vmem:[%s4 + $0x1c] sm:$0xf]
        %v584 = vld [vmem:[%s4 + $0x20] sm:$0xf]
        %v585 = vld [vmem:[%s4 + $0x24] sm:$0xf]
        %v586 = vld [vmem:[%s4 + $0x28] sm:$0xf]
        %v587 = vld [vmem:[%s4 + $0x2c] sm:$0xf]
        %v588 = vld [vmem:[%s4 + $0x30] sm:$0xf]
        %v589 = vld [vmem:[%s4 + $0x34] sm:$0xf]
        %v590 = vld [vmem:[%s4 + $0x38] sm:$0xf]
        %v591 = vld [vmem:[%s4 + $0x3c] sm:$0xf]
        %v592 = vld [vmem:[%s4 + $0x40] sm:$0xf]
        %v593 = vld [vmem:[%s4 + $0x44] sm:$0xf]
        %v594 = vld [vmem:[%s4 + $0x48] sm:$0xf]
        %v595 = vld [vmem:[%s4 + $0x4c] sm:$0xf]
        %v596 = vld [vmem:[%s4 + $0x50] sm:$0xf]
        %v597 = vld [vmem:[%s4 + $0x54] sm:$0xf]
        %v598 = vld [vmem:[%s4 + $0x58] sm:$0xf]
        %v599 = vld [vmem:[%s4 + $0x5c] sm:$0xf]
        %v600 = vld [vmem:[%s5] sm:$0x1]
        %v602 = vlaneseq
        %v603 = vshrl.u32 %v602, 7
        %v604 = vsub.s32 0, %v603
        %v605 = vrot.slane %v600, %v604
        %v631 = vunpack.c.l.b16 %v576
        %v632 = vunpack.c.l.b16 %v577
        %v633 = vunpack.c.l.b16 %v578
        %v634 = vunpack.c.l.b16 %v579
        %v635 = vunpack.c.l.b16 %v580
        %v636 = vunpack.c.l.b16 %v581
        %v637 = vunpack.c.l.b16 %v582
        %v638 = vunpack.c.l.b16 %v583
        %v639 = vunpack.c.l.b16 %v584
        %v640 = vunpack.c.l.b16 %v585
        %v641 = vunpack.c.l.b16 %v586
        %v642 = vunpack.c.l.b16 %v587
        %v643 = vunpack.c.l.b16 %v588
        %v644 = vunpack.c.l.b16 %v589
        %v645 = vunpack.c.l.b16 %v590
        %v646 = vunpack.c.l.b16 %v591
        %v647 = vunpack.c.l.b16 %v592
        %v648 = vunpack.c.l.b16 %v593
        %v649 = vunpack.c.l.b16 %v594
        %v650 = vunpack.c.l.b16 %v595
        %v651 = vunpack.c.l.b16 %v596
        %v652 = vunpack.c.l.b16 %v597
        %v653 = vunpack.c.l.b16 %v598
        %v654 = vunpack.c.l.b16 %v599
        %v655 = vpack.c.b16 %v632, %v631
        %v656 = vpack.c.b16 %v634, %v633
        %v657 = vpack.c.b16 %v636, %v635
        %v658 = vpack.c.b16 %v638, %v637
        %v659 = vpack.c.b16 %v640, %v639
        %v660 = vpack.c.b16 %v642, %v641
        %v661 = vpack.c.b16 %v644, %v643
        %v662 = vpack.c.b16 %v646, %v645
        %v663 = vpack.c.b16 %v648, %v647
        %v664 = vpack.c.b16 %v650, %v649
        %v665 = vpack.c.b16 %v652, %v651
        %v666 = vpack.c.b16 %v654, %v653
        %v680 = vsel %vm343, %v575, 0
        %682 = vmatprep.subr.bf16.mxu0 0
        %683 = vmatpush1.bf16.msra.mxu0 %v655
        %684 = vmatprep.subr.bf16.mxu0 0
        %685 = vmatpush1.bf16.msra.mxu0 %v656
        %686 = vmatprep.subr.bf16.mxu0 0
        %687 = vmatpush1.bf16.msra.mxu0 %v657
        %688 = vmatprep.subr.bf16.mxu0 0
        %689 = vmatpush1.bf16.msra.mxu0 %v658
        %690 = vmatprep.subr.bf16.mxu0 0
        %691 = vmatpush1.bf16.msra.mxu0 %v659
        %692 = vmatprep.subr.bf16.mxu0 0
        %693 = vmatpush1.bf16.msra.mxu0 %v660
        %694 = vmatprep.subr.bf16.mxu0 0
        %695 = vmatpush1.bf16.msra.mxu0 %v661
        %696 = vmatprep.subr.bf16.mxu0 0
        %697 = vmatpush1.bf16.msra.mxu0 %v662
        %698 = vmatprep.subr.bf16.mxu0 0
        %699 = vmatpush1.bf16.msra.mxu0 %v663
        %700 = vmatprep.subr.bf16.mxu0 0
        %701 = vmatpush1.bf16.msra.mxu0 %v664
        %702 = vmatprep.subr.bf16.mxu0 0
        %703 = vmatpush1.bf16.msra.mxu0 %v665
        %704 = vmatprep.subr.bf16.mxu0 0
        %705 = vmatpush1.bf16.msra.mxu0 %v666
        %706 = vmatprep.subr.bf16.mxu0 0
        %707 = vmatpush1.bf16.msra.mxu0 0
        %708 = vmatprep.subr.bf16.mxu0 0
        %709 = vmatpush1.bf16.msra.mxu0 0
        %710 = vmatprep.subr.bf16.mxu0 0
        %711 = vmatpush1.bf16.msra.mxu0 0
        %712 = vmatprep.subr.bf16.mxu0 0
        %713 = vmatpush1.bf16.msra.mxu0 0
        %714 = vmatprep.mubr.bf16.mxu0 %v680
        %715 = vmatmul.mubr.bf16.gmra.mrb[0].mxu0 %v574
        %v716 = vpop.f32.mrb[0].mxu0
        %v717 = vadd.f32 %v605, %v716
        %v718 = vpop.f32.mrb[0].mxu0
        %v719 = vpop.f32.mrb[0].mxu0
        %v720 = vpop.f32.mrb[0].mxu0
        %721 = vdwg.mxu0
        %v722 = vmax.f32 %v717, 0.0
        %vm723 = vcmask 261120
        %724 = vst.msk [vmem:[%s331] sm:$0xff] %vm723, %v722
        %v725 = vmul.f32 %v338, %v563
        %727 = vrot.lane.b32.xlu0 %v563, 64
        %v728 = vpop.permute.xlu0 %727
        %v730 = vsel %vm343, %v338, %v728
        %v731 = vpack.c.bf16 %v730, %v730
        %v732 = vpack.c.bf16 %v725, %v725
        %v733 = vld [vmem:[%s4] sm:$0xf]
        %v734 = vld [vmem:[%s4 + $0x4] sm:$0xf]
        %v735 = vld [vmem:[%s4 + $0x8] sm:$0xf]
        %v736 = vld [vmem:[%s4 + $0xc] sm:$0xf]
        %v737 = vld [vmem:[%s4 + $0x10] sm:$0xf]
        %v738 = vld [vmem:[%s4 + $0x14] sm:$0xf]
        %v739 = vld [vmem:[%s4 + $0x18] sm:$0xf]
        %v740 = vld [vmem:[%s4 + $0x1c] sm:$0xf]
        %v741 = vld [vmem:[%s4 + $0x20] sm:$0xf]
        %v742 = vld [vmem:[%s4 + $0x24] sm:$0xf]
        %v743 = vld [vmem:[%s4 + $0x28] sm:$0xf]
        %v744 = vld [vmem:[%s4 + $0x2c] sm:$0xf]
        %v745 = vld [vmem:[%s4 + $0x30] sm:$0xf]
        %v746 = vld [vmem:[%s4 + $0x34] sm:$0xf]
        %v747 = vld [vmem:[%s4 + $0x38] sm:$0xf]
        %v748 = vld [vmem:[%s4 + $0x3c] sm:$0xf]
        %v749 = vld [vmem:[%s4 + $0x40] sm:$0xf]
        %v750 = vld [vmem:[%s4 + $0x44] sm:$0xf]
        %v751 = vld [vmem:[%s4 + $0x48] sm:$0xf]
        %v752 = vld [vmem:[%s4 + $0x4c] sm:$0xf]
        %v753 = vld [vmem:[%s4 + $0x50] sm:$0xf]
        %v754 = vld [vmem:[%s4 + $0x54] sm:$0xf]
        %v755 = vld [vmem:[%s4 + $0x58] sm:$0xf]
        %v756 = vld [vmem:[%s4 + $0x5c] sm:$0xf]
        %v757 = vld [vmem:[%s5] sm:$0x1]
        %v759 = vlaneseq
        %v760 = vshrl.u32 %v759, 7
        %v761 = vsub.s32 0, %v760
        %v762 = vrot.slane %v757, %v761
        %v788 = vunpack.c.l.b16 %v733
        %v789 = vunpack.c.l.b16 %v734
        %v790 = vunpack.c.l.b16 %v735
        %v791 = vunpack.c.l.b16 %v736
        %v792 = vunpack.c.l.b16 %v737
        %v793 = vunpack.c.l.b16 %v738
        %v794 = vunpack.c.l.b16 %v739
        %v795 = vunpack.c.l.b16 %v740
        %v796 = vunpack.c.l.b16 %v741
        %v797 = vunpack.c.l.b16 %v742
        %v798 = vunpack.c.l.b16 %v743
        %v799 = vunpack.c.l.b16 %v744
        %v800 = vunpack.c.l.b16 %v745
        %v801 = vunpack.c.l.b16 %v746
        %v802 = vunpack.c.l.b16 %v747
        %v803 = vunpack.c.l.b16 %v748
        %v804 = vunpack.c.l.b16 %v749
        %v805 = vunpack.c.l.b16 %v750
        %v806 = vunpack.c.l.b16 %v751
        %v807 = vunpack.c.l.b16 %v752
        %v808 = vunpack.c.l.b16 %v753
        %v809 = vunpack.c.l.b16 %v754
        %v810 = vunpack.c.l.b16 %v755
        %v811 = vunpack.c.l.b16 %v756
        %v812 = vpack.c.b16 %v789, %v788
        %v813 = vpack.c.b16 %v791, %v790
        %v814 = vpack.c.b16 %v793, %v792
        %v815 = vpack.c.b16 %v795, %v794
        %v816 = vpack.c.b16 %v797, %v796
        %v817 = vpack.c.b16 %v799, %v798
        %v818 = vpack.c.b16 %v801, %v800
        %v819 = vpack.c.b16 %v803, %v802
        %v820 = vpack.c.b16 %v805, %v804
        %v821 = vpack.c.b16 %v807, %v806
        %v822 = vpack.c.b16 %v809, %v808
        %v823 = vpack.c.b16 %v811, %v810
        %v837 = vsel %vm343, %v732, 0
        %839 = vmatprep.subr.bf16.mxu0 0
        %840 = vmatpush1.bf16.msra.mxu0 %v812
        %841 = vmatprep.subr.bf16.mxu0 0
        %842 = vmatpush1.bf16.msra.mxu0 %v813
        %843 = vmatprep.subr.bf16.mxu0 0
        %844 = vmatpush1.bf16.msra.mxu0 %v814
        %845 = vmatprep.subr.bf16.mxu0 0
        %846 = vmatpush1.bf16.msra.mxu0 %v815
        %847 = vmatprep.subr.bf16.mxu0 0
        %848 = vmatpush1.bf16.msra.mxu0 %v816
        %849 = vmatprep.subr.bf16.mxu0 0
        %850 = vmatpush1.bf16.msra.mxu0 %v817
        %851 = vmatprep.subr.bf16.mxu0 0
        %852 = vmatpush1.bf16.msra.mxu0 %v818
        %853 = vmatprep.subr.bf16.mxu0 0
        %854 = vmatpush1.bf16.msra.mxu0 %v819
        %855 = vmatprep.subr.bf16.mxu0 0
        %856 = vmatpush1.bf16.msra.mxu0 %v820
        %857 = vmatprep.subr.bf16.mxu0 0
        %858 = vmatpush1.bf16.msra.mxu0 %v821
        %859 = vmatprep.subr.bf16.mxu0 0
        %860 = vmatpush1.bf16.msra.mxu0 %v822
        %861 = vmatprep.subr.bf16.mxu0 0
        %862 = vmatpush1.bf16.msra.mxu0 %v823
        %863 = vmatprep.subr.bf16.mxu0 0
        %864 = vmatpush1.bf16.msra.mxu0 0
        %865 = vmatprep.subr.bf16.mxu0 0
        %866 = vmatpush1.bf16.msra.mxu0 0
        %867 = vmatprep.subr.bf16.mxu0 0
        %868 = vmatpush1.bf16.msra.mxu0 0
        %869 = vmatprep.subr.bf16.mxu0 0
        %870 = vmatpush1.bf16.msra.mxu0 0
        %871 = vmatprep.mubr.bf16.mxu0 %v837
        %872 = vmatmul.mubr.bf16.gmra.mrb[0].mxu0 %v731
        %v873 = vpop.f32.mrb[0].mxu0
        %v874 = vadd.f32 %v762, %v873
        %v875 = vpop.f32.mrb[0].mxu0
        %v876 = vpop.f32.mrb[0].mxu0
        %v877 = vpop.f32.mrb[0].mxu0
        %878 = vdwg.mxu0
        %v879 = vmax.f32 %v874, 0.0
        %880 = vst.msk [vmem:[%s335] sm:$0xff] %vm723, %v879
        %p881 = scmp.lt.s32.totalorder %s21, 1
        %s882 = scalar_select %p881, %s21, 1
        %s883 = smul.addr %s882, 8
        %s884 = scalar_lea.vmem %s6, %s883
        %p885 = scmp.lt.s32.totalorder %s21, 1
        %s886 = scalar_select %p885, %s21, 1
        %s887 = smul.addr %s886, 8
        %s888 = scalar_lea.vmem %s7, %s887
        // Predicated region
        $region53: #{esim_forward.4} parent=43 // pred_check
          %p889 = pneg %p177
        $region54: #{esim_forward.4} parent=43 // pred_check_branch
          %891 = sbr.rel (%p889) target = $region56
        $region55: #{esim_forward.4} parent=43 // pred_region
          _
        $region56: #{esim_forward.4} parent=43 // pred_fallthru
          _
        // Predicated region
        $region57: #{esim_forward.4} parent=43 // pred_check
          %p892 = pneg %p203
        $region58: #{esim_forward.4} parent=43 // pred_check_branch
          %894 = sbr.rel (%p892) target = $region60
        $region59: #{esim_forward.4} parent=43 // pred_region
          _
        $region60: #{esim_forward.4} parent=43 // pred_fallthru
          _
      $region44: #{esim_forward.4} parent=5 // pred_fallthru
        _
      %p895 = scmp.le.s32.totalorder 2, %s16
      // Predicated region
      $region61: #{esim_forward.4} parent=5 // pred_check
        %p896 = pneg %p895
      $region62: #{esim_forward.4} parent=5 // pred_check_branch
        %898 = sbr.rel (%p896) target = $region64
      $region63: #{esim_forward.4} parent=5 // pred_region
        %s899 = ssub.s32 %s16, 2
        // Predicated region
        $region65: #{esim_forward.4} parent=63 // pred_check
          %p900 = pneg %p183
        $region66: #{esim_forward.4} parent=63 // pred_check_branch
          %902 = sbr.rel (%p900) target = $region68
        $region67: #{esim_forward.4} parent=63 // pred_region
          %p903 = scmp.lt.s32.totalorder %s22, 1
          %s904 = scalar_select %p903, %s22, 1
          %s905 = smul.addr %s904, 8
          %s906 = scalar_lea.vmem %s6, %s905
        $region68: #{esim_forward.4} parent=63 // pred_fallthru
          _
        // Predicated region
        $region69: #{esim_forward.4} parent=63 // pred_check
          %p907 = pneg %p209
        $region70: #{esim_forward.4} parent=63 // pred_check_branch
          %909 = sbr.rel (%p907) target = $region72
        $region71: #{esim_forward.4} parent=63 // pred_region
          %p910 = scmp.lt.s32.totalorder %s22, 1
          %s911 = scalar_select %p910, %s22, 1
          %s912 = smul.addr %s911, 8
          %s913 = scalar_lea.vmem %s7, %s912
        $region72: #{esim_forward.4} parent=63 // pred_fallthru
          _
      $region64: #{esim_forward.4} parent=5 // pred_fallthru
        _
    $region6: #{esim_forward.4} parent=1 // loop_footer
      %s20 = sadd.s32 1, %s16
    $region7: #{esim_forward.4} parent=1 // loop_footer_branch
      %15 = sbr.rel target = $region3
    $region8: #{esim_forward.4} parent=1 // loop_exit
      _
    %914 = vsyncpa [#allocation3], 1
    %s915 = scalar_lea.sflag [#allocation3], 1
    %916 = vsyncpa %s915, 1
    %917 = vsyncpa [#allocation5], 1

// kernel: esim_forward.3
$region0: #{esim_forward.3}
  #allocation0 [shape = 'u32[]', space=smem, size = 0x4, offset = 0x4, fixed_abs, tag = 'smem constant byte address 0x4 - core index']
  #allocation1 [shape = 'u32[144,128]{1,0:T(1,128)}', space=vmem, size = 0x12000, scoped, tag = 'internal scratch']
  %s0 = inlined_call_operand.vmem [shape: f32[8,4,128], index: 0, kind: input, shape index: {}]
  %s1 = inlined_call_operand.vmem [shape: f32[8,4,128], index: 1, kind: input, shape index: {}]
  %s2 = inlined_call_operand.vmem [shape: bf16[32,128], index: 2, kind: input, shape index: {}]
  %s3 = inlined_call_operand.vmem [shape: bf16[32,128], index: 3, kind: input, shape index: {}]
  %s4 = inlined_call_operand.vmem [shape: f32[8,4,32], index: 4, kind: output, shape index: {0}]
  %s5 = inlined_call_operand.vmem [shape: f32[8,4,32], index: 5, kind: output, shape index: {1}]
  %6 = xla_tuple %s4, %s5
  %s7 = sld [smem:[#allocation0]]
  $region34: #{esim_forward.3} parent=0
    _
  %s9 = ssub.s32 1, %s7
  %s10 = scalar_select 0, %s9, %s7
  // Predicated region
  $region2: #{esim_forward.3} parent=0 // pred_check
    _
  $region3: #{esim_forward.3} parent=0 // pred_check_branch
    %12 = sbr.rel (0) target = $region5
  $region4: #{esim_forward.3} parent=0 // pred_region
    _
  $region5: #{esim_forward.3} parent=0 // pred_fallthru
    _
  // Predicated region
  $region6: #{esim_forward.3} parent=0 // pred_check
    _
  $region7: #{esim_forward.3} parent=0 // pred_check_branch
    %14 = sbr.rel (0) target = $region9
  $region8: #{esim_forward.3} parent=0 // pred_region
    _
  $region9: #{esim_forward.3} parent=0 // pred_fallthru
    _
  // Predicated region
  $region10: #{esim_forward.3} parent=0 // pred_check
    _
  $region11: #{esim_forward.3} parent=0 // pred_check_branch
    %16 = sbr.rel (0) target = $region13
  $region12: #{esim_forward.3} parent=0 // pred_region
    _
  $region13: #{esim_forward.3} parent=0 // pred_fallthru
    _
  // Predicated region
  $region14: #{esim_forward.3} parent=0 // pred_check
    _
  $region15: #{esim_forward.3} parent=0 // pred_check_branch
    %18 = sbr.rel (0) target = $region17
  $region16: #{esim_forward.3} parent=0 // pred_region
    _
  $region17: #{esim_forward.3} parent=0 // pred_fallthru
    _
  %v20 = vld [vmem:[%s2] sm:$0xf]
  %v21 = vld [vmem:[%s2 + $0x4] sm:$0xf]
  %v22 = vld [vmem:[%s2 + $0x8] sm:$0xf]
  %v23 = vld [vmem:[%s2 + $0xc] sm:$0xf]
  %v24 = vld [vmem:[%s3] sm:$0xf]
  %v25 = vld [vmem:[%s3 + $0x4] sm:$0xf]
  %v26 = vld [vmem:[%s3 + $0x8] sm:$0xf]
  %v27 = vld [vmem:[%s3 + $0xc] sm:$0xf]
  %v28 = vld [vmem:[%s0] sm:$0xf]
  %v33 = vunpack.c.l.b16 %v20
  %v34 = vunpack.c.l.b16 %v21
  %v35 = vunpack.c.l.b16 %v22
  %v36 = vunpack.c.l.b16 %v23
  %v37 = vpack.c.b16 %v34, %v33
  %v38 = vpack.c.b16 %v36, %v35
  %vm41 = vcmask 261120
  %v43 = vsel %vm41, 0, 0
  %45 = vmatprep.subr.bf16.mxu0 0
  %46 = vmatpush1.bf16.msra.mxu0 %v37
  %47 = vmatprep.subr.bf16.mxu0 0
  %48 = vmatpush1.bf16.msra.mxu0 %v38
  %49 = vmatprep.subr.bf16.mxu0 0
  %50 = vmatpush1.bf16.msra.mxu0 0
  %51 = vmatprep.subr.bf16.mxu0 0
  %52 = vmatpush1.bf16.msra.mxu0 0
  %53 = vmatprep.subr.bf16.mxu0 0
  %54 = vmatpush1.bf16.msra.mxu0 0
  %55 = vmatprep.subr.bf16.mxu0 0
  %56 = vmatpush1.bf16.msra.mxu0 0
  %57 = vmatprep.subr.bf16.mxu0 0
  %58 = vmatpush1.bf16.msra.mxu0 0
  %59 = vmatprep.subr.bf16.mxu0 0
  %60 = vmatpush1.bf16.msra.mxu0 0
  %61 = vmatprep.subr.bf16.mxu0 0
  %62 = vmatpush1.bf16.msra.mxu0 0
  %63 = vmatprep.subr.bf16.mxu0 0
  %64 = vmatpush1.bf16.msra.mxu0 0
  %65 = vmatprep.subr.bf16.mxu0 0
  %66 = vmatpush1.bf16.msra.mxu0 0
  %67 = vmatprep.subr.bf16.mxu0 0
  %68 = vmatpush1.bf16.msra.mxu0 0
  %69 = vmatprep.subr.bf16.mxu0 0
  %70 = vmatpush1.bf16.msra.mxu0 0
  %71 = vmatprep.subr.bf16.mxu0 0
  %72 = vmatpush1.bf16.msra.mxu0 0
  %73 = vmatprep.subr.bf16.mxu0 0
  %74 = vmatpush1.bf16.msra.mxu0 0
  %75 = vmatprep.subr.bf16.mxu0 0
  %76 = vmatpush1.bf16.msra.mxu0 0
  %77 = vmatprep.mubr.bf16.mxu0 0
  %78 = vmatmul.mubr.bf16.gmra.mrb[0].mxu0 %v43
  %v79 = vpop.f32.mrb[0].mxu0
  %v80 = vadd.f32 0.0, %v79
  %v81 = vpop.f32.mrb[0].mxu0
  %v82 = vpop.f32.mrb[0].mxu0
  %v83 = vpop.f32.mrb[0].mxu0
  %84 = vdwg.mxu0
  %v85 = vadd.f32 %v28, %v80
  %v86 = vxor.u32 %v85, 2147483648
  %v87 = vmul.f32 %v86, 1.442695
  %v88 = vpow.pop %v87
  %v89 = vadd.f32 %v88, 1.0
  %v90 = vrcp.pop %v89
  %v91 = vmul.f32 1.0, %v90
  %v92 = vtanh.pop %v85
  %v93 = vmul.f32 %v91, 0.0
  %95 = vrot.lane.b32.xlu0 %v92, 64
  %v96 = vpop.permute.xlu0 %95
  %v98 = vmul.f32 %v91, %v96
  %100 = vrot.lane.b32.xlu0 %v98, 32
  %v101 = vpop.permute.xlu0 %100
  %v103 = vadd.f32 %v93, %v101
  %v104 = vtanh.pop %v103
  %106 = vrot.lane.b32.xlu0 %v104, 64
  %v107 = vpop.permute.xlu0 %106
  %v109 = vmul.f32 %v91, %v107
  %s110 = scalar_lea.vmem %s1, 28
  %v111 = vld [vmem:[%s110] sm:$0xf]
  %v116 = vunpack.c.l.b16 %v24
  %v117 = vunpack.c.l.b16 %v25
  %v118 = vunpack.c.l.b16 %v26
  %v119 = vunpack.c.l.b16 %v27
  %v120 = vpack.c.b16 %v117, %v116
  %v121 = vpack.c.b16 %v119, %v118
  %124 = vmatprep.subr.bf16.mxu0 0
  %125 = vmatpush1.bf16.msra.mxu0 %v120
  %126 = vmatprep.subr.bf16.mxu0 0
  %127 = vmatpush1.bf16.msra.mxu0 %v121
  %128 = vmatprep.subr.bf16.mxu0 0
  %129 = vmatpush1.bf16.msra.mxu0 0
  %130 = vmatprep.subr.bf16.mxu0 0
  %131 = vmatpush1.bf16.msra.mxu0 0
  %132 = vmatprep.subr.bf16.mxu0 0
  %133 = vmatpush1.bf16.msra.mxu0 0
  %134 = vmatprep.subr.bf16.mxu0 0
  %135 = vmatpush1.bf16.msra.mxu0 0
  %136 = vmatprep.subr.bf16.mxu0 0
  %137 = vmatpush1.bf16.msra.mxu0 0
  %138 = vmatprep.subr.bf16.mxu0 0
  %139 = vmatpush1.bf16.msra.mxu0 0
  %140 = vmatprep.subr.bf16.mxu0 0
  %141 = vmatpush1.bf16.msra.mxu0 0
  %142 = vmatprep.subr.bf16.mxu0 0
  %143 = vmatpush1.bf16.msra.mxu0 0
  %144 = vmatprep.subr.bf16.mxu0 0
  %145 = vmatpush1.bf16.msra.mxu0 0
  %146 = vmatprep.subr.bf16.mxu0 0
  %147 = vmatpush1.bf16.msra.mxu0 0
  %148 = vmatprep.subr.bf16.mxu0 0
  %149 = vmatpush1.bf16.msra.mxu0 0
  %150 = vmatprep.subr.bf16.mxu0 0
  %151 = vmatpush1.bf16.msra.mxu0 0
  %152 = vmatprep.subr.bf16.mxu0 0
  %153 = vmatpush1.bf16.msra.mxu0 0
  %154 = vmatprep.subr.bf16.mxu0 0
  %155 = vmatpush1.bf16.msra.mxu0 0
  %156 = vmatprep.mubr.bf16.mxu0 0
  %157 = vmatmul.mubr.bf16.gmra.mrb[0].mxu0 %v43
  %v158 = vpop.f32.mrb[0].mxu0
  %v159 = vadd.f32 0.0, %v158
  %v160 = vpop.f32.mrb[0].mxu0
  %v161 = vpop.f32.mrb[0].mxu0
  %v162 = vpop.f32.mrb[0].mxu0
  %163 = vdwg.mxu0
  %v164 = vadd.f32 %v111, %v159
  %v165 = vxor.u32 %v164, 2147483648
  %v166 = vmul.f32 %v165, 1.442695
  %v167 = vpow.pop %v166
  %v168 = vadd.f32 %v167, 1.0
  %v169 = vrcp.pop %v168
  %v170 = vmul.f32 1.0, %v169
  %v171 = vtanh.pop %v164
  %v172 = vmul.f32 %v170, 0.0
  %174 = vrot.lane.b32.xlu0 %v171, 64
  %v175 = vpop.permute.xlu0 %174
  %v177 = vmul.f32 %v170, %v175
  %179 = vrot.lane.b32.xlu0 %v177, 32
  %v180 = vpop.permute.xlu0 %179
  %v182 = vadd.f32 %v172, %v180
  %v183 = vtanh.pop %v182
  %185 = vrot.lane.b32.xlu0 %v183, 64
  %v186 = vpop.permute.xlu0 %185
  %v188 = vmul.f32 %v170, %v186
  %190 = vrot.lane.b32.xlu0 %v109, 32
  %v191 = vpop.permute.xlu0 %190
  %vm193 = vcmask 257024
  %194 = vst.msk [vmem:[%s4] sm:$0xf] %vm193, %v191
  %196 = vrot.lane.b32.xlu0 %v188, 32
  %v197 = vpop.permute.xlu0 %196
  %s199 = scalar_lea.vmem %s5, 28
  %200 = vst.msk [vmem:[%s199] sm:$0xf] %vm193, %v197
  %s201 = scalar_lea.vmem %s0, 4
  %v202 = vld [vmem:[%s201] sm:$0xf]
  %v203 = vpack.c.bf16 %v109, %v109
  %205 = vrot.lane.b32.xlu0 %v203, 32
  %v206 = vpop.permute.xlu0 %205
  %v208 = vsel %vm41, %v206, 0
  %210 = vmatprep.subr.bf16.mxu0 0
  %211 = vmatpush1.bf16.msra.mxu0 %v37
  %212 = vmatprep.subr.bf16.mxu0 0
  %213 = vmatpush1.bf16.msra.mxu0 %v38
  %214 = vmatprep.subr.bf16.mxu0 0
  %215 = vmatpush1.bf16.msra.mxu0 0
  %216 = vmatprep.subr.bf16.mxu0 0
  %217 = vmatpush1.bf16.msra.mxu0 0
  %218 = vmatprep.subr.bf16.mxu0 0
  %219 = vmatpush1.bf16.msra.mxu0 0
  %220 = vmatprep.subr.bf16.mxu0 0
  %221 = vmatpush1.bf16.msra.mxu0 0
  %222 = vmatprep.subr.bf16.mxu0 0
  %223 = vmatpush1.bf16.msra.mxu0 0
  %224 = vmatprep.subr.bf16.mxu0 0
  %225 = vmatpush1.bf16.msra.mxu0 0
  %226 = vmatprep.subr.bf16.mxu0 0
  %227 = vmatpush1.bf16.msra.mxu0 0
  %228 = vmatprep.subr.bf16.mxu0 0
  %229 = vmatpush1.bf16.msra.mxu0 0
  %230 = vmatprep.subr.bf16.mxu0 0
  %231 = vmatpush1.bf16.msra.mxu0 0
  %232 = vmatprep.subr.bf16.mxu0 0
  %233 = vmatpush1.bf16.msra.mxu0 0
  %234 = vmatprep.subr.bf16.mxu0 0
  %235 = vmatpush1.bf16.msra.mxu0 0
  %236 = vmatprep.subr.bf16.mxu0 0
  %237 = vmatpush1.bf16.msra.mxu0 0
  %238 = vmatprep.subr.bf16.mxu0 0
  %239 = vmatpush1.bf16.msra.mxu0 0
  %240 = vmatprep.subr.bf16.mxu0 0
  %241 = vmatpush1.bf16.msra.mxu0 0
  %242 = vmatprep.mubr.bf16.mxu0 0
  %243 = vmatmul.mubr.bf16.gmra.mrb[0].mxu0 %v208
  %v244 = vpop.f32.mrb[0].mxu0
  %v245 = vadd.f32 0.0, %v244
  %v246 = vpop.f32.mrb[0].mxu0
  %v247 = vpop.f32.mrb[0].mxu0
  %v248 = vpop.f32.mrb[0].mxu0
  %249 = vdwg.mxu0
  %v250 = vadd.f32 %v202, %v245
  %v251 = vxor.u32 %v250, 2147483648
  %v252 = vmul.f32 %v251, 1.442695
  %v253 = vpow.pop %v252
  %v254 = vadd.f32 %v253, 1.0
  %v255 = vrcp.pop %v254
  %v256 = vmul.f32 1.0, %v255
  %v257 = vtanh.pop %v250
  %v258 = vmul.f32 %v256, %v103
  %260 = vrot.lane.b32.xlu0 %v257, 64
  %v261 = vpop.permute.xlu0 %260
  %v263 = vmul.f32 %v256, %v261
  %265 = vrot.lane.b32.xlu0 %v263, 32
  %v266 = vpop.permute.xlu0 %265
  %v268 = vadd.f32 %v258, %v266
  %v269 = vtanh.pop %v268
  %271 = vrot.lane.b32.xlu0 %v269, 64
  %v272 = vpop.permute.xlu0 %271
  %v274 = vmul.f32 %v256, %v272
  %s275 = scalar_lea.vmem %s1, 24
  %v276 = vld [vmem:[%s275] sm:$0xf]
  %v277 = vpack.c.bf16 %v188, %v188
  %279 = vrot.lane.b32.xlu0 %v277, 32
  %v280 = vpop.permute.xlu0 %279
  %v282 = vsel %vm41, %v280, 0
  %284 = vmatprep.subr.bf16.mxu0 0
  %285 = vmatpush1.bf16.msra.mxu0 %v120
  %286 = vmatprep.subr.bf16.mxu0 0
  %287 = vmatpush1.bf16.msra.mxu0 %v121
  %288 = vmatprep.subr.bf16.mxu0 0
  %289 = vmatpush1.bf16.msra.mxu0 0
  %290 = vmatprep.subr.bf16.mxu0 0
  %291 = vmatpush1.bf16.msra.mxu0 0
  %292 = vmatprep.subr.bf16.mxu0 0
  %293 = vmatpush1.bf16.msra.mxu0 0
  %294 = vmatprep.subr.bf16.mxu0 0
  %295 = vmatpush1.bf16.msra.mxu0 0
  %296 = vmatprep.subr.bf16.mxu0 0
  %297 = vmatpush1.bf16.msra.mxu0 0
  %298 = vmatprep.subr.bf16.mxu0 0
  %299 = vmatpush1.bf16.msra.mxu0 0
  %300 = vmatprep.subr.bf16.mxu0 0
  %301 = vmatpush1.bf16.msra.mxu0 0
  %302 = vmatprep.subr.bf16.mxu0 0
  %303 = vmatpush1.bf16.msra.mxu0 0
  %304 = vmatprep.subr.bf16.mxu0 0
  %305 = vmatpush1.bf16.msra.mxu0 0
  %306 = vmatprep.subr.bf16.mxu0 0
  %307 = vmatpush1.bf16.msra.mxu0 0
  %308 = vmatprep.subr.bf16.mxu0 0
  %309 = vmatpush1.bf16.msra.mxu0 0
  %310 = vmatprep.subr.bf16.mxu0 0
  %311 = vmatpush1.bf16.msra.mxu0 0
  %312 = vmatprep.subr.bf16.mxu0 0
  %313 = vmatpush1.bf16.msra.mxu0 0
  %314 = vmatprep.subr.bf16.mxu0 0
  %315 = vmatpush1.bf16.msra.mxu0 0
  %316 = vmatprep.mubr.bf16.mxu0 0
  %317 = vmatmul.mubr.bf16.gmra.mrb[0].mxu0 %v282
  %v318 = vpop.f32.mrb[0].mxu0
  %v319 = vadd.f32 0.0, %v318
  %v320 = vpop.f32.mrb[0].mxu0
  %v321 = vpop.f32.mrb[0].mxu0
  %v322 = vpop.f32.mrb[0].mxu0
  %323 = vdwg.mxu0
  %v324 = vadd.f32 %v276, %v319
  %v325 = vxor.u32 %v324, 2147483648
  %v326 = vmul.f32 %v325, 1.442695
  %v327 = vpow.pop %v326
  %v328 = vadd.f32 %v327, 1.0
  %v329 = vrcp.pop %v328
  %v330 = vmul.f32 1.0, %v329
  %v331 = vtanh.pop %v324
  %v332 = vmul.f32 %v330, %v182
  %334 = vrot.lane.b32.xlu0 %v331, 64
  %v335 = vpop.permute.xlu0 %334
  %v337 = vmul.f32 %v330, %v335
  %339 = vrot.lane.b32.xlu0 %v337, 32
  %v340 = vpop.permute.xlu0 %339
  %v342 = vadd.f32 %v332, %v340
  %v343 = vtanh.pop %v342
  %345 = vrot.lane.b32.xlu0 %v343, 64
  %v346 = vpop.permute.xlu0 %345
  %v348 = vmul.f32 %v330, %v346
  %350 = vrot.lane.b32.xlu0 %v274, 32
  %v351 = vpop.permute.xlu0 %350
  %s353 = scalar_lea.vmem %s4, 4
  %354 = vst.msk [vmem:[%s353] sm:$0xf] %vm193, %v351
  %356 = vrot.lane.b32.xlu0 %v348, 32
  %v357 = vpop.permute.xlu0 %356
  %s359 = scalar_lea.vmem %s5, 24
  %360 = vst.msk [vmem:[%s359] sm:$0xf] %vm193, %v357
  %s361 = scalar_lea.vmem %s0, 8
  %v362 = vld [vmem:[%s361] sm:$0xf]
  %v363 = vpack.c.bf16 %v274, %v274
  %365 = vrot.lane.b32.xlu0 %v363, 32
  %v366 = vpop.permute.xlu0 %365
  %v368 = vsel %vm41, %v366, 0
  %370 = vmatprep.subr.bf16.mxu0 0
  %371 = vmatpush1.bf16.msra.mxu0 %v37
  %372 = vmatprep.subr.bf16.mxu0 0
  %373 = vmatpush1.bf16.msra.mxu0 %v38
  %374 = vmatprep.subr.bf16.mxu0 0
  %375 = vmatpush1.bf16.msra.mxu0 0
  %376 = vmatprep.subr.bf16.mxu0 0
  %377 = vmatpush1.bf16.msra.mxu0 0
  %378 = vmatprep.subr.bf16.mxu0 0
  %379 = vmatpush1.bf16.msra.mxu0 0
  %380 = vmatprep.subr.bf16.mxu0 0
  %381 = vmatpush1.bf16.msra.mxu0 0
  %382 = vmatprep.subr.bf16.mxu0 0
  %383 = vmatpush1.bf16.msra.mxu0 0
  %384 = vmatprep.subr.bf16.mxu0 0
  %385 = vmatpush1.bf16.msra.mxu0 0
  %386 = vmatprep.subr.bf16.mxu0 0
  %387 = vmatpush1.bf16.msra.mxu0 0
  %388 = vmatprep.subr.bf16.mxu0 0
  %389 = vmatpush1.bf16.msra.mxu0 0
  %390 = vmatprep.subr.bf16.mxu0 0
  %391 = vmatpush1.bf16.msra.mxu0 0
  %392 = vmatprep.subr.bf16.mxu0 0
  %393 = vmatpush1.bf16.msra.mxu0 0
  %394 = vmatprep.subr.bf16.mxu0 0
  %395 = vmatpush1.bf16.msra.mxu0 0
  %396 = vmatprep.subr.bf16.mxu0 0
  %397 = vmatpush1.bf16.msra.mxu0 0
  %398 = vmatprep.subr.bf16.mxu0 0
  %399 = vmatpush1.bf16.msra.mxu0 0
  %400 = vmatprep.subr.bf16.mxu0 0
  %401 = vmatpush1.bf16.msra.mxu0 0
  %402 = vmatprep.mubr.bf16.mxu0 0
  %403 = vmatmul.mubr.bf16.gmra.mrb[0].mxu0 %v368
  %v404 = vpop.f32.mrb[0].mxu0
  %v405 = vadd.f32 0.0, %v404
  %v406 = vpop.f32.mrb[0].mxu0
  %v407 = vpop.f32.mrb[0].mxu0
  %v408 = vpop.f32.mrb[0].mxu0
  %409 = vdwg.mxu0
  %v410 = vadd.f32 %v362, %v405
  %v411 = vxor.u32 %v410, 2147483648
  %v412 = vmul.f32 %v411, 1.442695
  %v413 = vpow.pop %v412
  %v414 = vadd.f32 %v413, 1.0
  %v415 = vrcp.pop %v414
  %v416 = vmul.f32 1.0, %v415
  %v417 = vtanh.pop %v410
  %v418 = vmul.f32 %v416, %v268
  %420 = vrot.lane.b32.xlu0 %v417, 64
  %v421 = vpop.permute.xlu0 %420
  %v423 = vmul.f32 %v416, %v421
  %425 = vrot.lane.b32.xlu0 %v423, 32
  %v426 = vpop.permute.xlu0 %425
  %v428 = vadd.f32 %v418, %v426
  %v429 = vtanh.pop %v428
  %431 = vrot.lane.b32.xlu0 %v429, 64
  %v432 = vpop.permute.xlu0 %431
  %v434 = vmul.f32 %v416, %v432
  %s435 = scalar_lea.vmem %s1, 20
  %v436 = vld [vmem:[%s435] sm:$0xf]
  %v437 = vpack.c.bf16 %v348, %v348
  %439 = vrot.lane.b32.xlu0 %v437, 32
  %v440 = vpop.permute.xlu0 %439
  %v442 = vsel %vm41, %v440, 0
  %444 = vmatprep.subr.bf16.mxu0 0
  %445 = vmatpush1.bf16.msra.mxu0 %v120
  %446 = vmatprep.subr.bf16.mxu0 0
  %447 = vmatpush1.bf16.msra.mxu0 %v121
  %448 = vmatprep.subr.bf16.mxu0 0
  %449 = vmatpush1.bf16.msra.mxu0 0
  %450 = vmatprep.subr.bf16.mxu0 0
  %451 = vmatpush1.bf16.msra.mxu0 0
  %452 = vmatprep.subr.bf16.mxu0 0
  %453 = vmatpush1.bf16.msra.mxu0 0
  %454 = vmatprep.subr.bf16.mxu0 0
  %455 = vmatpush1.bf16.msra.mxu0 0
  %456 = vmatprep.subr.bf16.mxu0 0
  %457 = vmatpush1.bf16.msra.mxu0 0
  %458 = vmatprep.subr.bf16.mxu0 0
  %459 = vmatpush1.bf16.msra.mxu0 0
  %460 = vmatprep.subr.bf16.mxu0 0
  %461 = vmatpush1.bf16.msra.mxu0 0
  %462 = vmatprep.subr.bf16.mxu0 0
  %463 = vmatpush1.bf16.msra.mxu0 0
  %464 = vmatprep.subr.bf16.mxu0 0
  %465 = vmatpush1.bf16.msra.mxu0 0
  %466 = vmatprep.subr.bf16.mxu0 0
  %467 = vmatpush1.bf16.msra.mxu0 0
  %468 = vmatprep.subr.bf16.mxu0 0
  %469 = vmatpush1.bf16.msra.mxu0 0
  %470 = vmatprep.subr.bf16.mxu0 0
  %471 = vmatpush1.bf16.msra.mxu0 0
  %472 = vmatprep.subr.bf16.mxu0 0
  %473 = vmatpush1.bf16.msra.mxu0 0
  %474 = vmatprep.subr.bf16.mxu0 0
  %475 = vmatpush1.bf16.msra.mxu0 0
  %476 = vmatprep.mubr.bf16.mxu0 0
  %477 = vmatmul.mubr.bf16.gmra.mrb[0].mxu0 %v442
  %v478 = vpop.f32.mrb[0].mxu0
  %v479 = vadd.f32 0.0, %v478
  %v480 = vpop.f32.mrb[0].mxu0
  %v481 = vpop.f32.mrb[0].mxu0
  %v482 = vpop.f32.mrb[0].mxu0
  %483 = vdwg.mxu0
  %v484 = vadd.f32 %v436, %v479
  %v485 = vxor.u32 %v484, 2147483648
  %v486 = vmul.f32 %v485, 1.442695
  %v487 = vpow.pop %v486
  %v488 = vadd.f32 %v487, 1.0
  %v489 = vrcp.pop %v488
  %v490 = vmul.f32 1.0, %v489
  %v491 = vtanh.pop %v484
  %v492 = vmul.f32 %v490, %v342
  %494 = vrot.lane.b32.xlu0 %v491, 64
  %v495 = vpop.permute.xlu0 %494
  %v497 = vmul.f32 %v490, %v495
  %499 = vrot.lane.b32.xlu0 %v497, 32
  %v500 = vpop.permute.xlu0 %499
  %v502 = vadd.f32 %v492, %v500
  %v503 = vtanh.pop %v502
  %505 = vrot.lane.b32.xlu0 %v503, 64
  %v506 = vpop.permute.xlu0 %505
  %v508 = vmul.f32 %v490, %v506
  %510 = vrot.lane.b32.xlu0 %v434, 32
  %v511 = vpop.permute.xlu0 %510
  %s513 = scalar_lea.vmem %s4, 8
  %514 = vst.msk [vmem:[%s513] sm:$0xf] %vm193, %v511
  %516 = vrot.lane.b32.xlu0 %v508, 32
  %v517 = vpop.permute.xlu0 %516
  %s519 = scalar_lea.vmem %s5, 20
  %520 = vst.msk [vmem:[%s519] sm:$0xf] %vm193, %v517
  %s521 = scalar_lea.vmem %s0, 12
  %v522 = vld [vmem:[%s521] sm:$0xf]
  %v523 = vpack.c.bf16 %v434, %v434
  %525 = vrot.lane.b32.xlu0 %v523, 32
  %v526 = vpop.permute.xlu0 %525
  %v528 = vsel %vm41, %v526, 0
  %530 = vmatprep.subr.bf16.mxu0 0
  %531 = vmatpush1.bf16.msra.mxu0 %v37
  %532 = vmatprep.subr.bf16.mxu0 0
  %533 = vmatpush1.bf16.msra.mxu0 %v38
  %534 = vmatprep.subr.bf16.mxu0 0
  %535 = vmatpush1.bf16.msra.mxu0 0
  %536 = vmatprep.subr.bf16.mxu0 0
  %537 = vmatpush1.bf16.msra.mxu0 0
  %538 = vmatprep.subr.bf16.mxu0 0
  %539 = vmatpush1.bf16.msra.mxu0 0
  %540 = vmatprep.subr.bf16.mxu0 0
  %541 = vmatpush1.bf16.msra.mxu0 0
  %542 = vmatprep.subr.bf16.mxu0 0
  %543 = vmatpush1.bf16.msra.mxu0 0
  %544 = vmatprep.subr.bf16.mxu0 0
  %545 = vmatpush1.bf16.msra.mxu0 0
  %546 = vmatprep.subr.bf16.mxu0 0
  %547 = vmatpush1.bf16.msra.mxu0 0
  %548 = vmatprep.subr.bf16.mxu0 0
  %549 = vmatpush1.bf16.msra.mxu0 0
  %550 = vmatprep.subr.bf16.mxu0 0
  %551 = vmatpush1.bf16.msra.mxu0 0
  %552 = vmatprep.subr.bf16.mxu0 0
  %553 = vmatpush1.bf16.msra.mxu0 0
  %554 = vmatprep.subr.bf16.mxu0 0
  %555 = vmatpush1.bf16.msra.mxu0 0
  %556 = vmatprep.subr.bf16.mxu0 0
  %557 = vmatpush1.bf16.msra.mxu0 0
  %558 = vmatprep.subr.bf16.mxu0 0
  %559 = vmatpush1.bf16.msra.mxu0 0
  %560 = vmatprep.subr.bf16.mxu0 0
  %561 = vmatpush1.bf16.msra.mxu0 0
  %562 = vmatprep.mubr.bf16.mxu0 0
  %563 = vmatmul.mubr.bf16.gmra.mrb[0].mxu0 %v528
  %v564 = vpop.f32.mrb[0].mxu0
  %v565 = vadd.f32 0.0, %v564
  %v566 = vpop.f32.mrb[0].mxu0
  %v567 = vpop.f32.mrb[0].mxu0
  %v568 = vpop.f32.mrb[0].mxu0
  %569 = vdwg.mxu0
  %v570 = vadd.f32 %v522, %v565
  %v571 = vxor.u32 %v570, 2147483648
  %v572 = vmul.f32 %v571, 1.442695
  %v573 = vpow.pop %v572
  %v574 = vadd.f32 %v573, 1.0
  %v575 = vrcp.pop %v574
  %v576 = vmul.f32 1.0, %v575
  %v577 = vtanh.pop %v570
  %v578 = vmul.f32 %v576, %v428
  %580 = vrot.lane.b32.xlu0 %v577, 64
  %v581 = vpop.permute.xlu0 %580
  %v583 = vmul.f32 %v576, %v581
  %585 = vrot.lane.b32.xlu0 %v583, 32
  %v586 = vpop.permute.xlu0 %585
  %v588 = vadd.f32 %v578, %v586
  %v589 = vtanh.pop %v588
  %591 = vrot.lane.b32.xlu0 %v589, 64
  %v592 = vpop.permute.xlu0 %591
  %v594 = vmul.f32 %v576, %v592
  %s595 = scalar_lea.vmem %s1, 16
  %v596 = vld [vmem:[%s595] sm:$0xf]
  %v597 = vpack.c.bf16 %v508, %v508
  %599 = vrot.lane.b32.xlu0 %v597, 32
  %v600 = vpop.permute.xlu0 %599
  %v602 = vsel %vm41, %v600, 0
  %604 = vmatprep.subr.bf16.mxu0 0
  %605 = vmatpush1.bf16.msra.mxu0 %v120
  %606 = vmatprep.subr.bf16.mxu0 0
  %607 = vmatpush1.bf16.msra.mxu0 %v121
  %608 = vmatprep.subr.bf16.mxu0 0
  %609 = vmatpush1.bf16.msra.mxu0 0
  %610 = vmatprep.subr.bf16.mxu0 0
  %611 = vmatpush1.bf16.msra.mxu0 0
  %612 = vmatprep.subr.bf16.mxu0 0
  %613 = vmatpush1.bf16.msra.mxu0 0
  %614 = vmatprep.subr.bf16.mxu0 0
  %615 = vmatpush1.bf16.msra.mxu0 0
  %616 = vmatprep.subr.bf16.mxu0 0
  %617 = vmatpush1.bf16.msra.mxu0 0
  %618 = vmatprep.subr.bf16.mxu0 0
  %619 = vmatpush1.bf16.msra.mxu0 0
  %620 = vmatprep.subr.bf16.mxu0 0
  %621 = vmatpush1.bf16.msra.mxu0 0
  %622 = vmatprep.subr.bf16.mxu0 0
  %623 = vmatpush1.bf16.msra.mxu0 0
  %624 = vmatprep.subr.bf16.mxu0 0
  %625 = vmatpush1.bf16.msra.mxu0 0
  %626 = vmatprep.subr.bf16.mxu0 0
  %627 = vmatpush1.bf16.msra.mxu0 0
  %628 = vmatprep.subr.bf16.mxu0 0
  %629 = vmatpush1.bf16.msra.mxu0 0
  %630 = vmatprep.subr.bf16.mxu0 0
  %631 = vmatpush1.bf16.msra.mxu0 0
  %632 = vmatprep.subr.bf16.mxu0 0
  %633 = vmatpush1.bf16.msra.mxu0 0
  %634 = vmatprep.subr.bf16.mxu0 0
  %635 = vmatpush1.bf16.msra.mxu0 0
  %636 = vmatprep.mubr.bf16.mxu0 0
  %637 = vmatmul.mubr.bf16.gmra.mrb[0].mxu0 %v602
  %v638 = vpop.f32.mrb[0].mxu0
  %v639 = vadd.f32 0.0, %v638
  %v640 = vpop.f32.mrb[0].mxu0
  %v641 = vpop.f32.mrb[0].mxu0
  %v642 = vpop.f32.mrb[0].mxu0
  %643 = vdwg.mxu0
  %v644 = vadd.f32 %v596, %v639
  %v645 = vxor.u32 %v644, 2147483648
  %v646 = vmul.f32 %v645, 1.442695
  %v647 = vpow.pop %v646
  %v648 = vadd.f32 %v647, 1.0
  %v649 = vrcp.pop %v648
  %v650 = vmul.f32 1.0, %v649
  %v651 = vtanh.pop %v644
  %v652 = vmul.f32 %v650, %v502
  %654 = vrot.lane.b32.xlu0 %v651, 64
  %v655 = vpop.permute.xlu0 %654
  %v657 = vmul.f32 %v650, %v655
  %659 = vrot.lane.b32.xlu0 %v657, 32
  %v660 = vpop.permute.xlu0 %659
  %v662 = vadd.f32 %v652, %v660
  %v663 = vtanh.pop %v662
  %665 = vrot.lane.b32.xlu0 %v663, 64
  %v666 = vpop.permute.xlu0 %665
  %v668 = vmul.f32 %v650, %v666
  %670 = vrot.lane.b32.xlu0 %v594, 32
  %v671 = vpop.permute.xlu0 %670
  %s673 = scalar_lea.vmem %s4, 12
  %674 = vst.msk [vmem:[%s673] sm:$0xf] %vm193, %v671
  %676 = vrot.lane.b32.xlu0 %v668, 32
  %v677 = vpop.permute.xlu0 %676
  %s679 = scalar_lea.vmem %s5, 16
  %680 = vst.msk [vmem:[%s679] sm:$0xf] %vm193, %v677
  %s681 = scalar_lea.vmem %s0, 16
  %v682 = vld [vmem:[%s681] sm:$0xf]
  %v683 = vpack.c.bf16 %v594, %v594
  %685 = vrot.lane.b32.xlu0 %v683, 32
  %v686 = vpop.permute.xlu0 %685
  %v688 = vsel %vm41, %v686, 0
  %690 = vmatprep.subr.bf16.mxu0 0
  %691 = vmatpush1.bf16.msra.mxu0 %v37
  %692 = vmatprep.subr.bf16.mxu0 0
  %693 = vmatpush1.bf16.msra.mxu0 %v38
  %694 = vmatprep.subr.bf16.mxu0 0
  %695 = vmatpush1.bf16.msra.mxu0 0
  %696 = vmatprep.subr.bf16.mxu0 0
  %697 = vmatpush1.bf16.msra.mxu0 0
  %698 = vmatprep.subr.bf16.mxu0 0
  %699 = vmatpush1.bf16.msra.mxu0 0
  %700 = vmatprep.subr.bf16.mxu0 0
  %701 = vmatpush1.bf16.msra.mxu0 0
  %702 = vmatprep.subr.bf16.mxu0 0
  %703 = vmatpush1.bf16.msra.mxu0 0
  %704 = vmatprep.subr.bf16.mxu0 0
  %705 = vmatpush1.bf16.msra.mxu0 0
  %706 = vmatprep.subr.bf16.mxu0 0
  %707 = vmatpush1.bf16.msra.mxu0 0
  %708 = vmatprep.subr.bf16.mxu0 0
  %709 = vmatpush1.bf16.msra.mxu0 0
  %710 = vmatprep.subr.bf16.mxu0 0
  %711 = vmatpush1.bf16.msra.mxu0 0
  %712 = vmatprep.subr.bf16.mxu0 0
  %713 = vmatpush1.bf16.msra.mxu0 0
  %714 = vmatprep.subr.bf16.mxu0 0
  %715 = vmatpush1.bf16.msra.mxu0 0
  %716 = vmatprep.subr.bf16.mxu0 0
  %717 = vmatpush1.bf16.msra.mxu0 0
  %718 = vmatprep.subr.bf16.mxu0 0
  %719 = vmatpush1.bf16.msra.mxu0 0
  %720 = vmatprep.subr.bf16.mxu0 0
  %721 = vmatpush1.bf16.msra.mxu0 0
  %722 = vmatprep.mubr.bf16.mxu0 0
  %723 = vmatmul.mubr.bf16.gmra.mrb[0].mxu0 %v688
  %v724 = vpop.f32.mrb[0].mxu0
  %v725 = vadd.f32 0.0, %v724
  %v726 = vpop.f32.mrb[0].mxu0
  %v727 = vpop.f32.mrb[0].mxu0
  %v728 = vpop.f32.mrb[0].mxu0
  %729 = vdwg.mxu0
  %v730 = vadd.f32 %v682, %v725
  %v731 = vxor.u32 %v730, 2147483648
  %v732 = vmul.f32 %v731, 1.442695
  %v733 = vpow.pop %v732
  %v734 = vadd.f32 %v733, 1.0
  %v735 = vrcp.pop %v734
  %v736 = vmul.f32 1.0, %v735
  %v737 = vtanh.pop %v730
  %v738 = vmul.f32 %v736, %v588
  %740 = vrot.lane.b32.xlu0 %v737, 64
  %v741 = vpop.permute.xlu0 %740
  %v743 = vmul.f32 %v736, %v741
  %745 = vrot.lane.b32.xlu0 %v743, 32
  %v746 = vpop.permute.xlu0 %745
  %v748 = vadd.f32 %v738, %v746
  %v749 = vtanh.pop %v748
  %751 = vrot.lane.b32.xlu0 %v749, 64
  %v752 = vpop.permute.xlu0 %751
  %v754 = vmul.f32 %v736, %v752
  %s755 = scalar_lea.vmem %s1, 12
  %v756 = vld [vmem:[%s755] sm:$0xf]
  %v757 = vpack.c.bf16 %v668, %v668
  %759 = vrot.lane.b32.xlu0 %v757, 32
  %v760 = vpop.permute.xlu0 %759
  %v762 = vsel %vm41, %v760, 0
  %764 = vmatprep.subr.bf16.mxu0 0
  %765 = vmatpush1.bf16.msra.mxu0 %v120
  %766 = vmatprep.subr.bf16.mxu0 0
  %767 = vmatpush1.bf16.msra.mxu0 %v121
  %768 = vmatprep.subr.bf16.mxu0 0
  %769 = vmatpush1.bf16.msra.mxu0 0
  %770 = vmatprep.subr.bf16.mxu0 0
  %771 = vmatpush1.bf16.msra.mxu0 0
  %772 = vmatprep.subr.bf16.mxu0 0
  %773 = vmatpush1.bf16.msra.mxu0 0
  %774 = vmatprep.subr.bf16.mxu0 0
  %775 = vmatpush1.bf16.msra.mxu0 0
  %776 = vmatprep.subr.bf16.mxu0 0
  %777 = vmatpush1.bf16.msra.mxu0 0
  %778 = vmatprep.subr.bf16.mxu0 0
  %779 = vmatpush1.bf16.msra.mxu0 0
  %780 = vmatprep.subr.bf16.mxu0 0
  %781 = vmatpush1.bf16.msra.mxu0 0
  %782 = vmatprep.subr.bf16.mxu0 0
  %783 = vmatpush1.bf16.msra.mxu0 0
  %784 = vmatprep.subr.bf16.mxu0 0
  %785 = vmatpush1.bf16.msra.mxu0 0
  %786 = vmatprep.subr.bf16.mxu0 0
  %787 = vmatpush1.bf16.msra.mxu0 0
  %788 = vmatprep.subr.bf16.mxu0 0
  %789 = vmatpush1.bf16.msra.mxu0 0
  %790 = vmatprep.subr.bf16.mxu0 0
  %791 = vmatpush1.bf16.msra.mxu0 0
  %792 = vmatprep.subr.bf16.mxu0 0
  %793 = vmatpush1.bf16.msra.mxu0 0
  %794 = vmatprep.subr.bf16.mxu0 0
  %795 = vmatpush1.bf16.msra.mxu0 0
  %796 = vmatprep.mubr.bf16.mxu0 0
  %797 = vmatmul.mubr.bf16.gmra.mrb[0].mxu0 %v762
  %v798 = vpop.f32.mrb[0].mxu0
  %v799 = vadd.f32 0.0, %v798
  %v800 = vpop.f32.mrb[0].mxu0
  %v801 = vpop.f32.mrb[0].mxu0
  %v802 = vpop.f32.mrb[0].mxu0
  %803 = vdwg.mxu0
  %v804 = vadd.f32 %v756, %v799
  %v805 = vxor.u32 %v804, 2147483648
  %v806 = vmul.f32 %v805, 1.442695
  %v807 = vpow.pop %v806
  %v808 = vadd.f32 %v807, 1.0
  %v809 = vrcp.pop %v808
  %v810 = vmul.f32 1.0, %v809
  %v811 = vtanh.pop %v804
  %v812 = vmul.f32 %v810, %v662
  %814 = vrot.lane.b32.xlu0 %v811, 64
  %v815 = vpop.permute.xlu0 %814
  %v817 = vmul.f32 %v810, %v815
  %819 = vrot.lane.b32.xlu0 %v817, 32
  %v820 = vpop.permute.xlu0 %819
  %v822 = vadd.f32 %v812, %v820
  %v823 = vtanh.pop %v822
  %825 = vrot.lane.b32.xlu0 %v823, 64
  %v826 = vpop.permute.xlu0 %825
  %v828 = vmul.f32 %v810, %v826
  %830 = vrot.lane.b32.xlu0 %v754, 32
  %v831 = vpop.permute.xlu0 %830
  %s833 = scalar_lea.vmem %s4, 16
  %834 = vst.msk [vmem:[%s833] sm:$0xf] %vm193, %v831
  %836 = vrot.lane.b32.xlu0 %v828, 32
  %v837 = vpop.permute.xlu0 %836
  %s839 = scalar_lea.vmem %s5, 12
  %840 = vst.msk [vmem:[%s839] sm:$0xf] %vm193, %v837
  %s841 = scalar_lea.vmem %s0, 20
  %v842 = vld [vmem:[%s841] sm:$0xf]
  %v843 = vpack.c.bf16 %v754, %v754
  %845 = vrot.lane.b32.xlu0 %v843, 32
  %v846 = vpop.permute.xlu0 %845
  %v848 = vsel %vm41, %v846, 0
  %850 = vmatprep.subr.bf16.mxu0 0
  %851 = vmatpush1.bf16.msra.mxu0 %v37
  %852 = vmatprep.subr.bf16.mxu0 0
  %853 = vmatpush1.bf16.msra.mxu0 %v38
  %854 = vmatprep.subr.bf16.mxu0 0
  %855 = vmatpush1.bf16.msra.mxu0 0
  %856 = vmatprep.subr.bf16.mxu0 0
  %857 = vmatpush1.bf16.msra.mxu0 0
  %858 = vmatprep.subr.bf16.mxu0 0
  %859 = vmatpush1.bf16.msra.mxu0 0
  %860 = vmatprep.subr.bf16.mxu0 0
  %861 = vmatpush1.bf16.msra.mxu0 0
  %862 = vmatprep.subr.bf16.mxu0 0
  %863 = vmatpush1.bf16.msra.mxu0 0
  %864 = vmatprep.subr.bf16.mxu0 0
  %865 = vmatpush1.bf16.msra.mxu0 0
  %866 = vmatprep.subr.bf16.mxu0 0
  %867 = vmatpush1.bf16.msra.mxu0 0
  %868 = vmatprep.subr.bf16.mxu0 0
  %869 = vmatpush1.bf16.msra.mxu0 0
  %870 = vmatprep.subr.bf16.mxu0 0
  %871 = vmatpush1.bf16.msra.mxu0 0
  %872 = vmatprep.subr.bf16.mxu0 0
  %873 = vmatpush1.bf16.msra.mxu0 0
  %874 = vmatprep.subr.bf16.mxu0 0
  %875 = vmatpush1.bf16.msra.mxu0 0
  %876 = vmatprep.subr.bf16.mxu0 0
  %877 = vmatpush1.bf16.msra.mxu0 0
  %878 = vmatprep.subr.bf16.mxu0 0
  %879 = vmatpush1.bf16.msra.mxu0 0
  %880 = vmatprep.subr.bf16.mxu0 0
  %881 = vmatpush1.bf16.msra.mxu0 0
  %882 = vmatprep.mubr.bf16.mxu0 0
  %883 = vmatmul.mubr.bf16.gmra.mrb[0].mxu0 %v848
  %v884 = vpop.f32.mrb[0].mxu0
  %v885 = vadd.f32 0.0, %v884
  %v886 = vpop.f32.mrb[0].mxu0
  %v887 = vpop.f32.mrb[0].mxu0
  %v888 = vpop.f32.mrb[0].mxu0
  %889 = vdwg.mxu0
  %v890 = vadd.f32 %v842, %v885
  %v891 = vxor.u32 %v890, 2147483648
  %v892 = vmul.f32 %v891, 1.442695
  %v893 = vpow.pop %v892
  %v894 = vadd.f32 %v893, 1.0
  %v895 = vrcp.pop %v894
  %v896 = vmul.f32 1.0, %v895
  %v897 = vtanh.pop %v890
  %v898 = vmul.f32 %v896, %v748
  %900 = vrot.lane.b32.xlu0 %v897, 64
  %v901 = vpop.permute.xlu0 %900
  %v903 = vmul.f32 %v896, %v901
  %905 = vrot.lane.b32.xlu0 %v903, 32
  %v906 = vpop.permute.xlu0 %905
  %v908 = vadd.f32 %v898, %v906
  %v909 = vtanh.pop %v908
  %911 = vrot.lane.b32.xlu0 %v909, 64
  %v912 = vpop.permute.xlu0 %911
  %v914 = vmul.f32 %v896, %v912
  %s915 = scalar_lea.vmem %s1, 8
  %v916 = vld [vmem:[%s915] sm:$0xf]
  %v917 = vpack.c.bf16 %v828, %v828
  %919 = vrot.lane.b32.xlu0 %v917, 32
  %v920 = vpop.permute.xlu0 %919
  %v922 = vsel %vm41, %v920, 0
  %924 = vmatprep.subr.bf16.mxu0 0
  %925 = vmatpush1.bf16.msra.mxu0 %v120
  %926 = vmatprep.subr.bf16.mxu0 0
  %927 = vmatpush1.bf16.msra.mxu0 %v121
  %928 = vmatprep.subr.bf16.mxu0 0
  %929 = vmatpush1.bf16.msra.mxu0 0
  %930 = vmatprep.subr.bf16.mxu0 0
  %931 = vmatpush1.bf16.msra.mxu0 0
  %932 = vmatprep.subr.bf16.mxu0 0
  %933 = vmatpush1.bf16.msra.mxu0 0
  %934 = vmatprep.subr.bf16.mxu0 0
  %935 = vmatpush1.bf16.msra.mxu0 0
  %936 = vmatprep.subr.bf16.mxu0 0
  %937 = vmatpush1.bf16.msra.mxu0 0
  %938 = vmatprep.subr.bf16.mxu0 0
  %939 = vmatpush1.bf16.msra.mxu0 0
  %940 = vmatprep.subr.bf16.mxu0 0
  %941 = vmatpush1.bf16.msra.mxu0 0
  %942 = vmatprep.subr.bf16.mxu0 0
  %943 = vmatpush1.bf16.msra.mxu0 0
  %944 = vmatprep.subr.bf16.mxu0 0
  %945 = vmatpush1.bf16.msra.mxu0 0
  %946 = vmatprep.subr.bf16.mxu0 0
  %947 = vmatpush1.bf16.msra.mxu0 0
  %948 = vmatprep.subr.bf16.mxu0 0
  %949 = vmatpush1.bf16.msra.mxu0 0
  %950 = vmatprep.subr.bf16.mxu0 0
  %951 = vmatpush1.bf16.msra.mxu0 0
  %952 = vmatprep.subr.bf16.mxu0 0
  %953 = vmatpush1.bf16.msra.mxu0 0
  %954 = vmatprep.subr.bf16.mxu0 0
  %955 = vmatpush1.bf16.msra.mxu0 0
  %956 = vmatprep.mubr.bf16.mxu0 0
  %957 = vmatmul.mubr.bf16.gmra.mrb[0].mxu0 %v922
  %v958 = vpop.f32.mrb[0].mxu0
  %v959 = vadd.f32 0.0, %v958
  %v960 = vpop.f32.mrb[0].mxu0
  %v961 = vpop.f32.mrb[0].mxu0
  %v962 = vpop.f32.mrb[0].mxu0
  %963 = vdwg.mxu0
  %v964 = vadd.f32 %v916, %v959
  %v965 = vxor.u32 %v964, 2147483648
  %v966 = vmul.f32 %v965, 1.442695
  %v967 = vpow.pop %v966
  %v968 = vadd.f32 %v967, 1.0
  %v969 = vrcp.pop %v968
  %v970 = vmul.f32 1.0, %v969
  %v971 = vtanh.pop %v964
  %v972 = vmul.f32 %v970, %v822
  %974 = vrot.lane.b32.xlu0 %v971, 64
  %v975 = vpop.permute.xlu0 %974
  %v977 = vmul.f32 %v970, %v975
  %979 = vrot.lane.b32.xlu0 %v977, 32
  %v980 = vpop.permute.xlu0 %979
  %v982 = vadd.f32 %v972, %v980
  %v983 = vtanh.pop %v982
  %985 = vrot.lane.b32.xlu0 %v983, 64
  %v986 = vpop.permute.xlu0 %985
  %v988 = vmul.f32 %v970, %v986
  %990 = vrot.lane.b32.xlu0 %v914, 32
  %v991 = vpop.permute.xlu0 %990
  %s993 = scalar_lea.vmem %s4, 20
  %994 = vst.msk [vmem:[%s993] sm:$0xf] %vm193, %v991
  %996 = vrot.lane.b32.xlu0 %v988, 32
  %v997 = vpop.permute.xlu0 %996
  %s999 = scalar_lea.vmem %s5, 8
  %1000 = vst.msk [vmem:[%s999] sm:$0xf] %vm193, %v997
  %s1001 = scalar_lea.vmem %s0, 24
  %v1002 = vld [vmem:[%s1001] sm:$0xf]
  %v1003 = vpack.c.bf16 %v914, %v914
  %1005 = vrot.lane.b32.xlu0 %v1003, 32
  %v1006 = vpop.permute.xlu0 %1005
  %v1008 = vsel %vm41, %v1006, 0
  %1010 = vmatprep.subr.bf16.mxu0 0
  %1011 = vmatpush1.bf16.msra.mxu0 %v37
  %1012 = vmatprep.subr.bf16.mxu0 0
  %1013 = vmatpush1.bf16.msra.mxu0 %v38
  %1014 = vmatprep.subr.bf16.mxu0 0
  %1015 = vmatpush1.bf16.msra.mxu0 0
  %1016 = vmatprep.subr.bf16.mxu0 0
  %1017 = vmatpush1.bf16.msra.mxu0 0
  %1018 = vmatprep.subr.bf16.mxu0 0
  %1019 = vmatpush1.bf16.msra.mxu0 0
  %1020 = vmatprep.subr.bf16.mxu0 0
  %1021 = vmatpush1.bf16.msra.mxu0 0
  %1022 = vmatprep.subr.bf16.mxu0 0
  %1023 = vmatpush1.bf16.msra.mxu0 0
  %1024 = vmatprep.subr.bf16.mxu0 0
  %1025 = vmatpush1.bf16.msra.mxu0 0
  %1026 = vmatprep.subr.bf16.mxu0 0
  %1027 = vmatpush1.bf16.msra.mxu0 0
  %1028 = vmatprep.subr.bf16.mxu0 0
  %1029 = vmatpush1.bf16.msra.mxu0 0
  %1030 = vmatprep.subr.bf16.mxu0 0
  %1031 = vmatpush1.bf16.msra.mxu0 0
  %1032 = vmatprep.subr.bf16.mxu0 0
  %1033 = vmatpush1.bf16.msra.mxu0 0
  %1034 = vmatprep.subr.bf16.mxu0 0
  %1035 = vmatpush1.bf16.msra.mxu0 0
  %1036 = vmatprep.subr.bf16.mxu0 0
  %1037 = vmatpush1.bf16.msra.mxu0 0
  %1038 = vmatprep.subr.bf16.mxu0 0
  %1039 = vmatpush1.bf16.msra.mxu0 0
  %1040 = vmatprep.subr.bf16.mxu0 0
  %1041 = vmatpush1.bf16.msra.mxu0 0
  %1042 = vmatprep.mubr.bf16.mxu0 0
  %1043 = vmatmul.mubr.bf16.gmra.mrb[0].mxu0 %v1008
  %v1044 = vpop.f32.mrb[0].mxu0
  %v1045 = vadd.f32 0.0, %v1044
  %v1046 = vpop.f32.mrb[0].mxu0
  %v1047 = vpop.f32.mrb[0].mxu0
  %v1048 = vpop.f32.mrb[0].mxu0
  %1049 = vdwg.mxu0
  %v1050 = vadd.f32 %v1002, %v1045
  %v1051 = vxor.u32 %v1050, 2147483648
  %v1052 = vmul.f32 %v1051, 1.442695
  %v1053 = vpow.pop %v1052
  %v1054 = vadd.f32 %v1053, 1.0
  %v1055 = vrcp.pop %v1054
  %v1056 = vmul.f32 1.0, %v1055
  %v1057 = vtanh.pop %v1050
  %v1058 = vmul.f32 %v1056, %v908
  %1060 = vrot.lane.b32.xlu0 %v1057, 64
  %v1061 = vpop.permute.xlu0 %1060
  %v1063 = vmul.f32 %v1056, %v1061
  %1065 = vrot.lane.b32.xlu0 %v1063, 32
  %v1066 = vpop.permute.xlu0 %1065
  %v1068 = vadd.f32 %v1058, %v1066
  %v1069 = vtanh.pop %v1068
  %1071 = vrot.lane.b32.xlu0 %v1069, 64
  %v1072 = vpop.permute.xlu0 %1071
  %v1074 = vmul.f32 %v1056, %v1072
  %s1075 = scalar_lea.vmem %s1, 4
  %v1076 = vld [vmem:[%s1075] sm:$0xf]
  %v1077 = vpack.c.bf16 %v988, %v988
  %1079 = vrot.lane.b32.xlu0 %v1077, 32
  %v1080 = vpop.permute.xlu0 %1079
  %v1082 = vsel %vm41, %v1080, 0
  %1084 = vmatprep.subr.bf16.mxu0 0
  %1085 = vmatpush1.bf16.msra.mxu0 %v120
  %1086 = vmatprep.subr.bf16.mxu0 0
  %1087 = vmatpush1.bf16.msra.mxu0 %v121
  %1088 = vmatprep.subr.bf16.mxu0 0
  %1089 = vmatpush1.bf16.msra.mxu0 0
  %1090 = vmatprep.subr.bf16.mxu0 0
  %1091 = vmatpush1.bf16.msra.mxu0 0
  %1092 = vmatprep.subr.bf16.mxu0 0
  %1093 = vmatpush1.bf16.msra.mxu0 0
  %1094 = vmatprep.subr.bf16.mxu0 0
  %1095 = vmatpush1.bf16.msra.mxu0 0
  %1096 = vmatprep.subr.bf16.mxu0 0
  %1097 = vmatpush1.bf16.msra.mxu0 0
  %1098 = vmatprep.subr.bf16.mxu0 0
  %1099 = vmatpush1.bf16.msra.mxu0 0
  %1100 = vmatprep.subr.bf16.mxu0 0
  %1101 = vmatpush1.bf16.msra.mxu0 0
  %1102 = vmatprep.subr.bf16.mxu0 0
  %1103 = vmatpush1.bf16.msra.mxu0 0
  %1104 = vmatprep.subr.bf16.mxu0 0
  %1105 = vmatpush1.bf16.msra.mxu0 0
  %1106 = vmatprep.subr.bf16.mxu0 0
  %1107 = vmatpush1.bf16.msra.mxu0 0
  %1108 = vmatprep.subr.bf16.mxu0 0
  %1109 = vmatpush1.bf16.msra.mxu0 0
  %1110 = vmatprep.subr.bf16.mxu0 0
  %1111 = vmatpush1.bf16.msra.mxu0 0
  %1112 = vmatprep.subr.bf16.mxu0 0
  %1113 = vmatpush1.bf16.msra.mxu0 0
  %1114 = vmatprep.subr.bf16.mxu0 0
  %1115 = vmatpush1.bf16.msra.mxu0 0
  %1116 = vmatprep.mubr.bf16.mxu0 0
  %1117 = vmatmul.mubr.bf16.gmra.mrb[0].mxu0 %v1082
  %v1118 = vpop.f32.mrb[0].mxu0
  %v1119 = vadd.f32 0.0, %v1118
  %v1120 = vpop.f32.mrb[0].mxu0
  %v1121 = vpop.f32.mrb[0].mxu0
  %v1122 = vpop.f32.mrb[0].mxu0
  %1123 = vdwg.mxu0
  %v1124 = vadd.f32 %v1076, %v1119
  %v1125 = vxor.u32 %v1124, 2147483648
  %v1126 = vmul.f32 %v1125, 1.442695
  %v1127 = vpow.pop %v1126
  %v1128 = vadd.f32 %v1127, 1.0
  %v1129 = vrcp.pop %v1128
  %v1130 = vmul.f32 1.0, %v1129
  %v1131 = vtanh.pop %v1124
  %v1132 = vmul.f32 %v1130, %v982
  %1134 = vrot.lane.b32.xlu0 %v1131, 64
  %v1135 = vpop.permute.xlu0 %1134
  %v1137 = vmul.f32 %v1130, %v1135
  %1139 = vrot.lane.b32.xlu0 %v1137, 32
  %v1140 = vpop.permute.xlu0 %1139
  %v1142 = vadd.f32 %v1132, %v1140
  %v1143 = vtanh.pop %v1142
  %1145 = vrot.lane.b32.xlu0 %v1143, 64
  %v1146 = vpop.permute.xlu0 %1145
  %v1148 = vmul.f32 %v1130, %v1146
  %1150 = vrot.lane.b32.xlu0 %v1074, 32
  %v1151 = vpop.permute.xlu0 %1150
  %s1153 = scalar_lea.vmem %s4, 24
  %1154 = vst.msk [vmem:[%s1153] sm:$0xf] %vm193, %v1151
  %1156 = vrot.lane.b32.xlu0 %v1148, 32
  %v1157 = vpop.permute.xlu0 %1156
  %s1159 = scalar_lea.vmem %s5, 4
  %1160 = vst.msk [vmem:[%s1159] sm:$0xf] %vm193, %v1157
  %s1161 = scalar_lea.vmem %s0, 28
  %v1162 = vld [vmem:[%s1161] sm:$0xf]
  %v1163 = vpack.c.bf16 %v1074, %v1074
  %1165 = vrot.lane.b32.xlu0 %v1163, 32
  %v1166 = vpop.permute.xlu0 %1165
  %v1168 = vsel %vm41, %v1166, 0
  %1170 = vmatprep.subr.bf16.mxu0 0
  %1171 = vmatpush1.bf16.msra.mxu0 %v37
  %1172 = vmatprep.subr.bf16.mxu0 0
  %1173 = vmatpush1.bf16.msra.mxu0 %v38
  %1174 = vmatprep.subr.bf16.mxu0 0
  %1175 = vmatpush1.bf16.msra.mxu0 0
  %1176 = vmatprep.subr.bf16.mxu0 0
  %1177 = vmatpush1.bf16.msra.mxu0 0
  %1178 = vmatprep.subr.bf16.mxu0 0
  %1179 = vmatpush1.bf16.msra.mxu0 0
  %1180 = vmatprep.subr.bf16.mxu0 0
  %1181 = vmatpush1.bf16.msra.mxu0 0
  %1182 = vmatprep.subr.bf16.mxu0 0
  %1183 = vmatpush1.bf16.msra.mxu0 0
  %1184 = vmatprep.subr.bf16.mxu0 0
  %1185 = vmatpush1.bf16.msra.mxu0 0
  %1186 = vmatprep.subr.bf16.mxu0 0
  %1187 = vmatpush1.bf16.msra.mxu0 0
  %1188 = vmatprep.subr.bf16.mxu0 0
  %1189 = vmatpush1.bf16.msra.mxu0 0
  %1190 = vmatprep.subr.bf16.mxu0 0
  %1191 = vmatpush1.bf16.msra.mxu0 0
  %1192 = vmatprep.subr.bf16.mxu0 0
  %1193 = vmatpush1.bf16.msra.mxu0 0
  %1194 = vmatprep.subr.bf16.mxu0 0
  %1195 = vmatpush1.bf16.msra.mxu0 0
  %1196 = vmatprep.subr.bf16.mxu0 0
  %1197 = vmatpush1.bf16.msra.mxu0 0
  %1198 = vmatprep.subr.bf16.mxu0 0
  %1199 = vmatpush1.bf16.msra.mxu0 0
  %1200 = vmatprep.subr.bf16.mxu0 0
  %1201 = vmatpush1.bf16.msra.mxu0 0
  %1202 = vmatprep.mubr.bf16.mxu0 0
  %1203 = vmatmul.mubr.bf16.gmra.mrb[0].mxu0 %v1168
  %v1204 = vpop.f32.mrb[0].mxu0
  %v1205 = vadd.f32 0.0, %v1204
  %v1206 = vpop.f32.mrb[0].mxu0
  %v1207 = vpop.f32.mrb[0].mxu0
  %v1208 = vpop.f32.mrb[0].mxu0
  %1209 = vdwg.mxu0
  %v1210 = vadd.f32 %v1162, %v1205
  %v1211 = vxor.u32 %v1210, 2147483648
  %v1212 = vmul.f32 %v1211, 1.442695
  %v1213 = vpow.pop %v1212
  %v1214 = vadd.f32 %v1213, 1.0
  %v1215 = vrcp.pop %v1214
  %v1216 = vmul.f32 1.0, %v1215
  %v1217 = vtanh.pop %v1210
  %v1218 = vmul.f32 %v1216, %v1068
  %1220 = vrot.lane.b32.xlu0 %v1217, 64
  %v1221 = vpop.permute.xlu0 %1220
  %v1223 = vmul.f32 %v1216, %v1221
  %1225 = vrot.lane.b32.xlu0 %v1223, 32
  %v1226 = vpop.permute.xlu0 %1225
  %v1228 = vadd.f32 %v1218, %v1226
  %v1229 = vtanh.pop %v1228
  %1231 = vrot.lane.b32.xlu0 %v1229, 64
  %v1232 = vpop.permute.xlu0 %1231
  %v1234 = vmul.f32 %v1216, %v1232
  %v1235 = vld [vmem:[%s1] sm:$0xf]
  %v1236 = vpack.c.bf16 %v1148, %v1148
  %1238 = vrot.lane.b32.xlu0 %v1236, 32
  %v1239 = vpop.permute.xlu0 %1238
  %v1241 = vsel %vm41, %v1239, 0
  %1243 = vmatprep.subr.bf16.mxu0 0
  %1244 = vmatpush1.bf16.msra.mxu0 %v120
  %1245 = vmatprep.subr.bf16.mxu0 0
  %1246 = vmatpush1.bf16.msra.mxu0 %v121
  %1247 = vmatprep.subr.bf16.mxu0 0
  %1248 = vmatpush1.bf16.msra.mxu0 0
  %1249 = vmatprep.subr.bf16.mxu0 0
  %1250 = vmatpush1.bf16.msra.mxu0 0
  %1251 = vmatprep.subr.bf16.mxu0 0
  %1252 = vmatpush1.bf16.msra.mxu0 0
  %1253 = vmatprep.subr.bf16.mxu0 0
  %1254 = vmatpush1.bf16.msra.mxu0 0
  %1255 = vmatprep.subr.bf16.mxu0 0
  %1256 = vmatpush1.bf16.msra.mxu0 0
  %1257 = vmatprep.subr.bf16.mxu0 0
  %1258 = vmatpush1.bf16.msra.mxu0 0
  %1259 = vmatprep.subr.bf16.mxu0 0
  %1260 = vmatpush1.bf16.msra.mxu0 0
  %1261 = vmatprep.subr.bf16.mxu0 0
  %1262 = vmatpush1.bf16.msra.mxu0 0
  %1263 = vmatprep.subr.bf16.mxu0 0
  %1264 = vmatpush1.bf16.msra.mxu0 0
  %1265 = vmatprep.subr.bf16.mxu0 0
  %1266 = vmatpush1.bf16.msra.mxu0 0
  %1267 = vmatprep.subr.bf16.mxu0 0
  %1268 = vmatpush1.bf16.msra.mxu0 0
  %1269 = vmatprep.subr.bf16.mxu0 0
  %1270 = vmatpush1.bf16.msra.mxu0 0
  %1271 = vmatprep.subr.bf16.mxu0 0
  %1272 = vmatpush1.bf16.msra.mxu0 0
  %1273 = vmatprep.subr.bf16.mxu0 0
  %1274 = vmatpush1.bf16.msra.mxu0 0
  %1275 = vmatprep.mubr.bf16.mxu0 0
  %1276 = vmatmul.mubr.bf16.gmra.mrb[0].mxu0 %v1241
  %v1277 = vpop.f32.mrb[0].mxu0
  %v1278 = vadd.f32 0.0, %v1277
  %v1279 = vpop.f32.mrb[0].mxu0
  %v1280 = vpop.f32.mrb[0].mxu0
  %v1281 = vpop.f32.mrb[0].mxu0
  %1282 = vdwg.mxu0
  %v1283 = vadd.f32 %v1235, %v1278
  %v1284 = vxor.u32 %v1283, 2147483648
  %v1285 = vmul.f32 %v1284, 1.442695
  %v1286 = vpow.pop %v1285
  %v1287 = vadd.f32 %v1286, 1.0
  %v1288 = vrcp.pop %v1287
  %v1289 = vmul.f32 1.0, %v1288
  %v1290 = vtanh.pop %v1283
  %v1291 = vmul.f32 %v1289, %v1142
  %1293 = vrot.lane.b32.xlu0 %v1290, 64
  %v1294 = vpop.permute.xlu0 %1293
  %v1296 = vmul.f32 %v1289, %v1294
  %1298 = vrot.lane.b32.xlu0 %v1296, 32
  %v1299 = vpop.permute.xlu0 %1298
  %v1301 = vadd.f32 %v1291, %v1299
  %v1302 = vtanh.pop %v1301
  %1304 = vrot.lane.b32.xlu0 %v1302, 64
  %v1305 = vpop.permute.xlu0 %1304
  %v1307 = vmul.f32 %v1289, %v1305
  %1309 = vrot.lane.b32.xlu0 %v1234, 32
  %v1310 = vpop.permute.xlu0 %1309
  %s1312 = scalar_lea.vmem %s4, 28
  %1313 = vst.msk [vmem:[%s1312] sm:$0xf] %vm193, %v1310
  %1315 = vrot.lane.b32.xlu0 %v1307, 32
  %v1316 = vpop.permute.xlu0 %1315
  %1318 = vst.msk [vmem:[%s5] sm:$0xf] %vm193, %v1316
  // Predicated region
  $region18: #{esim_forward.3} parent=0 // pred_check
    _
  $region19: #{esim_forward.3} parent=0 // pred_check_branch
    %1320 = sbr.rel (0) target = $region21
  $region20: #{esim_forward.3} parent=0 // pred_region
    _
  $region21: #{esim_forward.3} parent=0 // pred_fallthru
    _
  // Predicated region
  $region22: #{esim_forward.3} parent=0 // pred_check
    _
  $region23: #{esim_forward.3} parent=0 // pred_check_branch
    %1322 = sbr.rel (0) target = $region25
  $region24: #{esim_forward.3} parent=0 // pred_region
    _
  $region25: #{esim_forward.3} parent=0 // pred_fallthru
    _
  // Predicated region
  $region26: #{esim_forward.3} parent=0 // pred_check
    _
  $region27: #{esim_forward.3} parent=0 // pred_check_branch
    %1324 = sbr.rel (0) target = $region29
  $region28: #{esim_forward.3} parent=0 // pred_region
    _
  $region29: #{esim_forward.3} parent=0 // pred_fallthru
    _
  // Predicated region
  $region30: #{esim_forward.3} parent=0 // pred_check
    _
  $region31: #{esim_forward.3} parent=0 // pred_check_branch
    %1326 = sbr.rel (0) target = $region33
  $region32: #{esim_forward.3} parent=0 // pred_region
    _
  $region33: #{esim_forward.3} parent=0 // pred_fallthru
    _

// kernel: esim_forward.5
$region0: #{esim_forward.5}
  #allocation0 [shape = 'u32[]', space=smem, size = 0x4, offset = 0x4, fixed_abs, tag = 'smem constant byte address 0x4 - core index']
  #allocation1 [shape = 'u32[144,128]{1,0:T(1,128)}', space=vmem, size = 0x12000, scoped, tag = 'internal scratch']
  %s0 = inlined_call_operand.vmem [shape: f32[8,4,128], index: 0, kind: input, shape index: {}]
  %s1 = inlined_call_operand.vmem [shape: f32[8,4,128], index: 1, kind: input, shape index: {}]
  %s2 = inlined_call_operand.vmem [shape: bf16[32,128], index: 2, kind: input, shape index: {}]
  %s3 = inlined_call_operand.vmem [shape: bf16[32,128], index: 3, kind: input, shape index: {}]
  %s4 = inlined_call_operand.vmem [shape: s32[4,1], index: 4, kind: input, shape index: {}]
  %s5 = inlined_call_operand.vmem [shape: f32[2,1], index: 5, kind: input, shape index: {}]
  %s6 = inlined_call_operand.vmem [shape: bf16[256,32], index: 6, kind: input, shape index: {}]
  %s7 = inlined_call_operand.vmem [shape: f32[1,32], index: 7, kind: input, shape index: {}]
  %s8 = inlined_call_operand.vmem [shape: bf16[32,3], index: 8, kind: input, shape index: {}]
  %s9 = inlined_call_operand.vmem [shape: f32[1,3], index: 9, kind: input, shape index: {}]
  %s10 = inlined_call_operand.hbm [shape: f32[2,3], index: 10, kind: output, shape index: {}]
  %s11 = sld [smem:[#allocation0]]
  $region50: #{esim_forward.5} parent=0
    _
  %s13 = ssub.s32 1, %s11
  %s14 = scalar_select 0, %s13, %s11
  $region1: #{esim_forward.5} parent=0
    #allocation2 [shape = 'u8[1024]{0}', space=vmem, size = 0x400, scoped, tag = 'output window, operand 0, single buffered']
    #allocation3 [shape = 's32[1]{0}', space=sflag, size = 0x4, scoped, tag = 'scoped memory for esim_forward.5']
    %15 = vsyncpa [#allocation3], 0
    // Predicated region
    $region2: #{esim_forward.5} parent=1 // pred_check
      _
    $region3: #{esim_forward.5} parent=1 // pred_check_branch
      %17 = sbr.rel (0) target = $region5
    $region4: #{esim_forward.5} parent=1 // pred_region
      _
    $region5: #{esim_forward.5} parent=1 // pred_fallthru
      _
    // Predicated region
    $region6: #{esim_forward.5} parent=1 // pred_check
      _
    $region7: #{esim_forward.5} parent=1 // pred_check_branch
      %19 = sbr.rel (0) target = $region9
    $region8: #{esim_forward.5} parent=1 // pred_region
      _
    $region9: #{esim_forward.5} parent=1 // pred_fallthru
      _
    // Predicated region
    $region10: #{esim_forward.5} parent=1 // pred_check
      _
    $region11: #{esim_forward.5} parent=1 // pred_check_branch
      %21 = sbr.rel (0) target = $region13
    $region12: #{esim_forward.5} parent=1 // pred_region
      _
    $region13: #{esim_forward.5} parent=1 // pred_fallthru
      _
    // Predicated region
    $region14: #{esim_forward.5} parent=1 // pred_check
      _
    $region15: #{esim_forward.5} parent=1 // pred_check_branch
      %23 = sbr.rel (0) target = $region17
    $region16: #{esim_forward.5} parent=1 // pred_region
      _
    $region17: #{esim_forward.5} parent=1 // pred_fallthru
      _
    // Predicated region
    $region18: #{esim_forward.5} parent=1 // pred_check
      _
    $region19: #{esim_forward.5} parent=1 // pred_check_branch
      %25 = sbr.rel (0) target = $region21
    $region20: #{esim_forward.5} parent=1 // pred_region
      _
    $region21: #{esim_forward.5} parent=1 // pred_fallthru
      _
    // Predicated region
    $region22: #{esim_forward.5} parent=1 // pred_check
      _
    $region23: #{esim_forward.5} parent=1 // pred_check_branch
      %27 = sbr.rel (0) target = $region25
    $region24: #{esim_forward.5} parent=1 // pred_region
      _
    $region25: #{esim_forward.5} parent=1 // pred_fallthru
      _
    // Predicated region
    $region26: #{esim_forward.5} parent=1 // pred_check
      _
    $region27: #{esim_forward.5} parent=1 // pred_check_branch
      %29 = sbr.rel (0) target = $region29
    $region28: #{esim_forward.5} parent=1 // pred_region
      _
    $region29: #{esim_forward.5} parent=1 // pred_fallthru
      _
    // Predicated region
    $region30: #{esim_forward.5} parent=1 // pred_check
      _
    $region31: #{esim_forward.5} parent=1 // pred_check_branch
      %31 = sbr.rel (0) target = $region33
    $region32: #{esim_forward.5} parent=1 // pred_region
      _
    $region33: #{esim_forward.5} parent=1 // pred_fallthru
      _
    // Predicated region
    $region34: #{esim_forward.5} parent=1 // pred_check
      _
    $region35: #{esim_forward.5} parent=1 // pred_check_branch
      %33 = sbr.rel (0) target = $region37
    $region36: #{esim_forward.5} parent=1 // pred_region
      _
    $region37: #{esim_forward.5} parent=1 // pred_fallthru
      _
    // Predicated region
    $region38: #{esim_forward.5} parent=1 // pred_check
      _
    $region39: #{esim_forward.5} parent=1 // pred_check_branch
      %35 = sbr.rel (0) target = $region41
    $region40: #{esim_forward.5} parent=1 // pred_region
      _
    $region41: #{esim_forward.5} parent=1 // pred_fallthru
      _
    %v37 = vld [vmem:[%s2] sm:$0xf]
    %v38 = vld [vmem:[%s2 + $0x4] sm:$0xf]
    %v39 = vld [vmem:[%s2 + $0x8] sm:$0xf]
    %v40 = vld [vmem:[%s2 + $0xc] sm:$0xf]
    %v41 = vld [vmem:[%s3] sm:$0xf]
    %v42 = vld [vmem:[%s3 + $0x4] sm:$0xf]
    %v43 = vld [vmem:[%s3 + $0x8] sm:$0xf]
    %v44 = vld [vmem:[%s3 + $0xc] sm:$0xf]
    %v45 = vld [vmem:[%s4] sm:$0xf]
    %v46 = vld [vmem:[%s0] sm:$0xf]
    %v51 = vunpack.c.l.b16 %v37
    %v52 = vunpack.c.l.b16 %v38
    %v53 = vunpack.c.l.b16 %v39
    %v54 = vunpack.c.l.b16 %v40
    %v55 = vpack.c.b16 %v52, %v51
    %v56 = vpack.c.b16 %v54, %v53
    %vm59 = vcmask 261120
    %v61 = vsel %vm59, 0, 0
    %63 = vmatprep.subr.bf16.mxu0 0
    %64 = vmatpush1.bf16.msra.mxu0 %v55
    %65 = vmatprep.subr.bf16.mxu0 0
    %66 = vmatpush1.bf16.msra.mxu0 %v56
    %67 = vmatprep.subr.bf16.mxu0 0
    %68 = vmatpush1.bf16.msra.mxu0 0
    %69 = vmatprep.subr.bf16.mxu0 0
    %70 = vmatpush1.bf16.msra.mxu0 0
    %71 = vmatprep.subr.bf16.mxu0 0
    %72 = vmatpush1.bf16.msra.mxu0 0
    %73 = vmatprep.subr.bf16.mxu0 0
    %74 = vmatpush1.bf16.msra.mxu0 0
    %75 = vmatprep.subr.bf16.mxu0 0
    %76 = vmatpush1.bf16.msra.mxu0 0
    %77 = vmatprep.subr.bf16.mxu0 0
    %78 = vmatpush1.bf16.msra.mxu0 0
    %79 = vmatprep.subr.bf16.mxu0 0
    %80 = vmatpush1.bf16.msra.mxu0 0
    %81 = vmatprep.subr.bf16.mxu0 0
    %82 = vmatpush1.bf16.msra.mxu0 0
    %83 = vmatprep.subr.bf16.mxu0 0
    %84 = vmatpush1.bf16.msra.mxu0 0
    %85 = vmatprep.subr.bf16.mxu0 0
    %86 = vmatpush1.bf16.msra.mxu0 0
    %87 = vmatprep.subr.bf16.mxu0 0
    %88 = vmatpush1.bf16.msra.mxu0 0
    %89 = vmatprep.subr.bf16.mxu0 0
    %90 = vmatpush1.bf16.msra.mxu0 0
    %91 = vmatprep.subr.bf16.mxu0 0
    %92 = vmatpush1.bf16.msra.mxu0 0
    %93 = vmatprep.subr.bf16.mxu0 0
    %94 = vmatpush1.bf16.msra.mxu0 0
    %95 = vmatprep.mubr.bf16.mxu0 0
    %96 = vmatmul.mubr.bf16.gmra.mrb[0].mxu0 %v61
    %v97 = vpop.f32.mrb[0].mxu0
    %v98 = vadd.f32 0.0, %v97
    %v99 = vpop.f32.mrb[0].mxu0
    %v100 = vpop.f32.mrb[0].mxu0
    %v101 = vpop.f32.mrb[0].mxu0
    %102 = vdwg.mxu0
    %v103 = vadd.f32 %v46, %v98
    %v104 = vxor.u32 %v103, 2147483648
    %v105 = vmul.f32 %v104, 1.442695
    %v106 = vpow.pop %v105
    %v107 = vadd.f32 %v106, 1.0
    %v108 = vrcp.pop %v107
    %v109 = vmul.f32 1.0, %v108
    %v110 = vtanh.pop %v103
    %v111 = vmul.f32 %v109, 0.0
    %113 = vrot.lane.b32.xlu0 %v110, 64
    %v114 = vpop.permute.xlu0 %113
    %v116 = vmul.f32 %v109, %v114
    %118 = vrot.lane.b32.xlu0 %v116, 32
    %v119 = vpop.permute.xlu0 %118
    %v121 = vadd.f32 %v111, %v119
    %v122 = vtanh.pop %v121
    %124 = vrot.lane.b32.xlu0 %v122, 64
    %v125 = vpop.permute.xlu0 %124
    %v127 = vmul.f32 %v109, %v125
    %s128 = scalar_lea.vmem %s1, 28
    %v129 = vld [vmem:[%s128] sm:$0xf]
    %v134 = vunpack.c.l.b16 %v41
    %v135 = vunpack.c.l.b16 %v42
    %v136 = vunpack.c.l.b16 %v43
    %v137 = vunpack.c.l.b16 %v44
    %v138 = vpack.c.b16 %v135, %v134
    %v139 = vpack.c.b16 %v137, %v136
    %142 = vmatprep.subr.bf16.mxu0 0
    %143 = vmatpush1.bf16.msra.mxu0 %v138
    %144 = vmatprep.subr.bf16.mxu0 0
    %145 = vmatpush1.bf16.msra.mxu0 %v139
    %146 = vmatprep.subr.bf16.mxu0 0
    %147 = vmatpush1.bf16.msra.mxu0 0
    %148 = vmatprep.subr.bf16.mxu0 0
    %149 = vmatpush1.bf16.msra.mxu0 0
    %150 = vmatprep.subr.bf16.mxu0 0
    %151 = vmatpush1.bf16.msra.mxu0 0
    %152 = vmatprep.subr.bf16.mxu0 0
    %153 = vmatpush1.bf16.msra.mxu0 0
    %154 = vmatprep.subr.bf16.mxu0 0
    %155 = vmatpush1.bf16.msra.mxu0 0
    %156 = vmatprep.subr.bf16.mxu0 0
    %157 = vmatpush1.bf16.msra.mxu0 0
    %158 = vmatprep.subr.bf16.mxu0 0
    %159 = vmatpush1.bf16.msra.mxu0 0
    %160 = vmatprep.subr.bf16.mxu0 0
    %161 = vmatpush1.bf16.msra.mxu0 0
    %162 = vmatprep.subr.bf16.mxu0 0
    %163 = vmatpush1.bf16.msra.mxu0 0
    %164 = vmatprep.subr.bf16.mxu0 0
    %165 = vmatpush1.bf16.msra.mxu0 0
    %166 = vmatprep.subr.bf16.mxu0 0
    %167 = vmatpush1.bf16.msra.mxu0 0
    %168 = vmatprep.subr.bf16.mxu0 0
    %169 = vmatpush1.bf16.msra.mxu0 0
    %170 = vmatprep.subr.bf16.mxu0 0
    %171 = vmatpush1.bf16.msra.mxu0 0
    %172 = vmatprep.subr.bf16.mxu0 0
    %173 = vmatpush1.bf16.msra.mxu0 0
    %174 = vmatprep.mubr.bf16.mxu0 0
    %175 = vmatmul.mubr.bf16.gmra.mrb[0].mxu0 %v61
    %v176 = vpop.f32.mrb[0].mxu0
    %v177 = vadd.f32 0.0, %v176
    %v178 = vpop.f32.mrb[0].mxu0
    %v179 = vpop.f32.mrb[0].mxu0
    %v180 = vpop.f32.mrb[0].mxu0
    %181 = vdwg.mxu0
    %v182 = vadd.f32 %v129, %v177
    %v183 = vxor.u32 %v182, 2147483648
    %v184 = vmul.f32 %v183, 1.442695
    %v185 = vpow.pop %v184
    %v186 = vadd.f32 %v185, 1.0
    %v187 = vrcp.pop %v186
    %v188 = vmul.f32 1.0, %v187
    %v189 = vtanh.pop %v182
    %v190 = vmul.f32 %v188, 0.0
    %192 = vrot.lane.b32.xlu0 %v189, 64
    %v193 = vpop.permute.xlu0 %192
    %v195 = vmul.f32 %v188, %v193
    %197 = vrot.lane.b32.xlu0 %v195, 32
    %v198 = vpop.permute.xlu0 %197
    %v200 = vadd.f32 %v190, %v198
    %v201 = vtanh.pop %v200
    %203 = vrot.lane.b32.xlu0 %v201, 64
    %v204 = vpop.permute.xlu0 %203
    %v206 = vmul.f32 %v188, %v204
    %vm207 = vcmp.gt.s32.totalorder %v45, 0
    %v208 = vsel %vm207, 1, 0
    %209 = vset.pattern.permute.xlu0 0
    %210 = vperm.xlu0 %209, %v208
    %v211 = vpop.permute.xlu0 %210
    %vm212 = vcmp.eq.s32.totalorder %v211, 1
    %v213 = vsel %vm212, %v127, -1e+30
    %v214 = vmax.f32 %v213, -1e+30
    %vm215 = vcmp.gt.s32.totalorder %v45, 7
    %v216 = vsel %vm215, 1, 0
    %217 = vset.pattern.permute.xlu0 0
    %218 = vperm.xlu0 %217, %v216
    %v219 = vpop.permute.xlu0 %218
    %vm220 = vcmp.eq.s32.totalorder %v219, 1
    %v221 = vsel %vm220, %v206, -1e+30
    %v222 = vmax.f32 %v221, -1e+30
    %s223 = scalar_lea.vmem %s0, 4
    %v224 = vld [vmem:[%s223] sm:$0xf]
    %v225 = vpack.c.bf16 %v127, %v127
    %227 = vrot.lane.b32.xlu0 %v225, 32
    %v228 = vpop.permute.xlu0 %227
    %v230 = vsel %vm59, %v228, 0
    %232 = vmatprep.subr.bf16.mxu0 0
    %233 = vmatpush1.bf16.msra.mxu0 %v55
    %234 = vmatprep.subr.bf16.mxu0 0
    %235 = vmatpush1.bf16.msra.mxu0 %v56
    %236 = vmatprep.subr.bf16.mxu0 0
    %237 = vmatpush1.bf16.msra.mxu0 0
    %238 = vmatprep.subr.bf16.mxu0 0
    %239 = vmatpush1.bf16.msra.mxu0 0
    %240 = vmatprep.subr.bf16.mxu0 0
    %241 = vmatpush1.bf16.msra.mxu0 0
    %242 = vmatprep.subr.bf16.mxu0 0
    %243 = vmatpush1.bf16.msra.mxu0 0
    %244 = vmatprep.subr.bf16.mxu0 0
    %245 = vmatpush1.bf16.msra.mxu0 0
    %246 = vmatprep.subr.bf16.mxu0 0
    %247 = vmatpush1.bf16.msra.mxu0 0
    %248 = vmatprep.subr.bf16.mxu0 0
    %249 = vmatpush1.bf16.msra.mxu0 0
    %250 = vmatprep.subr.bf16.mxu0 0
    %251 = vmatpush1.bf16.msra.mxu0 0
    %252 = vmatprep.subr.bf16.mxu0 0
    %253 = vmatpush1.bf16.msra.mxu0 0
    %254 = vmatprep.subr.bf16.mxu0 0
    %255 = vmatpush1.bf16.msra.mxu0 0
    %256 = vmatprep.subr.bf16.mxu0 0
    %257 = vmatpush1.bf16.msra.mxu0 0
    %258 = vmatprep.subr.bf16.mxu0 0
    %259 = vmatpush1.bf16.msra.mxu0 0
    %260 = vmatprep.subr.bf16.mxu0 0
    %261 = vmatpush1.bf16.msra.mxu0 0
    %262 = vmatprep.subr.bf16.mxu0 0
    %263 = vmatpush1.bf16.msra.mxu0 0
    %264 = vmatprep.mubr.bf16.mxu0 0
    %265 = vmatmul.mubr.bf16.gmra.mrb[0].mxu0 %v230
    %v266 = vpop.f32.mrb[0].mxu0
    %v267 = vadd.f32 0.0, %v266
    %v268 = vpop.f32.mrb[0].mxu0
    %v269 = vpop.f32.mrb[0].mxu0
    %v270 = vpop.f32.mrb[0].mxu0
    %271 = vdwg.mxu0
    %v272 = vadd.f32 %v224, %v267
    %v273 = vxor.u32 %v272, 2147483648
    %v274 = vmul.f32 %v273, 1.442695
    %v275 = vpow.pop %v274
    %v276 = vadd.f32 %v275, 1.0
    %v277 = vrcp.pop %v276
    %v278 = vmul.f32 1.0, %v277
    %v279 = vtanh.pop %v272
    %v280 = vmul.f32 %v278, %v121
    %282 = vrot.lane.b32.xlu0 %v279, 64
    %v283 = vpop.permute.xlu0 %282
    %v285 = vmul.f32 %v278, %v283
    %287 = vrot.lane.b32.xlu0 %v285, 32
    %v288 = vpop.permute.xlu0 %287
    %v290 = vadd.f32 %v280, %v288
    %v291 = vtanh.pop %v290
    %293 = vrot.lane.b32.xlu0 %v291, 64
    %v294 = vpop.permute.xlu0 %293
    %v296 = vmul.f32 %v278, %v294
    %s297 = scalar_lea.vmem %s1, 24
    %v298 = vld [vmem:[%s297] sm:$0xf]
    %v299 = vpack.c.bf16 %v206, %v206
    %301 = vrot.lane.b32.xlu0 %v299, 32
    %v302 = vpop.permute.xlu0 %301
    %v304 = vsel %vm59, %v302, 0
    %306 = vmatprep.subr.bf16.mxu0 0
    %307 = vmatpush1.bf16.msra.mxu0 %v138
    %308 = vmatprep.subr.bf16.mxu0 0
    %309 = vmatpush1.bf16.msra.mxu0 %v139
    %310 = vmatprep.subr.bf16.mxu0 0
    %311 = vmatpush1.bf16.msra.mxu0 0
    %312 = vmatprep.subr.bf16.mxu0 0
    %313 = vmatpush1.bf16.msra.mxu0 0
    %314 = vmatprep.subr.bf16.mxu0 0
    %315 = vmatpush1.bf16.msra.mxu0 0
    %316 = vmatprep.subr.bf16.mxu0 0
    %317 = vmatpush1.bf16.msra.mxu0 0
    %318 = vmatprep.subr.bf16.mxu0 0
    %319 = vmatpush1.bf16.msra.mxu0 0
    %320 = vmatprep.subr.bf16.mxu0 0
    %321 = vmatpush1.bf16.msra.mxu0 0
    %322 = vmatprep.subr.bf16.mxu0 0
    %323 = vmatpush1.bf16.msra.mxu0 0
    %324 = vmatprep.subr.bf16.mxu0 0
    %325 = vmatpush1.bf16.msra.mxu0 0
    %326 = vmatprep.subr.bf16.mxu0 0
    %327 = vmatpush1.bf16.msra.mxu0 0
    %328 = vmatprep.subr.bf16.mxu0 0
    %329 = vmatpush1.bf16.msra.mxu0 0
    %330 = vmatprep.subr.bf16.mxu0 0
    %331 = vmatpush1.bf16.msra.mxu0 0
    %332 = vmatprep.subr.bf16.mxu0 0
    %333 = vmatpush1.bf16.msra.mxu0 0
    %334 = vmatprep.subr.bf16.mxu0 0
    %335 = vmatpush1.bf16.msra.mxu0 0
    %336 = vmatprep.subr.bf16.mxu0 0
    %337 = vmatpush1.bf16.msra.mxu0 0
    %338 = vmatprep.mubr.bf16.mxu0 0
    %339 = vmatmul.mubr.bf16.gmra.mrb[0].mxu0 %v304
    %v340 = vpop.f32.mrb[0].mxu0
    %v341 = vadd.f32 0.0, %v340
    %v342 = vpop.f32.mrb[0].mxu0
    %v343 = vpop.f32.mrb[0].mxu0
    %v344 = vpop.f32.mrb[0].mxu0
    %345 = vdwg.mxu0
    %v346 = vadd.f32 %v298, %v341
    %v347 = vxor.u32 %v346, 2147483648
    %v348 = vmul.f32 %v347, 1.442695
    %v349 = vpow.pop %v348
    %v350 = vadd.f32 %v349, 1.0
    %v351 = vrcp.pop %v350
    %v352 = vmul.f32 1.0, %v351
    %v353 = vtanh.pop %v346
    %v354 = vmul.f32 %v352, %v200
    %356 = vrot.lane.b32.xlu0 %v353, 64
    %v357 = vpop.permute.xlu0 %356
    %v359 = vmul.f32 %v352, %v357
    %361 = vrot.lane.b32.xlu0 %v359, 32
    %v362 = vpop.permute.xlu0 %361
    %v364 = vadd.f32 %v354, %v362
    %v365 = vtanh.pop %v364
    %367 = vrot.lane.b32.xlu0 %v365, 64
    %v368 = vpop.permute.xlu0 %367
    %v370 = vmul.f32 %v352, %v368
    %vm371 = vcmp.gt.s32.totalorder %v45, 1
    %v372 = vsel %vm371, 1, 0
    %373 = vset.pattern.permute.xlu0 0
    %374 = vperm.xlu0 %373, %v372
    %v375 = vpop.permute.xlu0 %374
    %vm376 = vcmp.eq.s32.totalorder %v375, 1
    %v377 = vsel %vm376, %v296, -1e+30
    %v378 = vmax.f32 %v214, %v377
    %vm379 = vcmp.gt.s32.totalorder %v45, 6
    %v380 = vsel %vm379, 1, 0
    %381 = vset.pattern.permute.xlu0 0
    %382 = vperm.xlu0 %381, %v380
    %v383 = vpop.permute.xlu0 %382
    %vm384 = vcmp.eq.s32.totalorder %v383, 1
    %v385 = vsel %vm384, %v370, -1e+30
    %v386 = vmax.f32 %v222, %v385
    %s387 = scalar_lea.vmem %s0, 8
    %v388 = vld [vmem:[%s387] sm:$0xf]
    %v389 = vpack.c.bf16 %v296, %v296
    %391 = vrot.lane.b32.xlu0 %v389, 32
    %v392 = vpop.permute.xlu0 %391
    %v394 = vsel %vm59, %v392, 0
    %396 = vmatprep.subr.bf16.mxu0 0
    %397 = vmatpush1.bf16.msra.mxu0 %v55
    %398 = vmatprep.subr.bf16.mxu0 0
    %399 = vmatpush1.bf16.msra.mxu0 %v56
    %400 = vmatprep.subr.bf16.mxu0 0
    %401 = vmatpush1.bf16.msra.mxu0 0
    %402 = vmatprep.subr.bf16.mxu0 0
    %403 = vmatpush1.bf16.msra.mxu0 0
    %404 = vmatprep.subr.bf16.mxu0 0
    %405 = vmatpush1.bf16.msra.mxu0 0
    %406 = vmatprep.subr.bf16.mxu0 0
    %407 = vmatpush1.bf16.msra.mxu0 0
    %408 = vmatprep.subr.bf16.mxu0 0
    %409 = vmatpush1.bf16.msra.mxu0 0
    %410 = vmatprep.subr.bf16.mxu0 0
    %411 = vmatpush1.bf16.msra.mxu0 0
    %412 = vmatprep.subr.bf16.mxu0 0
    %413 = vmatpush1.bf16.msra.mxu0 0
    %414 = vmatprep.subr.bf16.mxu0 0
    %415 = vmatpush1.bf16.msra.mxu0 0
    %416 = vmatprep.subr.bf16.mxu0 0
    %417 = vmatpush1.bf16.msra.mxu0 0
    %418 = vmatprep.subr.bf16.mxu0 0
    %419 = vmatpush1.bf16.msra.mxu0 0
    %420 = vmatprep.subr.bf16.mxu0 0
    %421 = vmatpush1.bf16.msra.mxu0 0
    %422 = vmatprep.subr.bf16.mxu0 0
    %423 = vmatpush1.bf16.msra.mxu0 0
    %424 = vmatprep.subr.bf16.mxu0 0
    %425 = vmatpush1.bf16.msra.mxu0 0
    %426 = vmatprep.subr.bf16.mxu0 0
    %427 = vmatpush1.bf16.msra.mxu0 0
    %428 = vmatprep.mubr.bf16.mxu0 0
    %429 = vmatmul.mubr.bf16.gmra.mrb[0].mxu0 %v394
    %v430 = vpop.f32.mrb[0].mxu0
    %v431 = vadd.f32 0.0, %v430
    %v432 = vpop.f32.mrb[0].mxu0
    %v433 = vpop.f32.mrb[0].mxu0
    %v434 = vpop.f32.mrb[0].mxu0
    %435 = vdwg.mxu0
    %v436 = vadd.f32 %v388, %v431
    %v437 = vxor.u32 %v436, 2147483648
    %v438 = vmul.f32 %v437, 1.442695
    %v439 = vpow.pop %v438
    %v440 = vadd.f32 %v439, 1.0
    %v441 = vrcp.pop %v440
    %v442 = vmul.f32 1.0, %v441
    %v443 = vtanh.pop %v436
    %v444 = vmul.f32 %v442, %v290
    %446 = vrot.lane.b32.xlu0 %v443, 64
    %v447 = vpop.permute.xlu0 %446
    %v449 = vmul.f32 %v442, %v447
    %451 = vrot.lane.b32.xlu0 %v449, 32
    %v452 = vpop.permute.xlu0 %451
    %v454 = vadd.f32 %v444, %v452
    %v455 = vtanh.pop %v454
    %457 = vrot.lane.b32.xlu0 %v455, 64
    %v458 = vpop.permute.xlu0 %457
    %v460 = vmul.f32 %v442, %v458
    %s461 = scalar_lea.vmem %s1, 20
    %v462 = vld [vmem:[%s461] sm:$0xf]
    %v463 = vpack.c.bf16 %v370, %v370
    %465 = vrot.lane.b32.xlu0 %v463, 32
    %v466 = vpop.permute.xlu0 %465
    %v468 = vsel %vm59, %v466, 0
    %470 = vmatprep.subr.bf16.mxu0 0
    %471 = vmatpush1.bf16.msra.mxu0 %v138
    %472 = vmatprep.subr.bf16.mxu0 0
    %473 = vmatpush1.bf16.msra.mxu0 %v139
    %474 = vmatprep.subr.bf16.mxu0 0
    %475 = vmatpush1.bf16.msra.mxu0 0
    %476 = vmatprep.subr.bf16.mxu0 0
    %477 = vmatpush1.bf16.msra.mxu0 0
    %478 = vmatprep.subr.bf16.mxu0 0
    %479 = vmatpush1.bf16.msra.mxu0 0
    %480 = vmatprep.subr.bf16.mxu0 0
    %481 = vmatpush1.bf16.msra.mxu0 0
    %482 = vmatprep.subr.bf16.mxu0 0
    %483 = vmatpush1.bf16.msra.mxu0 0
    %484 = vmatprep.subr.bf16.mxu0 0
    %485 = vmatpush1.bf16.msra.mxu0 0
    %486 = vmatprep.subr.bf16.mxu0 0
    %487 = vmatpush1.bf16.msra.mxu0 0
    %488 = vmatprep.subr.bf16.mxu0 0
    %489 = vmatpush1.bf16.msra.mxu0 0
    %490 = vmatprep.subr.bf16.mxu0 0
    %491 = vmatpush1.bf16.msra.mxu0 0
    %492 = vmatprep.subr.bf16.mxu0 0
    %493 = vmatpush1.bf16.msra.mxu0 0
    %494 = vmatprep.subr.bf16.mxu0 0
    %495 = vmatpush1.bf16.msra.mxu0 0
    %496 = vmatprep.subr.bf16.mxu0 0
    %497 = vmatpush1.bf16.msra.mxu0 0
    %498 = vmatprep.subr.bf16.mxu0 0
    %499 = vmatpush1.bf16.msra.mxu0 0
    %500 = vmatprep.subr.bf16.mxu0 0
    %501 = vmatpush1.bf16.msra.mxu0 0
    %502 = vmatprep.mubr.bf16.mxu0 0
    %503 = vmatmul.mubr.bf16.gmra.mrb[0].mxu0 %v468
    %v504 = vpop.f32.mrb[0].mxu0
    %v505 = vadd.f32 0.0, %v504
    %v506 = vpop.f32.mrb[0].mxu0
    %v507 = vpop.f32.mrb[0].mxu0
    %v508 = vpop.f32.mrb[0].mxu0
    %509 = vdwg.mxu0
    %v510 = vadd.f32 %v462, %v505
    %v511 = vxor.u32 %v510, 2147483648
    %v512 = vmul.f32 %v511, 1.442695
    %v513 = vpow.pop %v512
    %v514 = vadd.f32 %v513, 1.0
    %v515 = vrcp.pop %v514
    %v516 = vmul.f32 1.0, %v515
    %v517 = vtanh.pop %v510
    %v518 = vmul.f32 %v516, %v364
    %520 = vrot.lane.b32.xlu0 %v517, 64
    %v521 = vpop.permute.xlu0 %520
    %v523 = vmul.f32 %v516, %v521
    %525 = vrot.lane.b32.xlu0 %v523, 32
    %v526 = vpop.permute.xlu0 %525
    %v528 = vadd.f32 %v518, %v526
    %v529 = vtanh.pop %v528
    %531 = vrot.lane.b32.xlu0 %v529, 64
    %v532 = vpop.permute.xlu0 %531
    %v534 = vmul.f32 %v516, %v532
    %vm535 = vcmp.gt.s32.totalorder %v45, 2
    %v536 = vsel %vm535, 1, 0
    %537 = vset.pattern.permute.xlu0 0
    %538 = vperm.xlu0 %537, %v536
    %v539 = vpop.permute.xlu0 %538
    %vm540 = vcmp.eq.s32.totalorder %v539, 1
    %v541 = vsel %vm540, %v460, -1e+30
    %v542 = vmax.f32 %v378, %v541
    %vm543 = vcmp.gt.s32.totalorder %v45, 5
    %v544 = vsel %vm543, 1, 0
    %545 = vset.pattern.permute.xlu0 0
    %546 = vperm.xlu0 %545, %v544
    %v547 = vpop.permute.xlu0 %546
    %vm548 = vcmp.eq.s32.totalorder %v547, 1
    %v549 = vsel %vm548, %v534, -1e+30
    %v550 = vmax.f32 %v386, %v549
    %s551 = scalar_lea.vmem %s0, 12
    %v552 = vld [vmem:[%s551] sm:$0xf]
    %v553 = vpack.c.bf16 %v460, %v460
    %555 = vrot.lane.b32.xlu0 %v553, 32
    %v556 = vpop.permute.xlu0 %555
    %v558 = vsel %vm59, %v556, 0
    %560 = vmatprep.subr.bf16.mxu0 0
    %561 = vmatpush1.bf16.msra.mxu0 %v55
    %562 = vmatprep.subr.bf16.mxu0 0
    %563 = vmatpush1.bf16.msra.mxu0 %v56
    %564 = vmatprep.subr.bf16.mxu0 0
    %565 = vmatpush1.bf16.msra.mxu0 0
    %566 = vmatprep.subr.bf16.mxu0 0
    %567 = vmatpush1.bf16.msra.mxu0 0
    %568 = vmatprep.subr.bf16.mxu0 0
    %569 = vmatpush1.bf16.msra.mxu0 0
    %570 = vmatprep.subr.bf16.mxu0 0
    %571 = vmatpush1.bf16.msra.mxu0 0
    %572 = vmatprep.subr.bf16.mxu0 0
    %573 = vmatpush1.bf16.msra.mxu0 0
    %574 = vmatprep.subr.bf16.mxu0 0
    %575 = vmatpush1.bf16.msra.mxu0 0
    %576 = vmatprep.subr.bf16.mxu0 0
    %577 = vmatpush1.bf16.msra.mxu0 0
    %578 = vmatprep.subr.bf16.mxu0 0
    %579 = vmatpush1.bf16.msra.mxu0 0
    %580 = vmatprep.subr.bf16.mxu0 0
    %581 = vmatpush1.bf16.msra.mxu0 0
    %582 = vmatprep.subr.bf16.mxu0 0
    %583 = vmatpush1.bf16.msra.mxu0 0
    %584 = vmatprep.subr.bf16.mxu0 0
    %585 = vmatpush1.bf16.msra.mxu0 0
    %586 = vmatprep.subr.bf16.mxu0 0
    %587 = vmatpush1.bf16.msra.mxu0 0
    %588 = vmatprep.subr.bf16.mxu0 0
    %589 = vmatpush1.bf16.msra.mxu0 0
    %590 = vmatprep.subr.bf16.mxu0 0
    %591 = vmatpush1.bf16.msra.mxu0 0
    %592 = vmatprep.mubr.bf16.mxu0 0
    %593 = vmatmul.mubr.bf16.gmra.mrb[0].mxu0 %v558
    %v594 = vpop.f32.mrb[0].mxu0
    %v595 = vadd.f32 0.0, %v594
    %v596 = vpop.f32.mrb[0].mxu0
    %v597 = vpop.f32.mrb[0].mxu0
    %v598 = vpop.f32.mrb[0].mxu0
    %599 = vdwg.mxu0
    %v600 = vadd.f32 %v552, %v595
    %v601 = vxor.u32 %v600, 2147483648
    %v602 = vmul.f32 %v601, 1.442695
    %v603 = vpow.pop %v602
    %v604 = vadd.f32 %v603, 1.0
    %v605 = vrcp.pop %v604
    %v606 = vmul.f32 1.0, %v605
    %v607 = vtanh.pop %v600
    %v608 = vmul.f32 %v606, %v454
    %610 = vrot.lane.b32.xlu0 %v607, 64
    %v611 = vpop.permute.xlu0 %610
    %v613 = vmul.f32 %v606, %v611
    %615 = vrot.lane.b32.xlu0 %v613, 32
    %v616 = vpop.permute.xlu0 %615
    %v618 = vadd.f32 %v608, %v616
    %v619 = vtanh.pop %v618
    %621 = vrot.lane.b32.xlu0 %v619, 64
    %v622 = vpop.permute.xlu0 %621
    %v624 = vmul.f32 %v606, %v622
    %s625 = scalar_lea.vmem %s1, 16
    %v626 = vld [vmem:[%s625] sm:$0xf]
    %v627 = vpack.c.bf16 %v534, %v534
    %629 = vrot.lane.b32.xlu0 %v627, 32
    %v630 = vpop.permute.xlu0 %629
    %v632 = vsel %vm59, %v630, 0
    %634 = vmatprep.subr.bf16.mxu0 0
    %635 = vmatpush1.bf16.msra.mxu0 %v138
    %636 = vmatprep.subr.bf16.mxu0 0
    %637 = vmatpush1.bf16.msra.mxu0 %v139
    %638 = vmatprep.subr.bf16.mxu0 0
    %639 = vmatpush1.bf16.msra.mxu0 0
    %640 = vmatprep.subr.bf16.mxu0 0
    %641 = vmatpush1.bf16.msra.mxu0 0
    %642 = vmatprep.subr.bf16.mxu0 0
    %643 = vmatpush1.bf16.msra.mxu0 0
    %644 = vmatprep.subr.bf16.mxu0 0
    %645 = vmatpush1.bf16.msra.mxu0 0
    %646 = vmatprep.subr.bf16.mxu0 0
    %647 = vmatpush1.bf16.msra.mxu0 0
    %648 = vmatprep.subr.bf16.mxu0 0
    %649 = vmatpush1.bf16.msra.mxu0 0
    %650 = vmatprep.subr.bf16.mxu0 0
    %651 = vmatpush1.bf16.msra.mxu0 0
    %652 = vmatprep.subr.bf16.mxu0 0
    %653 = vmatpush1.bf16.msra.mxu0 0
    %654 = vmatprep.subr.bf16.mxu0 0
    %655 = vmatpush1.bf16.msra.mxu0 0
    %656 = vmatprep.subr.bf16.mxu0 0
    %657 = vmatpush1.bf16.msra.mxu0 0
    %658 = vmatprep.subr.bf16.mxu0 0
    %659 = vmatpush1.bf16.msra.mxu0 0
    %660 = vmatprep.subr.bf16.mxu0 0
    %661 = vmatpush1.bf16.msra.mxu0 0
    %662 = vmatprep.subr.bf16.mxu0 0
    %663 = vmatpush1.bf16.msra.mxu0 0
    %664 = vmatprep.subr.bf16.mxu0 0
    %665 = vmatpush1.bf16.msra.mxu0 0
    %666 = vmatprep.mubr.bf16.mxu0 0
    %667 = vmatmul.mubr.bf16.gmra.mrb[0].mxu0 %v632
    %v668 = vpop.f32.mrb[0].mxu0
    %v669 = vadd.f32 0.0, %v668
    %v670 = vpop.f32.mrb[0].mxu0
    %v671 = vpop.f32.mrb[0].mxu0
    %v672 = vpop.f32.mrb[0].mxu0
    %673 = vdwg.mxu0
    %v674 = vadd.f32 %v626, %v669
    %v675 = vxor.u32 %v674, 2147483648
    %v676 = vmul.f32 %v675, 1.442695
    %v677 = vpow.pop %v676
    %v678 = vadd.f32 %v677, 1.0
    %v679 = vrcp.pop %v678
    %v680 = vmul.f32 1.0, %v679
    %v681 = vtanh.pop %v674
    %v682 = vmul.f32 %v680, %v528
    %684 = vrot.lane.b32.xlu0 %v681, 64
    %v685 = vpop.permute.xlu0 %684
    %v687 = vmul.f32 %v680, %v685
    %689 = vrot.lane.b32.xlu0 %v687, 32
    %v690 = vpop.permute.xlu0 %689
    %v692 = vadd.f32 %v682, %v690
    %v693 = vtanh.pop %v692
    %695 = vrot.lane.b32.xlu0 %v693, 64
    %v696 = vpop.permute.xlu0 %695
    %v698 = vmul.f32 %v680, %v696
    %vm699 = vcmp.gt.s32.totalorder %v45, 3
    %v700 = vsel %vm699, 1, 0
    %701 = vset.pattern.permute.xlu0 0
    %702 = vperm.xlu0 %701, %v700
    %v703 = vpop.permute.xlu0 %702
    %vm704 = vcmp.eq.s32.totalorder %v703, 1
    %v705 = vsel %vm704, %v624, -1e+30
    %v706 = vmax.f32 %v542, %v705
    %vm707 = vcmp.gt.s32.totalorder %v45, 4
    %v708 = vsel %vm707, 1, 0
    %709 = vset.pattern.permute.xlu0 0
    %710 = vperm.xlu0 %709, %v708
    %v711 = vpop.permute.xlu0 %710
    %vm712 = vcmp.eq.s32.totalorder %v711, 1
    %v713 = vsel %vm712, %v698, -1e+30
    %v714 = vmax.f32 %v550, %v713
    %s715 = scalar_lea.vmem %s0, 16
    %v716 = vld [vmem:[%s715] sm:$0xf]
    %v717 = vpack.c.bf16 %v624, %v624
    %719 = vrot.lane.b32.xlu0 %v717, 32
    %v720 = vpop.permute.xlu0 %719
    %v722 = vsel %vm59, %v720, 0
    %724 = vmatprep.subr.bf16.mxu0 0
    %725 = vmatpush1.bf16.msra.mxu0 %v55
    %726 = vmatprep.subr.bf16.mxu0 0
    %727 = vmatpush1.bf16.msra.mxu0 %v56
    %728 = vmatprep.subr.bf16.mxu0 0
    %729 = vmatpush1.bf16.msra.mxu0 0
    %730 = vmatprep.subr.bf16.mxu0 0
    %731 = vmatpush1.bf16.msra.mxu0 0
    %732 = vmatprep.subr.bf16.mxu0 0
    %733 = vmatpush1.bf16.msra.mxu0 0
    %734 = vmatprep.subr.bf16.mxu0 0
    %735 = vmatpush1.bf16.msra.mxu0 0
    %736 = vmatprep.subr.bf16.mxu0 0
    %737 = vmatpush1.bf16.msra.mxu0 0
    %738 = vmatprep.subr.bf16.mxu0 0
    %739 = vmatpush1.bf16.msra.mxu0 0
    %740 = vmatprep.subr.bf16.mxu0 0
    %741 = vmatpush1.bf16.msra.mxu0 0
    %742 = vmatprep.subr.bf16.mxu0 0
    %743 = vmatpush1.bf16.msra.mxu0 0
    %744 = vmatprep.subr.bf16.mxu0 0
    %745 = vmatpush1.bf16.msra.mxu0 0
    %746 = vmatprep.subr.bf16.mxu0 0
    %747 = vmatpush1.bf16.msra.mxu0 0
    %748 = vmatprep.subr.bf16.mxu0 0
    %749 = vmatpush1.bf16.msra.mxu0 0
    %750 = vmatprep.subr.bf16.mxu0 0
    %751 = vmatpush1.bf16.msra.mxu0 0
    %752 = vmatprep.subr.bf16.mxu0 0
    %753 = vmatpush1.bf16.msra.mxu0 0
    %754 = vmatprep.subr.bf16.mxu0 0
    %755 = vmatpush1.bf16.msra.mxu0 0
    %756 = vmatprep.mubr.bf16.mxu0 0
    %757 = vmatmul.mubr.bf16.gmra.mrb[0].mxu0 %v722
    %v758 = vpop.f32.mrb[0].mxu0
    %v759 = vadd.f32 0.0, %v758
    %v760 = vpop.f32.mrb[0].mxu0
    %v761 = vpop.f32.mrb[0].mxu0
    %v762 = vpop.f32.mrb[0].mxu0
    %763 = vdwg.mxu0
    %v764 = vadd.f32 %v716, %v759
    %v765 = vxor.u32 %v764, 2147483648
    %v766 = vmul.f32 %v765, 1.442695
    %v767 = vpow.pop %v766
    %v768 = vadd.f32 %v767, 1.0
    %v769 = vrcp.pop %v768
    %v770 = vmul.f32 1.0, %v769
    %v771 = vtanh.pop %v764
    %v772 = vmul.f32 %v770, %v618
    %774 = vrot.lane.b32.xlu0 %v771, 64
    %v775 = vpop.permute.xlu0 %774
    %v777 = vmul.f32 %v770, %v775
    %779 = vrot.lane.b32.xlu0 %v777, 32
    %v780 = vpop.permute.xlu0 %779
    %v782 = vadd.f32 %v772, %v780
    %v783 = vtanh.pop %v782
    %785 = vrot.lane.b32.xlu0 %v783, 64
    %v786 = vpop.permute.xlu0 %785
    %v788 = vmul.f32 %v770, %v786
    %s789 = scalar_lea.vmem %s1, 12
    %v790 = vld [vmem:[%s789] sm:$0xf]
    %v791 = vpack.c.bf16 %v698, %v698
    %793 = vrot.lane.b32.xlu0 %v791, 32
    %v794 = vpop.permute.xlu0 %793
    %v796 = vsel %vm59, %v794, 0
    %798 = vmatprep.subr.bf16.mxu0 0
    %799 = vmatpush1.bf16.msra.mxu0 %v138
    %800 = vmatprep.subr.bf16.mxu0 0
    %801 = vmatpush1.bf16.msra.mxu0 %v139
    %802 = vmatprep.subr.bf16.mxu0 0
    %803 = vmatpush1.bf16.msra.mxu0 0
    %804 = vmatprep.subr.bf16.mxu0 0
    %805 = vmatpush1.bf16.msra.mxu0 0
    %806 = vmatprep.subr.bf16.mxu0 0
    %807 = vmatpush1.bf16.msra.mxu0 0
    %808 = vmatprep.subr.bf16.mxu0 0
    %809 = vmatpush1.bf16.msra.mxu0 0
    %810 = vmatprep.subr.bf16.mxu0 0
    %811 = vmatpush1.bf16.msra.mxu0 0
    %812 = vmatprep.subr.bf16.mxu0 0
    %813 = vmatpush1.bf16.msra.mxu0 0
    %814 = vmatprep.subr.bf16.mxu0 0
    %815 = vmatpush1.bf16.msra.mxu0 0
    %816 = vmatprep.subr.bf16.mxu0 0
    %817 = vmatpush1.bf16.msra.mxu0 0
    %818 = vmatprep.subr.bf16.mxu0 0
    %819 = vmatpush1.bf16.msra.mxu0 0
    %820 = vmatprep.subr.bf16.mxu0 0
    %821 = vmatpush1.bf16.msra.mxu0 0
    %822 = vmatprep.subr.bf16.mxu0 0
    %823 = vmatpush1.bf16.msra.mxu0 0
    %824 = vmatprep.subr.bf16.mxu0 0
    %825 = vmatpush1.bf16.msra.mxu0 0
    %826 = vmatprep.subr.bf16.mxu0 0
    %827 = vmatpush1.bf16.msra.mxu0 0
    %828 = vmatprep.subr.bf16.mxu0 0
    %829 = vmatpush1.bf16.msra.mxu0 0
    %830 = vmatprep.mubr.bf16.mxu0 0
    %831 = vmatmul.mubr.bf16.gmra.mrb[0].mxu0 %v796
    %v832 = vpop.f32.mrb[0].mxu0
    %v833 = vadd.f32 0.0, %v832
    %v834 = vpop.f32.mrb[0].mxu0
    %v835 = vpop.f32.mrb[0].mxu0
    %v836 = vpop.f32.mrb[0].mxu0
    %837 = vdwg.mxu0
    %v838 = vadd.f32 %v790, %v833
    %v839 = vxor.u32 %v838, 2147483648
    %v840 = vmul.f32 %v839, 1.442695
    %v841 = vpow.pop %v840
    %v842 = vadd.f32 %v841, 1.0
    %v843 = vrcp.pop %v842
    %v844 = vmul.f32 1.0, %v843
    %v845 = vtanh.pop %v838
    %v846 = vmul.f32 %v844, %v692
    %848 = vrot.lane.b32.xlu0 %v845, 64
    %v849 = vpop.permute.xlu0 %848
    %v851 = vmul.f32 %v844, %v849
    %853 = vrot.lane.b32.xlu0 %v851, 32
    %v854 = vpop.permute.xlu0 %853
    %v856 = vadd.f32 %v846, %v854
    %v857 = vtanh.pop %v856
    %859 = vrot.lane.b32.xlu0 %v857, 64
    %v860 = vpop.permute.xlu0 %859
    %v862 = vmul.f32 %v844, %v860
    %v863 = vsel %vm712, %v788, -1e+30
    %v864 = vmax.f32 %v706, %v863
    %v865 = vsel %vm704, %v862, -1e+30
    %v866 = vmax.f32 %v714, %v865
    %s867 = scalar_lea.vmem %s0, 20
    %v868 = vld [vmem:[%s867] sm:$0xf]
    %v869 = vpack.c.bf16 %v788, %v788
    %871 = vrot.lane.b32.xlu0 %v869, 32
    %v872 = vpop.permute.xlu0 %871
    %v874 = vsel %vm59, %v872, 0
    %876 = vmatprep.subr.bf16.mxu0 0
    %877 = vmatpush1.bf16.msra.mxu0 %v55
    %878 = vmatprep.subr.bf16.mxu0 0
    %879 = vmatpush1.bf16.msra.mxu0 %v56
    %880 = vmatprep.subr.bf16.mxu0 0
    %881 = vmatpush1.bf16.msra.mxu0 0
    %882 = vmatprep.subr.bf16.mxu0 0
    %883 = vmatpush1.bf16.msra.mxu0 0
    %884 = vmatprep.subr.bf16.mxu0 0
    %885 = vmatpush1.bf16.msra.mxu0 0
    %886 = vmatprep.subr.bf16.mxu0 0
    %887 = vmatpush1.bf16.msra.mxu0 0
    %888 = vmatprep.subr.bf16.mxu0 0
    %889 = vmatpush1.bf16.msra.mxu0 0
    %890 = vmatprep.subr.bf16.mxu0 0
    %891 = vmatpush1.bf16.msra.mxu0 0
    %892 = vmatprep.subr.bf16.mxu0 0
    %893 = vmatpush1.bf16.msra.mxu0 0
    %894 = vmatprep.subr.bf16.mxu0 0
    %895 = vmatpush1.bf16.msra.mxu0 0
    %896 = vmatprep.subr.bf16.mxu0 0
    %897 = vmatpush1.bf16.msra.mxu0 0
    %898 = vmatprep.subr.bf16.mxu0 0
    %899 = vmatpush1.bf16.msra.mxu0 0
    %900 = vmatprep.subr.bf16.mxu0 0
    %901 = vmatpush1.bf16.msra.mxu0 0
    %902 = vmatprep.subr.bf16.mxu0 0
    %903 = vmatpush1.bf16.msra.mxu0 0
    %904 = vmatprep.subr.bf16.mxu0 0
    %905 = vmatpush1.bf16.msra.mxu0 0
    %906 = vmatprep.subr.bf16.mxu0 0
    %907 = vmatpush1.bf16.msra.mxu0 0
    %908 = vmatprep.mubr.bf16.mxu0 0
    %909 = vmatmul.mubr.bf16.gmra.mrb[0].mxu0 %v874
    %v910 = vpop.f32.mrb[0].mxu0
    %v911 = vadd.f32 0.0, %v910
    %v912 = vpop.f32.mrb[0].mxu0
    %v913 = vpop.f32.mrb[0].mxu0
    %v914 = vpop.f32.mrb[0].mxu0
    %915 = vdwg.mxu0
    %v916 = vadd.f32 %v868, %v911
    %v917 = vxor.u32 %v916, 2147483648
    %v918 = vmul.f32 %v917, 1.442695
    %v919 = vpow.pop %v918
    %v920 = vadd.f32 %v919, 1.0
    %v921 = vrcp.pop %v920
    %v922 = vmul.f32 1.0, %v921
    %v923 = vtanh.pop %v916
    %v924 = vmul.f32 %v922, %v782
    %926 = vrot.lane.b32.xlu0 %v923, 64
    %v927 = vpop.permute.xlu0 %926
    %v929 = vmul.f32 %v922, %v927
    %931 = vrot.lane.b32.xlu0 %v929, 32
    %v932 = vpop.permute.xlu0 %931
    %v934 = vadd.f32 %v924, %v932
    %v935 = vtanh.pop %v934
    %937 = vrot.lane.b32.xlu0 %v935, 64
    %v938 = vpop.permute.xlu0 %937
    %v940 = vmul.f32 %v922, %v938
    %s941 = scalar_lea.vmem %s1, 8
    %v942 = vld [vmem:[%s941] sm:$0xf]
    %v943 = vpack.c.bf16 %v862, %v862
    %945 = vrot.lane.b32.xlu0 %v943, 32
    %v946 = vpop.permute.xlu0 %945
    %v948 = vsel %vm59, %v946, 0
    %950 = vmatprep.subr.bf16.mxu0 0
    %951 = vmatpush1.bf16.msra.mxu0 %v138
    %952 = vmatprep.subr.bf16.mxu0 0
    %953 = vmatpush1.bf16.msra.mxu0 %v139
    %954 = vmatprep.subr.bf16.mxu0 0
    %955 = vmatpush1.bf16.msra.mxu0 0
    %956 = vmatprep.subr.bf16.mxu0 0
    %957 = vmatpush1.bf16.msra.mxu0 0
    %958 = vmatprep.subr.bf16.mxu0 0
    %959 = vmatpush1.bf16.msra.mxu0 0
    %960 = vmatprep.subr.bf16.mxu0 0
    %961 = vmatpush1.bf16.msra.mxu0 0
    %962 = vmatprep.subr.bf16.mxu0 0
    %963 = vmatpush1.bf16.msra.mxu0 0
    %964 = vmatprep.subr.bf16.mxu0 0
    %965 = vmatpush1.bf16.msra.mxu0 0
    %966 = vmatprep.subr.bf16.mxu0 0
    %967 = vmatpush1.bf16.msra.mxu0 0
    %968 = vmatprep.subr.bf16.mxu0 0
    %969 = vmatpush1.bf16.msra.mxu0 0
    %970 = vmatprep.subr.bf16.mxu0 0
    %971 = vmatpush1.bf16.msra.mxu0 0
    %972 = vmatprep.subr.bf16.mxu0 0
    %973 = vmatpush1.bf16.msra.mxu0 0
    %974 = vmatprep.subr.bf16.mxu0 0
    %975 = vmatpush1.bf16.msra.mxu0 0
    %976 = vmatprep.subr.bf16.mxu0 0
    %977 = vmatpush1.bf16.msra.mxu0 0
    %978 = vmatprep.subr.bf16.mxu0 0
    %979 = vmatpush1.bf16.msra.mxu0 0
    %980 = vmatprep.subr.bf16.mxu0 0
    %981 = vmatpush1.bf16.msra.mxu0 0
    %982 = vmatprep.mubr.bf16.mxu0 0
    %983 = vmatmul.mubr.bf16.gmra.mrb[0].mxu0 %v948
    %v984 = vpop.f32.mrb[0].mxu0
    %v985 = vadd.f32 0.0, %v984
    %v986 = vpop.f32.mrb[0].mxu0
    %v987 = vpop.f32.mrb[0].mxu0
    %v988 = vpop.f32.mrb[0].mxu0
    %989 = vdwg.mxu0
    %v990 = vadd.f32 %v942, %v985
    %v991 = vxor.u32 %v990, 2147483648
    %v992 = vmul.f32 %v991, 1.442695
    %v993 = vpow.pop %v992
    %v994 = vadd.f32 %v993, 1.0
    %v995 = vrcp.pop %v994
    %v996 = vmul.f32 1.0, %v995
    %v997 = vtanh.pop %v990
    %v998 = vmul.f32 %v996, %v856
    %1000 = vrot.lane.b32.xlu0 %v997, 64
    %v1001 = vpop.permute.xlu0 %1000
    %v1003 = vmul.f32 %v996, %v1001
    %1005 = vrot.lane.b32.xlu0 %v1003, 32
    %v1006 = vpop.permute.xlu0 %1005
    %v1008 = vadd.f32 %v998, %v1006
    %v1009 = vtanh.pop %v1008
    %1011 = vrot.lane.b32.xlu0 %v1009, 64
    %v1012 = vpop.permute.xlu0 %1011
    %v1014 = vmul.f32 %v996, %v1012
    %v1015 = vsel %vm548, %v940, -1e+30
    %v1016 = vmax.f32 %v864, %v1015
    %v1017 = vsel %vm540, %v1014, -1e+30
    %v1018 = vmax.f32 %v866, %v1017
    %s1019 = scalar_lea.vmem %s0, 24
    %v1020 = vld [vmem:[%s1019] sm:$0xf]
    %v1021 = vpack.c.bf16 %v940, %v940
    %1023 = vrot.lane.b32.xlu0 %v1021, 32
    %v1024 = vpop.permute.xlu0 %1023
    %v1026 = vsel %vm59, %v1024, 0
    %1028 = vmatprep.subr.bf16.mxu0 0
    %1029 = vmatpush1.bf16.msra.mxu0 %v55
    %1030 = vmatprep.subr.bf16.mxu0 0
    %1031 = vmatpush1.bf16.msra.mxu0 %v56
    %1032 = vmatprep.subr.bf16.mxu0 0
    %1033 = vmatpush1.bf16.msra.mxu0 0
    %1034 = vmatprep.subr.bf16.mxu0 0
    %1035 = vmatpush1.bf16.msra.mxu0 0
    %1036 = vmatprep.subr.bf16.mxu0 0
    %1037 = vmatpush1.bf16.msra.mxu0 0
    %1038 = vmatprep.subr.bf16.mxu0 0
    %1039 = vmatpush1.bf16.msra.mxu0 0
    %1040 = vmatprep.subr.bf16.mxu0 0
    %1041 = vmatpush1.bf16.msra.mxu0 0
    %1042 = vmatprep.subr.bf16.mxu0 0
    %1043 = vmatpush1.bf16.msra.mxu0 0
    %1044 = vmatprep.subr.bf16.mxu0 0
    %1045 = vmatpush1.bf16.msra.mxu0 0
    %1046 = vmatprep.subr.bf16.mxu0 0
    %1047 = vmatpush1.bf16.msra.mxu0 0
    %1048 = vmatprep.subr.bf16.mxu0 0
    %1049 = vmatpush1.bf16.msra.mxu0 0
    %1050 = vmatprep.subr.bf16.mxu0 0
    %1051 = vmatpush1.bf16.msra.mxu0 0
    %1052 = vmatprep.subr.bf16.mxu0 0
    %1053 = vmatpush1.bf16.msra.mxu0 0
    %1054 = vmatprep.subr.bf16.mxu0 0
    %1055 = vmatpush1.bf16.msra.mxu0 0
    %1056 = vmatprep.subr.bf16.mxu0 0
    %1057 = vmatpush1.bf16.msra.mxu0 0
    %1058 = vmatprep.subr.bf16.mxu0 0
    %1059 = vmatpush1.bf16.msra.mxu0 0
    %1060 = vmatprep.mubr.bf16.mxu0 0
    %1061 = vmatmul.mubr.bf16.gmra.mrb[0].mxu0 %v1026
    %v1062 = vpop.f32.mrb[0].mxu0
    %v1063 = vadd.f32 0.0, %v1062
    %v1064 = vpop.f32.mrb[0].mxu0
    %v1065 = vpop.f32.mrb[0].mxu0
    %v1066 = vpop.f32.mrb[0].mxu0
    %1067 = vdwg.mxu0
    %v1068 = vadd.f32 %v1020, %v1063
    %v1069 = vxor.u32 %v1068, 2147483648
    %v1070 = vmul.f32 %v1069, 1.442695
    %v1071 = vpow.pop %v1070
    %v1072 = vadd.f32 %v1071, 1.0
    %v1073 = vrcp.pop %v1072
    %v1074 = vmul.f32 1.0, %v1073
    %v1075 = vtanh.pop %v1068
    %v1076 = vmul.f32 %v1074, %v934
    %1078 = vrot.lane.b32.xlu0 %v1075, 64
    %v1079 = vpop.permute.xlu0 %1078
    %v1081 = vmul.f32 %v1074, %v1079
    %1083 = vrot.lane.b32.xlu0 %v1081, 32
    %v1084 = vpop.permute.xlu0 %1083
    %v1086 = vadd.f32 %v1076, %v1084
    %v1087 = vtanh.pop %v1086
    %1089 = vrot.lane.b32.xlu0 %v1087, 64
    %v1090 = vpop.permute.xlu0 %1089
    %v1092 = vmul.f32 %v1074, %v1090
    %s1093 = scalar_lea.vmem %s1, 4
    %v1094 = vld [vmem:[%s1093] sm:$0xf]
    %v1095 = vpack.c.bf16 %v1014, %v1014
    %1097 = vrot.lane.b32.xlu0 %v1095, 32
    %v1098 = vpop.permute.xlu0 %1097
    %v1100 = vsel %vm59, %v1098, 0
    %1102 = vmatprep.subr.bf16.mxu0 0
    %1103 = vmatpush1.bf16.msra.mxu0 %v138
    %1104 = vmatprep.subr.bf16.mxu0 0
    %1105 = vmatpush1.bf16.msra.mxu0 %v139
    %1106 = vmatprep.subr.bf16.mxu0 0
    %1107 = vmatpush1.bf16.msra.mxu0 0
    %1108 = vmatprep.subr.bf16.mxu0 0
    %1109 = vmatpush1.bf16.msra.mxu0 0
    %1110 = vmatprep.subr.bf16.mxu0 0
    %1111 = vmatpush1.bf16.msra.mxu0 0
    %1112 = vmatprep.subr.bf16.mxu0 0
    %1113 = vmatpush1.bf16.msra.mxu0 0
    %1114 = vmatprep.subr.bf16.mxu0 0
    %1115 = vmatpush1.bf16.msra.mxu0 0
    %1116 = vmatprep.subr.bf16.mxu0 0
    %1117 = vmatpush1.bf16.msra.mxu0 0
    %1118 = vmatprep.subr.bf16.mxu0 0
    %1119 = vmatpush1.bf16.msra.mxu0 0
    %1120 = vmatprep.subr.bf16.mxu0 0
    %1121 = vmatpush1.bf16.msra.mxu0 0
    %1122 = vmatprep.subr.bf16.mxu0 0
    %1123 = vmatpush1.bf16.msra.mxu0 0
    %1124 = vmatprep.subr.bf16.mxu0 0
    %1125 = vmatpush1.bf16.msra.mxu0 0
    %1126 = vmatprep.subr.bf16.mxu0 0
    %1127 = vmatpush1.bf16.msra.mxu0 0
    %1128 = vmatprep.subr.bf16.mxu0 0
    %1129 = vmatpush1.bf16.msra.mxu0 0
    %1130 = vmatprep.subr.bf16.mxu0 0
    %1131 = vmatpush1.bf16.msra.mxu0 0
    %1132 = vmatprep.subr.bf16.mxu0 0
    %1133 = vmatpush1.bf16.msra.mxu0 0
    %1134 = vmatprep.mubr.bf16.mxu0 0
    %1135 = vmatmul.mubr.bf16.gmra.mrb[0].mxu0 %v1100
    %v1136 = vpop.f32.mrb[0].mxu0
    %v1137 = vadd.f32 0.0, %v1136
    %v1138 = vpop.f32.mrb[0].mxu0
    %v1139 = vpop.f32.mrb[0].mxu0
    %v1140 = vpop.f32.mrb[0].mxu0
    %1141 = vdwg.mxu0
    %v1142 = vadd.f32 %v1094, %v1137
    %v1143 = vxor.u32 %v1142, 2147483648
    %v1144 = vmul.f32 %v1143, 1.442695
    %v1145 = vpow.pop %v1144
    %v1146 = vadd.f32 %v1145, 1.0
    %v1147 = vrcp.pop %v1146
    %v1148 = vmul.f32 1.0, %v1147
    %v1149 = vtanh.pop %v1142
    %v1150 = vmul.f32 %v1148, %v1008
    %1152 = vrot.lane.b32.xlu0 %v1149, 64
    %v1153 = vpop.permute.xlu0 %1152
    %v1155 = vmul.f32 %v1148, %v1153
    %1157 = vrot.lane.b32.xlu0 %v1155, 32
    %v1158 = vpop.permute.xlu0 %1157
    %v1160 = vadd.f32 %v1150, %v1158
    %v1161 = vtanh.pop %v1160
    %1163 = vrot.lane.b32.xlu0 %v1161, 64
    %v1164 = vpop.permute.xlu0 %1163
    %v1166 = vmul.f32 %v1148, %v1164
    %v1167 = vsel %vm384, %v1092, -1e+30
    %v1168 = vmax.f32 %v1016, %v1167
    %v1169 = vsel %vm376, %v1166, -1e+30
    %v1170 = vmax.f32 %v1018, %v1169
    %s1171 = scalar_lea.vmem %s0, 28
    %v1172 = vld [vmem:[%s1171] sm:$0xf]
    %v1173 = vpack.c.bf16 %v1092, %v1092
    %1175 = vrot.lane.b32.xlu0 %v1173, 32
    %v1176 = vpop.permute.xlu0 %1175
    %v1178 = vsel %vm59, %v1176, 0
    %1180 = vmatprep.subr.bf16.mxu0 0
    %1181 = vmatpush1.bf16.msra.mxu0 %v55
    %1182 = vmatprep.subr.bf16.mxu0 0
    %1183 = vmatpush1.bf16.msra.mxu0 %v56
    %1184 = vmatprep.subr.bf16.mxu0 0
    %1185 = vmatpush1.bf16.msra.mxu0 0
    %1186 = vmatprep.subr.bf16.mxu0 0
    %1187 = vmatpush1.bf16.msra.mxu0 0
    %1188 = vmatprep.subr.bf16.mxu0 0
    %1189 = vmatpush1.bf16.msra.mxu0 0
    %1190 = vmatprep.subr.bf16.mxu0 0
    %1191 = vmatpush1.bf16.msra.mxu0 0
    %1192 = vmatprep.subr.bf16.mxu0 0
    %1193 = vmatpush1.bf16.msra.mxu0 0
    %1194 = vmatprep.subr.bf16.mxu0 0
    %1195 = vmatpush1.bf16.msra.mxu0 0
    %1196 = vmatprep.subr.bf16.mxu0 0
    %1197 = vmatpush1.bf16.msra.mxu0 0
    %1198 = vmatprep.subr.bf16.mxu0 0
    %1199 = vmatpush1.bf16.msra.mxu0 0
    %1200 = vmatprep.subr.bf16.mxu0 0
    %1201 = vmatpush1.bf16.msra.mxu0 0
    %1202 = vmatprep.subr.bf16.mxu0 0
    %1203 = vmatpush1.bf16.msra.mxu0 0
    %1204 = vmatprep.subr.bf16.mxu0 0
    %1205 = vmatpush1.bf16.msra.mxu0 0
    %1206 = vmatprep.subr.bf16.mxu0 0
    %1207 = vmatpush1.bf16.msra.mxu0 0
    %1208 = vmatprep.subr.bf16.mxu0 0
    %1209 = vmatpush1.bf16.msra.mxu0 0
    %1210 = vmatprep.subr.bf16.mxu0 0
    %1211 = vmatpush1.bf16.msra.mxu0 0
    %1212 = vmatprep.mubr.bf16.mxu0 0
    %1213 = vmatmul.mubr.bf16.gmra.mrb[0].mxu0 %v1178
    %v1214 = vpop.f32.mrb[0].mxu0
    %v1215 = vadd.f32 0.0, %v1214
    %v1216 = vpop.f32.mrb[0].mxu0
    %v1217 = vpop.f32.mrb[0].mxu0
    %v1218 = vpop.f32.mrb[0].mxu0
    %1219 = vdwg.mxu0
    %v1220 = vadd.f32 %v1172, %v1215
    %v1221 = vxor.u32 %v1220, 2147483648
    %v1222 = vmul.f32 %v1221, 1.442695
    %v1223 = vpow.pop %v1222
    %v1224 = vadd.f32 %v1223, 1.0
    %v1225 = vrcp.pop %v1224
    %v1226 = vmul.f32 1.0, %v1225
    %v1227 = vtanh.pop %v1220
    %v1228 = vmul.f32 %v1226, %v1086
    %1230 = vrot.lane.b32.xlu0 %v1227, 64
    %v1231 = vpop.permute.xlu0 %1230
    %v1233 = vmul.f32 %v1226, %v1231
    %1235 = vrot.lane.b32.xlu0 %v1233, 32
    %v1236 = vpop.permute.xlu0 %1235
    %v1238 = vadd.f32 %v1228, %v1236
    %v1239 = vtanh.pop %v1238
    %1241 = vrot.lane.b32.xlu0 %v1239, 64
    %v1242 = vpop.permute.xlu0 %1241
    %v1244 = vmul.f32 %v1226, %v1242
    %v1245 = vld [vmem:[%s1] sm:$0xf]
    %v1246 = vpack.c.bf16 %v1166, %v1166
    %1248 = vrot.lane.b32.xlu0 %v1246, 32
    %v1249 = vpop.permute.xlu0 %1248
    %v1251 = vsel %vm59, %v1249, 0
    %1253 = vmatprep.subr.bf16.mxu0 0
    %1254 = vmatpush1.bf16.msra.mxu0 %v138
    %1255 = vmatprep.subr.bf16.mxu0 0
    %1256 = vmatpush1.bf16.msra.mxu0 %v139
    %1257 = vmatprep.subr.bf16.mxu0 0
    %1258 = vmatpush1.bf16.msra.mxu0 0
    %1259 = vmatprep.subr.bf16.mxu0 0
    %1260 = vmatpush1.bf16.msra.mxu0 0
    %1261 = vmatprep.subr.bf16.mxu0 0
    %1262 = vmatpush1.bf16.msra.mxu0 0
    %1263 = vmatprep.subr.bf16.mxu0 0
    %1264 = vmatpush1.bf16.msra.mxu0 0
    %1265 = vmatprep.subr.bf16.mxu0 0
    %1266 = vmatpush1.bf16.msra.mxu0 0
    %1267 = vmatprep.subr.bf16.mxu0 0
    %1268 = vmatpush1.bf16.msra.mxu0 0
    %1269 = vmatprep.subr.bf16.mxu0 0
    %1270 = vmatpush1.bf16.msra.mxu0 0
    %1271 = vmatprep.subr.bf16.mxu0 0
    %1272 = vmatpush1.bf16.msra.mxu0 0
    %1273 = vmatprep.subr.bf16.mxu0 0
    %1274 = vmatpush1.bf16.msra.mxu0 0
    %1275 = vmatprep.subr.bf16.mxu0 0
    %1276 = vmatpush1.bf16.msra.mxu0 0
    %1277 = vmatprep.subr.bf16.mxu0 0
    %1278 = vmatpush1.bf16.msra.mxu0 0
    %1279 = vmatprep.subr.bf16.mxu0 0
    %1280 = vmatpush1.bf16.msra.mxu0 0
    %1281 = vmatprep.subr.bf16.mxu0 0
    %1282 = vmatpush1.bf16.msra.mxu0 0
    %1283 = vmatprep.subr.bf16.mxu0 0
    %1284 = vmatpush1.bf16.msra.mxu0 0
    %1285 = vmatprep.mubr.bf16.mxu0 0
    %1286 = vmatmul.mubr.bf16.gmra.mrb[0].mxu0 %v1251
    %v1287 = vpop.f32.mrb[0].mxu0
    %v1288 = vadd.f32 0.0, %v1287
    %v1289 = vpop.f32.mrb[0].mxu0
    %v1290 = vpop.f32.mrb[0].mxu0
    %v1291 = vpop.f32.mrb[0].mxu0
    %1292 = vdwg.mxu0
    %v1293 = vadd.f32 %v1245, %v1288
    %v1294 = vxor.u32 %v1293, 2147483648
    %v1295 = vmul.f32 %v1294, 1.442695
    %v1296 = vpow.pop %v1295
    %v1297 = vadd.f32 %v1296, 1.0
    %v1298 = vrcp.pop %v1297
    %v1299 = vmul.f32 1.0, %v1298
    %v1300 = vtanh.pop %v1293
    %v1301 = vmul.f32 %v1299, %v1160
    %1303 = vrot.lane.b32.xlu0 %v1300, 64
    %v1304 = vpop.permute.xlu0 %1303
    %v1306 = vmul.f32 %v1299, %v1304
    %1308 = vrot.lane.b32.xlu0 %v1306, 32
    %v1309 = vpop.permute.xlu0 %1308
    %v1311 = vadd.f32 %v1301, %v1309
    %v1312 = vtanh.pop %v1311
    %1314 = vrot.lane.b32.xlu0 %v1312, 64
    %v1315 = vpop.permute.xlu0 %1314
    %v1317 = vmul.f32 %v1299, %v1315
    %v1318 = vsel %vm220, %v1244, -1e+30
    %v1319 = vmax.f32 %v1168, %v1318
    %v1320 = vsel %vm212, %v1317, -1e+30
    %v1321 = vmax.f32 %v1170, %v1320
    %1323 = vrot.lane.b32.xlu0 %v1319, 32
    %v1324 = vpop.permute.xlu0 %1323
    %1327 = vrot.lane.b32.xlu0 %v1321, 64
    %v1328 = vpop.permute.xlu0 %1327
    %v1330 = vsel %vm59, %v1324, %v1328
    %v1331 = vld [vmem:[%s5] sm:$0x3]
    %1333 = vset.pattern.permute.xlu0 0
    %1334 = vperm.xlu0 %1333, %v1331
    %v1335 = vpop.permute.xlu0 %1334
    %v1337 = vmul.f32 %v1330, %v1335
    %v1338 = vrot.slane %v1335, 6
    %v1340 = vmul.f32 %v1330, %v1338
    %v1342 = vrot.slane %v1340, 2
    %v1344 = vsub.f32 %v1337, %v1342
    %v1345 = vand.u32 2147483647, %v1344
    %v1346 = vmul.f32 %v1337, %v1342
    %1347 = vrot.lane.b32.xlu0 %v1342, 64
    %v1348 = vpop.permute.xlu0 %1347
    %1351 = vrot.lane.b32.xlu0 %v1346, 64
    %v1352 = vpop.permute.xlu0 %1351
    %vm1354 = vcmask 523264
    %v1355 = vsel %vm1354, %v1337, %v1348
    %v1356 = vsel %vm1354, %v1345, %v1352
    %v1357 = vpack.c.bf16 %v1355, %v1355
    %v1358 = vpack.c.bf16 %v1356, %v1356
    %v1359 = vld [vmem:[%s6] sm:$0xf]
    %v1360 = vld [vmem:[%s6 + $0x4] sm:$0xf]
    %v1361 = vld [vmem:[%s6 + $0x8] sm:$0xf]
    %v1362 = vld [vmem:[%s6 + $0xc] sm:$0xf]
    %v1363 = vld [vmem:[%s6 + $0x10] sm:$0xf]
    %v1364 = vld [vmem:[%s6 + $0x14] sm:$0xf]
    %v1365 = vld [vmem:[%s6 + $0x18] sm:$0xf]
    %v1366 = vld [vmem:[%s6 + $0x1c] sm:$0xf]
    %v1367 = vld [vmem:[%s6 + $0x20] sm:$0xf]
    %v1368 = vld [vmem:[%s6 + $0x24] sm:$0xf]
    %v1369 = vld [vmem:[%s6 + $0x28] sm:$0xf]
    %v1370 = vld [vmem:[%s6 + $0x2c] sm:$0xf]
    %v1371 = vld [vmem:[%s6 + $0x30] sm:$0xf]
    %v1372 = vld [vmem:[%s6 + $0x34] sm:$0xf]
    %v1373 = vld [vmem:[%s6 + $0x38] sm:$0xf]
    %v1374 = vld [vmem:[%s6 + $0x3c] sm:$0xf]
    %v1375 = vld [vmem:[%s6 + $0x40] sm:$0xf]
    %v1376 = vld [vmem:[%s6 + $0x44] sm:$0xf]
    %v1377 = vld [vmem:[%s6 + $0x48] sm:$0xf]
    %v1378 = vld [vmem:[%s6 + $0x4c] sm:$0xf]
    %v1379 = vld [vmem:[%s6 + $0x50] sm:$0xf]
    %v1380 = vld [vmem:[%s6 + $0x54] sm:$0xf]
    %v1381 = vld [vmem:[%s6 + $0x58] sm:$0xf]
    %v1382 = vld [vmem:[%s6 + $0x5c] sm:$0xf]
    %v1383 = vld [vmem:[%s6 + $0x60] sm:$0xf]
    %v1384 = vld [vmem:[%s6 + $0x64] sm:$0xf]
    %v1385 = vld [vmem:[%s6 + $0x68] sm:$0xf]
    %v1386 = vld [vmem:[%s6 + $0x6c] sm:$0xf]
    %v1387 = vld [vmem:[%s6 + $0x70] sm:$0xf]
    %v1388 = vld [vmem:[%s6 + $0x74] sm:$0xf]
    %v1389 = vld [vmem:[%s6 + $0x78] sm:$0xf]
    %v1390 = vld [vmem:[%s6 + $0x7c] sm:$0xf]
    %v1391 = vld [vmem:[%s7] sm:$0x1]
    %v1393 = vlaneseq
    %v1394 = vshrl.u32 %v1393, 7
    %v1395 = vsub.s32 0, %v1394
    %v1396 = vrot.slane %v1391, %v1395
    %v1430 = vunpack.c.l.b16 %v1359
    %v1431 = vunpack.c.l.b16 %v1360
    %v1432 = vunpack.c.l.b16 %v1361
    %v1433 = vunpack.c.l.b16 %v1362
    %v1434 = vunpack.c.l.b16 %v1363
    %v1435 = vunpack.c.l.b16 %v1364
    %v1436 = vunpack.c.l.b16 %v1365
    %v1437 = vunpack.c.l.b16 %v1366
    %v1438 = vunpack.c.l.b16 %v1367
    %v1439 = vunpack.c.l.b16 %v1368
    %v1440 = vunpack.c.l.b16 %v1369
    %v1441 = vunpack.c.l.b16 %v1370
    %v1442 = vunpack.c.l.b16 %v1371
    %v1443 = vunpack.c.l.b16 %v1372
    %v1444 = vunpack.c.l.b16 %v1373
    %v1445 = vunpack.c.l.b16 %v1374
    %v1446 = vunpack.c.l.b16 %v1375
    %v1447 = vunpack.c.l.b16 %v1376
    %v1448 = vunpack.c.l.b16 %v1377
    %v1449 = vunpack.c.l.b16 %v1378
    %v1450 = vunpack.c.l.b16 %v1379
    %v1451 = vunpack.c.l.b16 %v1380
    %v1452 = vunpack.c.l.b16 %v1381
    %v1453 = vunpack.c.l.b16 %v1382
    %v1454 = vunpack.c.l.b16 %v1383
    %v1455 = vunpack.c.l.b16 %v1384
    %v1456 = vunpack.c.l.b16 %v1385
    %v1457 = vunpack.c.l.b16 %v1386
    %v1458 = vunpack.c.l.b16 %v1387
    %v1459 = vunpack.c.l.b16 %v1388
    %v1460 = vunpack.c.l.b16 %v1389
    %v1461 = vunpack.c.l.b16 %v1390
    %v1462 = vpack.c.b16 %v1431, %v1430
    %v1463 = vpack.c.b16 %v1433, %v1432
    %v1464 = vpack.c.b16 %v1435, %v1434
    %v1465 = vpack.c.b16 %v1437, %v1436
    %v1466 = vpack.c.b16 %v1439, %v1438
    %v1467 = vpack.c.b16 %v1441, %v1440
    %v1468 = vpack.c.b16 %v1443, %v1442
    %v1469 = vpack.c.b16 %v1445, %v1444
    %v1470 = vpack.c.b16 %v1447, %v1446
    %v1471 = vpack.c.b16 %v1449, %v1448
    %v1472 = vpack.c.b16 %v1451, %v1450
    %v1473 = vpack.c.b16 %v1453, %v1452
    %v1474 = vpack.c.b16 %v1455, %v1454
    %v1475 = vpack.c.b16 %v1457, %v1456
    %v1476 = vpack.c.b16 %v1459, %v1458
    %v1477 = vpack.c.b16 %v1461, %v1460
    %1494 = vmatprep.subr.bf16.mxu0 0
    %1495 = vmatpush1.bf16.msra.mxu0 %v1462
    %1496 = vmatprep.subr.bf16.mxu0 0
    %1497 = vmatpush1.bf16.msra.mxu0 %v1463
    %1498 = vmatprep.subr.bf16.mxu0 0
    %1499 = vmatpush1.bf16.msra.mxu0 %v1464
    %1500 = vmatprep.subr.bf16.mxu0 0
    %1501 = vmatpush1.bf16.msra.mxu0 %v1465
    %1502 = vmatprep.subr.bf16.mxu0 0
    %1503 = vmatpush1.bf16.msra.mxu0 %v1466
    %1504 = vmatprep.subr.bf16.mxu0 0
    %1505 = vmatpush1.bf16.msra.mxu0 %v1467
    %1506 = vmatprep.subr.bf16.mxu0 0
    %1507 = vmatpush1.bf16.msra.mxu0 %v1468
    %1508 = vmatprep.subr.bf16.mxu0 0
    %1509 = vmatpush1.bf16.msra.mxu0 %v1469
    %1510 = vmatprep.subr.bf16.mxu0 0
    %1511 = vmatpush1.bf16.msra.mxu0 %v1470
    %1512 = vmatprep.subr.bf16.mxu0 0
    %1513 = vmatpush1.bf16.msra.mxu0 %v1471
    %1514 = vmatprep.subr.bf16.mxu0 0
    %1515 = vmatpush1.bf16.msra.mxu0 %v1472
    %1516 = vmatprep.subr.bf16.mxu0 0
    %1517 = vmatpush1.bf16.msra.mxu0 %v1473
    %1518 = vmatprep.subr.bf16.mxu0 0
    %1519 = vmatpush1.bf16.msra.mxu0 %v1474
    %1520 = vmatprep.subr.bf16.mxu0 0
    %1521 = vmatpush1.bf16.msra.mxu0 %v1475
    %1522 = vmatprep.subr.bf16.mxu0 0
    %1523 = vmatpush1.bf16.msra.mxu0 %v1476
    %1524 = vmatprep.subr.bf16.mxu0 0
    %1525 = vmatpush1.bf16.msra.mxu0 %v1477
    %1526 = vmatprep.mubr.bf16.mxu0 %v1358
    %1527 = vmatmul.mubr.bf16.gmra.mrb[0].mxu0 %v1357
    %v1528 = vpop.f32.mrb[0].mxu0
    %v1529 = vadd.f32 %v1396, %v1528
    %v1530 = vpop.f32.mrb[0].mxu0
    %v1531 = vpop.f32.mrb[0].mxu0
    %v1532 = vpop.f32.mrb[0].mxu0
    %1533 = vdwg.mxu0
    %v1534 = vmax.f32 %v1529, 0.0
    %v1535 = vpack.c.bf16 %v1534, %v1534
    %v1536 = vld [vmem:[%s8] sm:$0xf]
    %v1537 = vld [vmem:[%s8 + $0x4] sm:$0xf]
    %v1538 = vld [vmem:[%s8 + $0x8] sm:$0xf]
    %v1539 = vld [vmem:[%s8 + $0xc] sm:$0xf]
    %v1540 = vld [vmem:[%s9] sm:$0x1]
    %v1542 = vlaneseq
    %v1543 = vshrl.u32 %v1542, 7
    %v1544 = vsub.s32 0, %v1543
    %v1545 = vrot.slane %v1540, %v1544
    %v1551 = vunpack.c.l.b16 %v1536
    %v1552 = vunpack.c.l.b16 %v1537
    %v1553 = vunpack.c.l.b16 %v1538
    %v1554 = vunpack.c.l.b16 %v1539
    %v1555 = vpack.c.b16 %v1552, %v1551
    %v1556 = vpack.c.b16 %v1554, %v1553
    %v1560 = vsel %vm59, %v1535, 0
    %1562 = vmatprep.subr.bf16.mxu0 0
    %1563 = vmatpush1.bf16.msra.mxu0 %v1555
    %1564 = vmatprep.subr.bf16.mxu0 0
    %1565 = vmatpush1.bf16.msra.mxu0 %v1556
    %1566 = vmatprep.subr.bf16.mxu0 0
    %1567 = vmatpush1.bf16.msra.mxu0 0
    %1568 = vmatprep.subr.bf16.mxu0 0
    %1569 = vmatpush1.bf16.msra.mxu0 0
    %1570 = vmatprep.subr.bf16.mxu0 0
    %1571 = vmatpush1.bf16.msra.mxu0 0
    %1572 = vmatprep.subr.bf16.mxu0 0
    %1573 = vmatpush1.bf16.msra.mxu0 0
    %1574 = vmatprep.subr.bf16.mxu0 0
    %1575 = vmatpush1.bf16.msra.mxu0 0
    %1576 = vmatprep.subr.bf16.mxu0 0
    %1577 = vmatpush1.bf16.msra.mxu0 0
    %1578 = vmatprep.subr.bf16.mxu0 0
    %1579 = vmatpush1.bf16.msra.mxu0 0
    %1580 = vmatprep.subr.bf16.mxu0 0
    %1581 = vmatpush1.bf16.msra.mxu0 0
    %1582 = vmatprep.subr.bf16.mxu0 0
    %1583 = vmatpush1.bf16.msra.mxu0 0
    %1584 = vmatprep.subr.bf16.mxu0 0
    %1585 = vmatpush1.bf16.msra.mxu0 0
    %1586 = vmatprep.subr.bf16.mxu0 0
    %1587 = vmatpush1.bf16.msra.mxu0 0
    %1588 = vmatprep.subr.bf16.mxu0 0
    %1589 = vmatpush1.bf16.msra.mxu0 0
    %1590 = vmatprep.subr.bf16.mxu0 0
    %1591 = vmatpush1.bf16.msra.mxu0 0
    %1592 = vmatprep.subr.bf16.mxu0 0
    %1593 = vmatpush1.bf16.msra.mxu0 0
    %1594 = vmatprep.mubr.bf16.mxu0 0
    %1595 = vmatmul.mubr.bf16.gmra.mrb[0].mxu0 %v1560
    %v1596 = vpop.f32.mrb[0].mxu0
    %v1597 = vadd.f32 %v1545, %v1596
    %v1598 = vpop.f32.mrb[0].mxu0
    %v1599 = vpop.f32.mrb[0].mxu0
    %v1600 = vpop.f32.mrb[0].mxu0
    %1601 = vdwg.mxu0
    %vm1602 = vcmask 17408
    %1603 = vst.msk [vmem:[#allocation2] sm:$0x3] %vm1602, %v1597
    // Predicated region
    $region42: #{esim_forward.5} parent=1 // pred_check
      _
    $region43: #{esim_forward.5} parent=1 // pred_check_branch
      %1605 = sbr.rel (0) target = $region45
    $region44: #{esim_forward.5} parent=1 // pred_region
      %s1607 = ssub.s32 32, 32
      %1608 = vsyncadd [#allocation3], %s1607
      %s1610 = sshll.u32 [#allocation2], 4
      %s1611 = int_to_ptr.vmem [resolvable:$true] %s1610
      %1613 = dma.vmem_to_hbm [thread:$0]  %s1611, 32, %s10, [#allocation3]
    $region45: #{esim_forward.5} parent=1 // pred_fallthru
      _
    // Predicated region
    $region46: #{esim_forward.5} parent=1 // pred_check
      _
    $region47: #{esim_forward.5} parent=1 // pred_check_branch
      %1615 = sbr.rel (0) target = $region49
    $region48: #{esim_forward.5} parent=1 // pred_region
      %1616 = dma.done [#allocation3], 32
    $region49: #{esim_forward.5} parent=1 // pred_fallthru
      _
    %1617 = vsyncpa [#allocation3], 1

</llo_original>
